<compile_context>
chip_gen: v7x
topology: tpu7x:2x2x1
jax: 0.10.0
libtpu: 0.0.40
codegen_flags: <defaults>
</compile_context>

<pallas_src>
import functools

import jax
import jax.numpy as jnp
from jax import lax
from jax.experimental import pallas as pl
from jax.experimental.pallas import tpu as pltpu

CLASS_TOKEN_INDEX = 1      # config.class_token_index
NORM_EPS = 1e-8            # GLiClassBaseModel.epsilon (F.normalize eps)
LANE = 128
VMEM_LIMIT = 64 * 1024 * 1024   # explicit scoped-VMEM limit (tune per generation)


# ---------------------------------------------------------------------------
# helpers
# ---------------------------------------------------------------------------
def _row_tile(m, max_tile=256, prefer_split=False):
    """Largest row tile <= max_tile that divides m and is a multiple of 8.

    Falls back to the full dim when m is not 8-divisible (legal full-dim block).
    prefer_split caps the tile at ~m//2 so a 'parallel' grid axis has >=2 steps
    (both v7x TensorCores get work) whenever it is legal to split.
    """
    if m % 8 != 0:
        return m   # TODO(synk): pad-to-8 path for large, non-8-divisible M
    cap = min(m, max_tile)
    if prefer_split and m >= 16:
        cap = min(cap, (m // 2) // 8 * 8)
    cap = max(cap, 8)
    t = cap - (cap % 8)
    while t >= 8 and m % t != 0:
        t -= 8
    return t if t >= 8 else m


def _const_spec(shape):
    """Constant-index (weight/bias) block: single-buffered, never re-fetched."""
    nd = len(shape)
    return pl.BlockSpec(shape, lambda *_: (0,) * nd, pipeline_mode=pl.Buffered(1))


# ---------------------------------------------------------------------------
# Pallas kernels
# ---------------------------------------------------------------------------
def _label_enc_pool_kernel(x_ref, w_ref, b_ref, m_ref, o_ref, *, inv_len):
    """hid = tanh(x @ W + b) per token, mean over L, zero inactive-label rows."""
    tn, L, HL = x_ref.shape
    x = x_ref[...].reshape(tn * L, HL)                                   # bf16
    h = jnp.dot(x, w_ref[...], preferred_element_type=jnp.float32)
    h = jnp.tanh(h + b_ref[...])
    # NOTE: at production tn*L consider accumulating per-L chunks into a
    # (tn, HL) accumulator instead of materializing the full f32 h in VMEM.
    pooled = jnp.sum(h.reshape(tn, L, HL), axis=1) * inv_len
    pooled = pooled * m_ref[...]            # matches torch: inactive classes -> 0
    o_ref[...] = pooled.astype(o_ref.dtype)


def label_encode_and_pool(emb_bf16, w_bf16, b_f32, row_mask_f32):
    """[N, L, HL] token embeds -> [N, HL] pooled class embeddings (bf16)."""
    N, L, HL = emb_bf16.shape
    tn = _row_tile(N, max(64, -(-512 // L)), prefer_split=True)   # keep M*L >= 512
    return pl.pallas_call(
        functools.partial(_label_enc_pool_kernel, inv_len=1.0 / L),
        grid=(N // tn,),
        in_specs=[
            pl.BlockSpec((tn, L, HL), lambda i: (i, 0, 0)),
            _const_spec((HL, HL)),
            _const_spec((1, HL)),
            pl.BlockSpec((tn, 1), lambda i: (i, 0)),
        ],
        out_specs=pl.BlockSpec((tn, HL), lambda i: (i, 0)),
        out_shape=jax.ShapeDtypeStruct((N, HL), jnp.bfloat16),
        compiler_params=pltpu.CompilerParams(
            dimension_semantics=("parallel",), vmem_limit_bytes=VMEM_LIMIT),
    )(emb_bf16, w_bf16, b_f32.reshape(1, HL), row_mask_f32)


def _text_enc_pool_cls_kernel(cls_pos_ref, x_ref, w_ref, b_ref,
                              pool_ref, cls_ref, acc_ref, hbuf_ref, *, inv_len):
    """hid = tanh(x @ W + b); accumulate mean pool; emit only class-token rows."""
    _, ts, H = x_ref.shape
    n_cls = cls_ref.shape[1]
    b = pl.program_id(0)
    s = pl.program_id(1)

    x = x_ref[...].reshape(ts, H)                                        # bf16
    h = jnp.tanh(jnp.dot(x, w_ref[...], preferred_element_type=jnp.float32)
                 + b_ref[...])                                           # (ts, H) f32
    hbuf_ref[...] = h                        # VMEM copy for dynamic row reads

    @pl.when(s == 0)
    def _():
        acc_ref[...] = jnp.zeros_like(acc_ref)
        cls_ref[...] = jnp.zeros_like(cls_ref)

    acc_ref[...] += jnp.sum(h, axis=0, keepdims=True)

    # Only the class-token rows are consumed downstream: extract them here so
    # the full (B,S,H) hidden state never leaves VMEM.
    base = s * ts
    for c in range(n_cls):
        p = cls_pos_ref[b, c]                # SMEM scalar (prefetched positions)
        local = p - base
        in_tile = jnp.logical_and(local >= 0, local < ts)
        row = hbuf_ref[pl.ds(jnp.clip(local, 0, ts - 1), 1), :]          # (1, H)

        @pl.when(in_tile)
        def _(row=row, c=c):
            cls_ref[:, c:c + 1, :] = row.reshape(1, 1, H).astype(cls_ref.dtype)

    @pl.when(s == pl.num_programs(1) - 1)
    def _():
        pool_ref[...] = (acc_ref[...] * inv_len).reshape(1, 1, H).astype(pool_ref.dtype)


def text_encode_and_pool(cls_pos, embeds_bf16, w_bf16, b_f32, n_cls):
    """[B,S,H] embeds -> (pooled mean [B,H] bf16, class-token rows [B,C,H] f32)."""
    B, S, H = embeds_bf16.shape
    ts = _row_tile(S, 512)
    pooled, cls_hid = pl.pallas_call(
        functools.partial(_text_enc_pool_cls_kernel, inv_len=1.0 / S),
        grid_spec=pltpu.PrefetchScalarGridSpec(
            num_scalar_prefetch=1,
            grid=(B, S // ts),
            in_specs=[
                pl.BlockSpec((1, ts, H), lambda b, s, *_: (b, s, 0)),
                _const_spec((H, H)),
                _const_spec((1, H)),
            ],
            out_specs=(
                pl.BlockSpec((1, 1, H), lambda b, s, *_: (b, 0, 0)),       # resident
                pl.BlockSpec((1, n_cls, H), lambda b, s, *_: (b, 0, 0)),   # resident
            ),
            scratch_shapes=[pltpu.VMEM((1, H), jnp.float32),
                            pltpu.VMEM((ts, H), jnp.float32)],
        ),
        out_shape=(
            jax.ShapeDtypeStruct((B, 1, H), jnp.bfloat16),
            jax.ShapeDtypeStruct((B, n_cls, H), jnp.float32),
        ),
        compiler_params=pltpu.CompilerParams(
            dimension_semantics=("parallel", "arbitrary"),
            vmem_limit_bytes=VMEM_LIMIT),
    )(cls_pos, embeds_bf16, w_bf16, b_f32.reshape(1, H))
    return pooled.reshape(B, H), cls_hid


def _fused_proj_kernel(x_ref, *refs, acts, normalize):
    """Chain of Linear(+act) layers, optional L2-norm epilogue, all in VMEM."""
    o_ref = refs[-1]
    h = x_ref[...]                                                   # bf16 block
    for li, act in enumerate(acts):
        w_ref, b_ref = refs[2 * li], refs[2 * li + 1]
        h = jnp.dot(h.astype(jnp.bfloat16), w_ref[...],
                    preferred_element_type=jnp.float32) + b_ref[...]
        if act == "relu":
            h = jnp.maximum(h, 0.0)
        elif act == "tanh":
            h = jnp.tanh(h)
    if normalize:
        # x / max(||x||, eps)  ==  x * rsqrt(max(||x||^2, eps^2))  (EUP rsqrt)
        n2 = jnp.sum(h * h, axis=-1, keepdims=True)
        h = h * lax.rsqrt(jnp.maximum(n2, NORM_EPS * NORM_EPS))
    o_ref[...] = h.astype(o_ref.dtype)


def fused_projection(x_bf16, layers, normalize=True, max_tile=256):
    """x:[M,K] bf16; layers: list of (w_bf16 [K,N], b_f32 [N], act)."""
    M, K = x_bf16.shape
    tn = _row_tile(M, max_tile, prefer_split=True)
    N_out = layers[-1][0].shape[1]
    acts = tuple(a for (_, _, a) in layers)

    in_specs = [pl.BlockSpec((tn, K), lambda i: (i, 0))]
    args = [x_bf16]
    for (w, b, _) in layers:
        Kw, Nw = w.shape
        in_specs.append(_const_spec((Kw, Nw)))
        in_specs.append(_const_spec((1, Nw)))
        args += [w, b.reshape(1, Nw)]

    return pl.pallas_call(
        functools.partial(_fused_proj_kernel, acts=acts, normalize=normalize),
        grid=(M // tn,),
        in_specs=in_specs,
        out_specs=pl.BlockSpec((tn, N_out), lambda i: (i, 0)),
        out_shape=jax.ShapeDtypeStruct((M, N_out), jnp.float32),
        compiler_params=pltpu.CompilerParams(
            dimension_semantics=("parallel",), vmem_limit_bytes=VMEM_LIMIT),
    )(*args)


def _text_proj_scorer_kernel(t_ref, w1_ref, b1_ref, w2_ref, b2_ref,
                             c_ref, m_ref, s_ref, temb_ref, logit_ref):
    """text_projector -> dropout(eval id) -> l2norm, then lane-dense 'dot' scorer."""
    h = jnp.dot(t_ref[...], w1_ref[...],
                preferred_element_type=jnp.float32) + b1_ref[...]
    h = jnp.maximum(h, 0.0)
    h = jnp.dot(h.astype(jnp.bfloat16), w2_ref[...],
                preferred_element_type=jnp.float32) + b2_ref[...]
    n2 = jnp.sum(h * h, axis=-1, keepdims=True)
    te = h * lax.rsqrt(jnp.maximum(n2, NORM_EPS * NORM_EPS))        # (tb, H) f32
    temb_ref[...] = te.astype(temb_ref.dtype)

    # 'dot' scorer: VPU multiply + lane reduce -> lane-dense (tb, Cp) logits.
    c = c_ref[...].astype(jnp.float32)                               # (tb, Cp, H)
    logits = jnp.sum(c * te[:, None, :], axis=-1)                    # (tb, Cp)
    logits = logits * s_ref[0, 0]                                    # scale first...
    logit_ref[...] = jnp.where(m_ref[...] == 0.0, -1000.0, logits)   # ...then mask


def text_project_and_score(params, pooled_text_bf16, class_embeddings, labels_mask):
    B, H = pooled_text_bf16.shape
    _, C, _ = class_embeddings.shape
    Cp = ((C + LANE - 1) // LANE) * LANE          # lane-dense class/logit dim
    class_pad = jnp.pad(class_embeddings.astype(jnp.bfloat16),
                        ((0, 0), (0, Cp - C), (0, 0)))
    mask_pad = jnp.pad(labels_mask.astype(jnp.float32), ((0, 0), (0, Cp - C)))
    tb = _row_tile(B, 128, prefer_split=True)
    D1 = params["tp_w1"].shape[1]

    text_emb, logits = pl.pallas_call(
        _text_proj_scorer_kernel,
        grid=(B // tb,),
        in_specs=[
            pl.BlockSpec((tb, H), lambda i: (i, 0)),
            _const_spec((H, D1)),
            _const_spec((1, D1)),
            _const_spec((D1, H)),
            _const_spec((1, H)),
            pl.BlockSpec((tb, Cp, H), lambda i: (i, 0, 0)),
            pl.BlockSpec((tb, Cp), lambda i: (i, 0)),
            pl.BlockSpec(memory_space=pltpu.MemorySpace.SMEM),
        ],
        out_specs=(pl.BlockSpec((tb, H), lambda i: (i, 0)),
                   pl.BlockSpec((tb, Cp), lambda i: (i, 0))),
        out_shape=(jax.ShapeDtypeStruct((B, H), jnp.float32),
                   jax.ShapeDtypeStruct((B, Cp), jnp.float32)),
        compiler_params=pltpu.CompilerParams(
            dimension_semantics=("parallel",), vmem_limit_bytes=VMEM_LIMIT),
    )(pooled_text_bf16, params["tp_w1"], params["tp_b1"].reshape(1, D1),
      params["tp_w2"], params["tp_b2"].reshape(1, H), class_pad, mask_pad,
      jnp.asarray(params["logit_scale"], jnp.float32).reshape(1, 1))
    return logits[:, :C], text_emb


# ---------------------------------------------------------------------------
# Model pieces (glue + kernel calls)
# ---------------------------------------------------------------------------
def encode_classes(params, class_input_ids, labels_mask):
    B, C, L = class_input_ids.shape
    HL = params["label_embed"].shape[1]
    H = params["cls_w2"].shape[1]

    emb = params["label_embed"][class_input_ids]                 # (B,C,L,HL) glue gather
    row_mask = (labels_mask == 1).astype(jnp.float32).reshape(B * C, 1)
    pooled = label_encode_and_pool(
        emb.reshape(B * C, L, HL).astype(jnp.bfloat16),
        params["label_enc_w"], params["label_enc_b"], row_mask)  # (B*C, HL) bf16

    # (BiEncoderProjector folded into first Linear) -> ReLU -> Linear -> l2norm
    x = fused_projection(
        pooled,
        layers=[(params["cls_w1"], params["cls_b1"], "relu"),
                (params["cls_w2"], params["cls_b2"], None)],
        normalize=True)
    return x.reshape(B, C, H)


def encode_text_fused(params, input_ids, raw_class_embeddings, labels_mask):
    B, S = input_ids.shape
    _, C, H = raw_class_embeddings.shape

    inputs_embeds = params["text_embed"][input_ids]              # (B,S,H) glue gather

    # --- data-dependent class-token scatter (plain-JAX glue; per-row counts of
    #     class tokens and active labels must match, as in the torch code) ---
    class_mask = (input_ids == CLASS_TOKEN_INDEX)                # (B,S)
    cls_pos = jnp.argsort(jnp.logical_not(class_mask), axis=-1)[:, :C].astype(jnp.int32)
    lbl_active = (labels_mask == 1)
    n_lbl = jnp.sum(lbl_active, axis=-1)
    lbl_pos = jnp.argsort(jnp.logical_not(lbl_active), axis=-1)[:, :C].astype(jnp.int32)
    valid = jnp.arange(C)[None, :] < n_lbl[:, None]
    b_idx = jnp.arange(B)[:, None]

    selected = raw_class_embeddings[b_idx, lbl_pos]              # (B,C,H)
    scat_pos = jnp.where(valid, cls_pos, S)                      # OOB -> dropped
    inputs_embeds = inputs_embeds.at[b_idx, scat_pos].set(selected, mode="drop")

    # fused: synthetic encoder + mean pool + class-token row extraction (Pallas)
    pooled_text, cls_hidden = text_encode_and_pool(
        cls_pos, inputs_embeds.astype(jnp.bfloat16),
        params["text_enc_w"], params["text_enc_b"], C)           # (B,H) bf16, (B,C,H) f32

    # scatter class-token hidden rows back into active-label slots (tiny glue)
    post_pos = jnp.where(valid, lbl_pos, C)                      # OOB -> dropped
    post_class = jnp.zeros((B, C, H), cls_hidden.dtype).at[b_idx, post_pos].set(
        cls_hidden, mode="drop")
    return pooled_text, post_class


def gliclass_biencoder_fused_forward(params, input_ids, attention_mask,
                                     class_input_ids, class_attention_mask,
                                     labels_mask):
    # attention masks accepted for API parity; the synthetic token-wise encoders
    # do not use them (pooler is unmasked "avg", matching the synthetic setup).
    raw_class_embeddings = encode_classes(params, class_input_ids, labels_mask)
    pooled_text, class_embeddings = encode_text_fused(
        params, input_ids, raw_class_embeddings, labels_mask)
    logits, text_embeddings = text_project_and_score(
        params, pooled_text, class_embeddings, labels_mask)
    # labels=None -> loss is None (get_loss skipped)
    return logits, text_embeddings, class_embeddings


# ---------------------------------------------------------------------------
# Deterministic parameter init (with offline f32 fold of BiEncoderProjector)
# ---------------------------------------------------------------------------
def init_params(key, vocab, hl, h):
    ks = jax.random.split(key, 12)
    g = lambda k, s: jax.random.normal(k, s, jnp.float32) * 0.02
    z = lambda n: jnp.zeros((n,), jnp.float32)

    label_enc_w = g(ks[1], (hl, hl))
    biproj_w = g(ks[2], (hl, h))
    biproj_b = z(h)
    cp_w1 = g(ks[3], (h, 2 * h)); cp_b1 = z(2 * h)
    cp_w2 = g(ks[4], (2 * h, h)); cp_b2 = z(h)
    text_enc_w = g(ks[6], (h, h))
    tp_w1 = g(ks[7], (h, 2 * h)); tp_b1 = z(2 * h)
    tp_w2 = g(ks[8], (2 * h, h)); tp_b2 = z(h)

    # Fold BiEncoderProjector (Linear, no activation) into the first
    # classes_projector Linear, in f32, then cast to bf16:
    #   (x @ Wb + bb) @ W1 + b1  ==  x @ (Wb @ W1) + (bb @ W1 + b1)
    cls_w1_fold = (biproj_w @ cp_w1).astype(jnp.bfloat16)
    cls_b1_fold = biproj_b @ cp_w1 + cp_b1

    return {
        "label_embed": g(ks[0], (vocab, hl)),
        "label_enc_w": label_enc_w.astype(jnp.bfloat16), "label_enc_b": z(hl),
        "cls_w1": cls_w1_fold, "cls_b1": cls_b1_fold,
        "cls_w2": cp_w2.astype(jnp.bfloat16), "cls_b2": cp_b2,
        "text_embed": g(ks[5], (vocab, h)),
        "text_enc_w": text_enc_w.astype(jnp.bfloat16), "text_enc_b": z(h),
        "tp_w1": tp_w1.astype(jnp.bfloat16), "tp_b1": tp_b1,
        "tp_w2": tp_w2.astype(jnp.bfloat16), "tp_b2": tp_b2,
        "logit_scale": jnp.float32(2.6592),   # config.logit_scale_init_value
    }


if __name__ == "__main__":
    B, S, C, L = 2, 16, 4, 8
    H, HL, V = 128, 128, 103          # lane-dense feature dims (multiple of 128)

    key = jax.random.PRNGKey(0)
    k_par, k_ids, k_cls = jax.random.split(key, 3)
    params = init_params(k_par, V, HL, H)

    input_ids = jax.random.randint(k_ids, (B, S), 4, V)
    # row 0 has 4 class tokens / 4 active labels, row 1 has 3 class tokens / 3 active labels
    input_ids = input_ids.at[0, jnp.array([2, 5, 8, 11])].set(CLASS_TOKEN_INDEX)
    input_ids = input_ids.at[1, jnp.array([2, 5, 8])].set(CLASS_TOKEN_INDEX)
    attention_mask = jnp.ones((B, S), jnp.int32)

    class_input_ids = jax.random.randint(k_cls, (B, C, L), 4, V)
    class_attention_mask = jnp.ones((B, C, L), jnp.int32)
    labels_mask = jnp.array([[1, 1, 1, 1], [1, 1, 1, 0]], jnp.int32)

    fwd = jax.jit(gliclass_biencoder_fused_forward)
    logits, text_emb, class_emb = fwd(params, input_ids, attention_mask,
                                      class_input_ids, class_attention_mask, labels_mask)
    jax.block_until_ready((logits, text_emb, class_emb))

    assert logits.shape == (B, C)
    assert text_emb.shape == (B, H)
    assert class_emb.shape == (B, C, H)
    assert bool(logits[1, 3] == -1000.0)   # masked-out label slot
    print("KERNEL_OK")
</pallas_src>

<mosaic_0001>
module attributes {stable_mosaic.version = 11 : i64} {
  func.func @_fused_proj_kernel(%arg0: i32, %arg1: memref<8x128xbf16, #tpu.memory_space<vmem>>, %arg2: memref<128x256xbf16, #tpu.memory_space<vmem>>, %arg3: memref<1x256xf32, #tpu.memory_space<vmem>>, %arg4: memref<256x128xbf16, #tpu.memory_space<vmem>>, %arg5: memref<1x128xf32, #tpu.memory_space<vmem>>, %arg6: memref<8x128xf32, #tpu.memory_space<vmem>>) attributes {dimension_semantics = [#tpu.dimension_semantics<parallel>], iteration_bounds = array<i64: 1>, scalar_prefetch = 0 : i64, scratch_operands = 0 : i64, tpu.core_type = #tpu.core_type<tc>, window_params = [{transform_indices = @transform_0, window_bounds = array<i64: 8, 128>}, {pipeline_mode = #tpu.pipeline_mode<synchronous>, transform_indices = @transform_1, window_bounds = array<i64: 128, 256>}, {pipeline_mode = #tpu.pipeline_mode<synchronous>, transform_indices = @transform_2, window_bounds = array<i64: 1, 256>}, {pipeline_mode = #tpu.pipeline_mode<synchronous>, transform_indices = @transform_3, window_bounds = array<i64: 256, 128>}, {pipeline_mode = #tpu.pipeline_mode<synchronous>, transform_indices = @transform_4, window_bounds = array<i64: 1, 128>}, {transform_indices = @transform_5, window_bounds = array<i64: 8, 128>}]} {
    %c0 = arith.constant 0 : index
    %c0_0 = arith.constant 0 : index
    %0 = vector.load %arg1[%c0, %c0_0] : memref<8x128xbf16, #tpu.memory_space<vmem>>, vector<8x128xbf16>
    %c0_1 = arith.constant 0 : index
    %c0_2 = arith.constant 0 : index
    %1 = vector.load %arg2[%c0_1, %c0_2] : memref<128x256xbf16, #tpu.memory_space<vmem>>, vector<128x256xbf16>
    %cst = arith.constant dense<0.000000e+00> : vector<8x256xf32>
    %2 = tpu.matmul %0, %1, %cst {dimension_numbers = #tpu.dot_dimension_numbers<[1], [0], [0], [1], [0, 0, 1, 1], [], []>} : vector<8x128xbf16>, vector<128x256xbf16>, vector<8x256xf32> -> vector<8x256xf32>
    %c0_3 = arith.constant 0 : index
    %c0_4 = arith.constant 0 : index
    %3 = vector.load %arg3[%c0_3, %c0_4] : memref<1x256xf32, #tpu.memory_space<vmem>>, vector<1x256xf32>
    %4 = vector.broadcast %3 : vector<1x256xf32> to vector<8x256xf32>
    %5 = arith.addf %2, %4 : vector<8x256xf32>
    %cst_5 = arith.constant 0.000000e+00 : f32
    %6 = vector.broadcast %cst_5 : f32 to vector<8x256xf32>
    %7 = arith.maximumf %5, %6 : vector<8x256xf32>
    %8 = arith.truncf %7 : vector<8x256xf32> to vector<8x256xbf16>
    %c0_6 = arith.constant 0 : index
    %c0_7 = arith.constant 0 : index
    %9 = vector.load %arg4[%c0_6, %c0_7] : memref<256x128xbf16, #tpu.memory_space<vmem>>, vector<256x128xbf16>
    %cst_8 = arith.constant dense<0.000000e+00> : vector<8x128xf32>
    %10 = tpu.matmul %8, %9, %cst_8 {dimension_numbers = #tpu.dot_dimension_numbers<[1], [0], [0], [1], [0, 0, 1, 1], [], []>} : vector<8x256xbf16>, vector<256x128xbf16>, vector<8x128xf32> -> vector<8x128xf32>
    %c0_9 = arith.constant 0 : index
    %c0_10 = arith.constant 0 : index
    %11 = vector.load %arg5[%c0_9, %c0_10] : memref<1x128xf32, #tpu.memory_space<vmem>>, vector<1x128xf32>
    %12 = vector.broadcast %11 : vector<1x128xf32> to vector<8x128xf32>
    %13 = arith.addf %10, %12 : vector<8x128xf32>
    %14 = arith.mulf %13, %13 : vector<8x128xf32>
    %cst_11 = arith.constant dense<0.000000e+00> : vector<8xf32>
    %15 = vector.multi_reduction <add>, %14, %cst_11 [1] : vector<8x128xf32> to vector<8xf32>
    %16 = vector.shape_cast %15 : vector<8xf32> to vector<8x1xf32>
    %cst_12 = arith.constant 1.000000e-16 : f32
    %17 = vector.broadcast %cst_12 : f32 to vector<8x1xf32>
    %18 = arith.maximumf %16, %17 : vector<8x1xf32>
    %19 = math.rsqrt %18 : vector<8x1xf32>
    %20 = vector.broadcast %19 : vector<8x1xf32> to vector<8x128xf32>
    %21 = arith.mulf %13, %20 : vector<8x128xf32>
    %c0_13 = arith.constant 0 : index
    %c0_14 = arith.constant 0 : index
    %22 = vector.load %arg6[%c0_13, %c0_14] : memref<8x128xf32, #tpu.memory_space<vmem>>, vector<8x128xf32>
    tpu.vector_store %arg6[%c0_13, %c0_14], %21 {strides = array<i32>} : memref<8x128xf32, #tpu.memory_space<vmem>>, vector<8x128xf32>,
    return
  }
  func.func @transform_0(%arg0: i32) -> (i32, i32) {
    %c0_i32 = arith.constant 0 : i32
    %c0_i32_0 = arith.constant 0 : i32
    return %arg0, %c0_i32 : i32, i32
  }
  func.func @transform_1(%arg0: i32) -> (i32, i32) {
    %c0_i32 = arith.constant 0 : i32
    %c0_i32_0 = arith.constant 0 : i32
    %c0_i32_1 = arith.constant 0 : i32
    return %c0_i32, %c0_i32_0 : i32, i32
  }
  func.func @transform_2(%arg0: i32) -> (i32, i32) {
    %c0_i32 = arith.constant 0 : i32
    %c0_i32_0 = arith.constant 0 : i32
    %c0_i32_1 = arith.constant 0 : i32
    return %c0_i32, %c0_i32_0 : i32, i32
  }
  func.func @transform_3(%arg0: i32) -> (i32, i32) {
    %c0_i32 = arith.constant 0 : i32
    %c0_i32_0 = arith.constant 0 : i32
    %c0_i32_1 = arith.constant 0 : i32
    return %c0_i32, %c0_i32_0 : i32, i32
  }
  func.func @transform_4(%arg0: i32) -> (i32, i32) {
    %c0_i32 = arith.constant 0 : i32
    %c0_i32_0 = arith.constant 0 : i32
    %c0_i32_1 = arith.constant 0 : i32
    return %c0_i32, %c0_i32_0 : i32, i32
  }
  func.func @transform_5(%arg0: i32) -> (i32, i32) {
    %c0_i32 = arith.constant 0 : i32
    %c0_i32_0 = arith.constant 0 : i32
    return %arg0, %c0_i32 : i32, i32
  }
}

module attributes {stable_mosaic.version = 11 : i64} {
  func.func @_label_enc_pool_kernel(%arg0: i32, %arg1: memref<8x8x128xbf16, #tpu.memory_space<vmem>>, %arg2: memref<128x128xbf16, #tpu.memory_space<vmem>>, %arg3: memref<1x128xf32, #tpu.memory_space<vmem>>, %arg4: memref<8x1xf32, #tpu.memory_space<vmem>>, %arg5: memref<8x128xbf16, #tpu.memory_space<vmem>>) attributes {dimension_semantics = [#tpu.dimension_semantics<parallel>], iteration_bounds = array<i64: 1>, scalar_prefetch = 0 : i64, scratch_operands = 0 : i64, tpu.core_type = #tpu.core_type<tc>, window_params = [{transform_indices = @transform_0, window_bounds = array<i64: 8, 8, 128>}, {pipeline_mode = #tpu.pipeline_mode<synchronous>, transform_indices = @transform_1, window_bounds = array<i64: 128, 128>}, {pipeline_mode = #tpu.pipeline_mode<synchronous>, transform_indices = @transform_2, window_bounds = array<i64: 1, 128>}, {transform_indices = @transform_3, window_bounds = array<i64: 8, 1>}, {transform_indices = @transform_4, window_bounds = array<i64: 8, 128>}]} {
    %c0 = arith.constant 0 : index
    %c0_0 = arith.constant 0 : index
    %c0_1 = arith.constant 0 : index
    %0 = vector.load %arg1[%c0, %c0_0, %c0_1] : memref<8x8x128xbf16, #tpu.memory_space<vmem>>, vector<8x8x128xbf16>
    %1 = vector.shape_cast %0 : vector<8x8x128xbf16> to vector<64x128xbf16>
    %c0_2 = arith.constant 0 : index
    %c0_3 = arith.constant 0 : index
    %2 = vector.load %arg2[%c0_2, %c0_3] : memref<128x128xbf16, #tpu.memory_space<vmem>>, vector<128x128xbf16>
    %cst = arith.constant dense<0.000000e+00> : vector<64x128xf32>
    %3 = tpu.matmul %1, %2, %cst {dimension_numbers = #tpu.dot_dimension_numbers<[1], [0], [0], [1], [0, 0, 1, 1], [], []>} : vector<64x128xbf16>, vector<128x128xbf16>, vector<64x128xf32> -> vector<64x128xf32>
    %c0_4 = arith.constant 0 : index
    %c0_5 = arith.constant 0 : index
    %4 = vector.load %arg3[%c0_4, %c0_5] : memref<1x128xf32, #tpu.memory_space<vmem>>, vector<1x128xf32>
    %5 = vector.broadcast %4 : vector<1x128xf32> to vector<64x128xf32>
    %6 = arith.addf %3, %5 : vector<64x128xf32>
    %7 = math.tanh %6 : vector<64x128xf32>
    %8 = vector.shape_cast %7 : vector<64x128xf32> to vector<8x8x128xf32>
    %cst_6 = arith.constant dense<0.000000e+00> : vector<8x128xf32>
    %9 = vector.multi_reduction <add>, %8, %cst_6 [1] : vector<8x8x128xf32> to vector<8x128xf32>
    %cst_7 = arith.constant 1.250000e-01 : f32
    %10 = vector.broadcast %cst_7 : f32 to vector<8x128xf32>
    %11 = arith.mulf %9, %10 : vector<8x128xf32>
    %c0_8 = arith.constant 0 : index
    %c0_9 = arith.constant 0 : index
    %12 = vector.load %arg4[%c0_8, %c0_9] : memref<8x1xf32, #tpu.memory_space<vmem>>, vector<8x1xf32>
    %13 = vector.broadcast %12 : vector<8x1xf32> to vector<8x128xf32>
    %14 = arith.mulf %11, %13 : vector<8x128xf32>
    %15 = arith.truncf %14 : vector<8x128xf32> to vector<8x128xbf16>
    %c0_10 = arith.constant 0 : index
    %c0_11 = arith.constant 0 : index
    %16 = vector.load %arg5[%c0_10, %c0_11] : memref<8x128xbf16, #tpu.memory_space<vmem>>, vector<8x128xbf16>
    tpu.vector_store %arg5[%c0_10, %c0_11], %15 {strides = array<i32>} : memref<8x128xbf16, #tpu.memory_space<vmem>>, vector<8x128xbf16>,
    return
  }
  func.func @transform_0(%arg0: i32) -> (i32, i32, i32) {
    %c0_i32 = arith.constant 0 : i32
    %c0_i32_0 = arith.constant 0 : i32
    %c0_i32_1 = arith.constant 0 : i32
    return %arg0, %c0_i32, %c0_i32_0 : i32, i32, i32
  }
  func.func @transform_1(%arg0: i32) -> (i32, i32) {
    %c0_i32 = arith.constant 0 : i32
    %c0_i32_0 = arith.constant 0 : i32
    %c0_i32_1 = arith.constant 0 : i32
    return %c0_i32, %c0_i32_0 : i32, i32
  }
  func.func @transform_2(%arg0: i32) -> (i32, i32) {
    %c0_i32 = arith.constant 0 : i32
    %c0_i32_0 = arith.constant 0 : i32
    %c0_i32_1 = arith.constant 0 : i32
    return %c0_i32, %c0_i32_0 : i32, i32
  }
  func.func @transform_3(%arg0: i32) -> (i32, i32) {
    %c0_i32 = arith.constant 0 : i32
    %c0_i32_0 = arith.constant 0 : i32
    return %arg0, %c0_i32 : i32, i32
  }
  func.func @transform_4(%arg0: i32) -> (i32, i32) {
    %c0_i32 = arith.constant 0 : i32
    %c0_i32_0 = arith.constant 0 : i32
    return %arg0, %c0_i32 : i32, i32
  }
}

module attributes {stable_mosaic.version = 11 : i64} {
  func.func @_text_enc_pool_cls_kernel(%arg0: i32, %arg1: i32, %arg2: memref<2x4xi32, #tpu.memory_space<smem>>, %arg3: memref<1x16x128xbf16, #tpu.memory_space<vmem>>, %arg4: memref<128x128xbf16, #tpu.memory_space<vmem>>, %arg5: memref<1x128xf32, #tpu.memory_space<vmem>>, %arg6: memref<1x1x128xbf16, #tpu.memory_space<vmem>>, %arg7: memref<1x4x128xf32, #tpu.memory_space<vmem>>, %arg8: memref<1x128xf32, #tpu.memory_space<vmem>>, %arg9: memref<16x128xf32, #tpu.memory_space<vmem>>) attributes {dimension_semantics = [#tpu.dimension_semantics<parallel>, #tpu.dimension_semantics<arbitrary>], iteration_bounds = array<i64: 2, 1>, scalar_prefetch = 1 : i64, scratch_operands = 2 : i64, tpu.core_type = #tpu.core_type<tc>, window_params = [{transform_indices = @transform_0, window_bounds = array<i64: 1, 16, 128>}, {pipeline_mode = #tpu.pipeline_mode<synchronous>, transform_indices = @transform_1, window_bounds = array<i64: 128, 128>}, {pipeline_mode = #tpu.pipeline_mode<synchronous>, transform_indices = @transform_2, window_bounds = array<i64: 1, 128>}, {transform_indices = @transform_3, window_bounds = array<i64: 1, 1, 128>}, {transform_indices = @transform_4, window_bounds = array<i64: 1, 4, 128>}]} {
    %c0 = arith.constant 0 : index
    %c0_0 = arith.constant 0 : index
    %c0_1 = arith.constant 0 : index
    %0 = vector.load %arg3[%c0, %c0_0, %c0_1] : memref<1x16x128xbf16, #tpu.memory_space<vmem>>, vector<1x16x128xbf16>
    %1 = vector.shape_cast %0 : vector<1x16x128xbf16> to vector<16x128xbf16>
    %c0_2 = arith.constant 0 : index
    %c0_3 = arith.constant 0 : index
    %2 = vector.load %arg4[%c0_2, %c0_3] : memref<128x128xbf16, #tpu.memory_space<vmem>>, vector<128x128xbf16>
    %cst = arith.constant dense<0.000000e+00> : vector<16x128xf32>
    %3 = tpu.matmul %1, %2, %cst {dimension_numbers = #tpu.dot_dimension_numbers<[1], [0], [0], [1], [0, 0, 1, 1], [], []>} : vector<16x128xbf16>, vector<128x128xbf16>, vector<16x128xf32> -> vector<16x128xf32>
    %c0_4 = arith.constant 0 : index
    %c0_5 = arith.constant 0 : index
    %4 = vector.load %arg5[%c0_4, %c0_5] : memref<1x128xf32, #tpu.memory_space<vmem>>, vector<1x128xf32>
    %5 = vector.broadcast %4 : vector<1x128xf32> to vector<16x128xf32>
    %6 = arith.addf %3, %5 : vector<16x128xf32>
    %7 = math.tanh %6 : vector<16x128xf32>
    %c0_6 = arith.constant 0 : index
    %c0_7 = arith.constant 0 : index
    %8 = vector.load %arg9[%c0_6, %c0_7] : memref<16x128xf32, #tpu.memory_space<vmem>>, vector<16x128xf32>
    tpu.vector_store %arg9[%c0_6, %c0_7], %7 {strides = array<i32>} : memref<16x128xf32, #tpu.memory_space<vmem>>, vector<16x128xf32>,
    %c0_i32 = arith.constant 0 : i32
    %9 = arith.cmpi eq, %arg1, %c0_i32 : i32
    %10 = arith.extui %9 : i1 to i32
    %c0_i32_8 = arith.constant 0 : i32
    %11 = arith.cmpi ne, %10, %c0_i32_8 : i32
    scf.if %11 {
      %cst_40 = arith.constant 0.000000e+00 : f32
      %69 = vector.broadcast %cst_40 : f32 to vector<1x128xf32>
      %c0_41 = arith.constant 0 : index
      %c0_42 = arith.constant 0 : index
      %70 = vector.load %arg8[%c0_41, %c0_42] : memref<1x128xf32, #tpu.memory_space<vmem>>, vector<1x128xf32>
      tpu.vector_store %arg8[%c0_41, %c0_42], %69 {strides = array<i32>} : memref<1x128xf32, #tpu.memory_space<vmem>>, vector<1x128xf32>,
      %cst_43 = arith.constant 0.000000e+00 : f32
      %71 = vector.broadcast %cst_43 : f32 to vector<1x4x128xf32>
      %c0_44 = arith.constant 0 : index
      %c0_45 = arith.constant 0 : index
      %c0_46 = arith.constant 0 : index
      %72 = vector.load %arg7[%c0_44, %c0_45, %c0_46] : memref<1x4x128xf32, #tpu.memory_space<vmem>>, vector<1x4x128xf32>
      tpu.vector_store %arg7[%c0_44, %c0_45, %c0_46], %71 {strides = array<i32>} : memref<1x4x128xf32, #tpu.memory_space<vmem>>, vector<1x4x128xf32>,
    } else {
    }
    %c0_9 = arith.constant 0 : index
    %c0_10 = arith.constant 0 : index
    %12 = vector.load %arg8[%c0_9, %c0_10] : memref<1x128xf32, #tpu.memory_space<vmem>>, vector<1x128xf32>
    %cst_11 = arith.constant dense<0.000000e+00> : vector<128xf32>
    %13 = vector.multi_reduction <add>, %7, %cst_11 [0] : vector<16x128xf32> to vector<128xf32>
    %14 = vector.shape_cast %13 : vector<128xf32> to vector<1x128xf32>
    %15 = arith.addf %12, %14 : vector<1x128xf32>
    %c0_12 = arith.constant 0 : index
    %c0_13 = arith.constant 0 : index
    %16 = vector.load %arg8[%c0_12, %c0_13] : memref<1x128xf32, #tpu.memory_space<vmem>>, vector<1x128xf32>
    tpu.vector_store %arg8[%c0_12, %c0_13], %15 {strides = array<i32>} : memref<1x128xf32, #tpu.memory_space<vmem>>, vector<1x128xf32>,
    %c16_i32 = arith.constant 16 : i32
    %17 = arith.muli %arg1, %c16_i32 : i32
    %18 = arith.index_cast %arg0 : i32 to index
    %c0_14 = arith.constant 0 : index
    %19 = memref.load %arg2[%18, %c0_14] : memref<2x4xi32, #tpu.memory_space<smem>>
    %20 = arith.subi %19, %17 : i32
    %c0_i32_15 = arith.constant 0 : i32
    %21 = arith.cmpi sge, %20, %c0_i32_15 : i32
    %c16_i32_16 = arith.constant 16 : i32
    %22 = arith.cmpi slt, %20, %c16_i32_16 : i32
    %23 = arith.andi %21, %22 : i1
    %c0_i32_17 = arith.constant 0 : i32
    %c15_i32 = arith.constant 15 : i32
    %24 = arith.maxsi %c0_i32_17, %20 : i32
    %25 = arith.minsi %c15_i32, %24 : i32
    %26 = arith.index_cast %25 : i32 to index
    %c0_18 = arith.constant 0 : index
    %27 = vector.load %arg9[%26, %c0_18] : memref<16x128xf32, #tpu.memory_space<vmem>>, vector<1x128xf32>
    %28 = arith.extui %23 : i1 to i32
    %c0_i32_19 = arith.constant 0 : i32
    %29 = arith.cmpi ne, %28, %c0_i32_19 : i32
    scf.if %29 {
      %69 = vector.shape_cast %27 : vector<1x128xf32> to vector<1x1x128xf32>
      %c0_40 = arith.constant 0 : index
      %c0_41 = arith.constant 0 : index
      %c0_42 = arith.constant 0 : index
      %70 = vector.load %arg7[%c0_40, %c0_41, %c0_42] : memref<1x4x128xf32, #tpu.memory_space<vmem>>, vector<1x1x128xf32>
      tpu.vector_store %arg7[%c0_40, %c0_41, %c0_42], %69 {strides = array<i32>} : memref<1x4x128xf32, #tpu.memory_space<vmem>>, vector<1x1x128xf32>,
    } else {
    }
    %30 = arith.index_cast %arg0 : i32 to index
    %c1 = arith.constant 1 : index
    %31 = memref.load %arg2[%30, %c1] : memref<2x4xi32, #tpu.memory_space<smem>>
    %32 = arith.subi %31, %17 : i32
    %c0_i32_20 = arith.constant 0 : i32
    %33 = arith.cmpi sge, %32, %c0_i32_20 : i32
    %c16_i32_21 = arith.constant 16 : i32
    %34 = arith.cmpi slt, %32, %c16_i32_21 : i32
    %35 = arith.andi %33, %34 : i1
    %c0_i32_22 = arith.constant 0 : i32
    %c15_i32_23 = arith.constant 15 : i32
    %36 = arith.maxsi %c0_i32_22, %32 : i32
    %37 = arith.minsi %c15_i32_23, %36 : i32
    %38 = arith.index_cast %37 : i32 to index
    %c0_24 = arith.constant 0 : index
    %39 = vector.load %arg9[%38, %c0_24] : memref<16x128xf32, #tpu.memory_space<vmem>>, vector<1x128xf32>
    %40 = arith.extui %35 : i1 to i32
    %c0_i32_25 = arith.constant 0 : i32
    %41 = arith.cmpi ne, %40, %c0_i32_25 : i32
    scf.if %41 {
      %69 = vector.shape_cast %39 : vector<1x128xf32> to vector<1x1x128xf32>
      %c0_40 = arith.constant 0 : index
      %c1_41 = arith.constant 1 : index
      %c0_42 = arith.constant 0 : index
      %70 = vector.load %arg7[%c0_40, %c1_41, %c0_42] : memref<1x4x128xf32, #tpu.memory_space<vmem>>, vector<1x1x128xf32>
      tpu.vector_store %arg7[%c0_40, %c1_41, %c0_42], %69 {strides = array<i32>} : memref<1x4x128xf32, #tpu.memory_space<vmem>>, vector<1x1x128xf32>,
    } else {
    }
    %42 = arith.index_cast %arg0 : i32 to index
    %c2 = arith.constant 2 : index
    %43 = memref.load %arg2[%42, %c2] : memref<2x4xi32, #tpu.memory_space<smem>>
    %44 = arith.subi %43, %17 : i32
    %c0_i32_26 = arith.constant 0 : i32
    %45 = arith.cmpi sge, %44, %c0_i32_26 : i32
    %c16_i32_27 = arith.constant 16 : i32
    %46 = arith.cmpi slt, %44, %c16_i32_27 : i32
    %47 = arith.andi %45, %46 : i1
    %c0_i32_28 = arith.constant 0 : i32
    %c15_i32_29 = arith.constant 15 : i32
    %48 = arith.maxsi %c0_i32_28, %44 : i32
    %49 = arith.minsi %c15_i32_29, %48 : i32
    %50 = arith.index_cast %49 : i32 to index
    %c0_30 = arith.constant 0 : index
    %51 = vector.load %arg9[%50, %c0_30] : memref<16x128xf32, #tpu.memory_space<vmem>>, vector<1x128xf32>
    %52 = arith.extui %47 : i1 to i32
    %c0_i32_31 = arith.constant 0 : i32
    %53 = arith.cmpi ne, %52, %c0_i32_31 : i32
    scf.if %53 {
      %69 = vector.shape_cast %51 : vector<1x128xf32> to vector<1x1x128xf32>
      %c0_40 = arith.constant 0 : index
      %c2_41 = arith.constant 2 : index
      %c0_42 = arith.constant 0 : index
      %70 = vector.load %arg7[%c0_40, %c2_41, %c0_42] : memref<1x4x128xf32, #tpu.memory_space<vmem>>, vector<1x1x128xf32>
      tpu.vector_store %arg7[%c0_40, %c2_41, %c0_42], %69 {strides = array<i32>} : memref<1x4x128xf32, #tpu.memory_space<vmem>>, vector<1x1x128xf32>,
    } else {
    }
    %54 = arith.index_cast %arg0 : i32 to index
    %c3 = arith.constant 3 : index
    %55 = memref.load %arg2[%54, %c3] : memref<2x4xi32, #tpu.memory_space<smem>>
    %56 = arith.subi %55, %17 : i32
    %c0_i32_32 = arith.constant 0 : i32
    %57 = arith.cmpi sge, %56, %c0_i32_32 : i32
    %c16_i32_33 = arith.constant 16 : i32
    %58 = arith.cmpi slt, %56, %c16_i32_33 : i32
    %59 = arith.andi %57, %58 : i1
    %c0_i32_34 = arith.constant 0 : i32
    %c15_i32_35 = arith.constant 15 : i32
    %60 = arith.maxsi %c0_i32_34, %56 : i32
    %61 = arith.minsi %c15_i32_35, %60 : i32
    %62 = arith.index_cast %61 : i32 to index
    %c0_36 = arith.constant 0 : index
    %63 = vector.load %arg9[%62, %c0_36] : memref<16x128xf32, #tpu.memory_space<vmem>>, vector<1x128xf32>
    %64 = arith.extui %59 : i1 to i32
    %c0_i32_37 = arith.constant 0 : i32
    %65 = arith.cmpi ne, %64, %c0_i32_37 : i32
    scf.if %65 {
      %69 = vector.shape_cast %63 : vector<1x128xf32> to vector<1x1x128xf32>
      %c0_40 = arith.constant 0 : index
      %c3_41 = arith.constant 3 : index
      %c0_42 = arith.constant 0 : index
      %70 = vector.load %arg7[%c0_40, %c3_41, %c0_42] : memref<1x4x128xf32, #tpu.memory_space<vmem>>, vector<1x1x128xf32>
      tpu.vector_store %arg7[%c0_40, %c3_41, %c0_42], %69 {strides = array<i32>} : memref<1x4x128xf32, #tpu.memory_space<vmem>>, vector<1x1x128xf32>,
    } else {
    }
    %c0_i32_38 = arith.constant 0 : i32
    %66 = arith.cmpi eq, %arg1, %c0_i32_38 : i32
    %67 = arith.extui %66 : i1 to i32
    %c0_i32_39 = arith.constant 0 : i32
    %68 = arith.cmpi ne, %67, %c0_i32_39 : i32
    scf.if %68 {
      %c0_40 = arith.constant 0 : index
      %c0_41 = arith.constant 0 : index
      %69 = vector.load %arg8[%c0_40, %c0_41] : memref<1x128xf32, #tpu.memory_space<vmem>>, vector<1x128xf32>
      %cst_42 = arith.constant 6.250000e-02 : f32
      %70 = vector.broadcast %cst_42 : f32 to vector<1x128xf32>
      %71 = arith.mulf %69, %70 : vector<1x128xf32>
      %72 = vector.shape_cast %71 : vector<1x128xf32> to vector<1x1x128xf32>
      %73 = arith.truncf %72 : vector<1x1x128xf32> to vector<1x1x128xbf16>
      %c0_43 = arith.constant 0 : index
      %c0_44 = arith.constant 0 : index
      %c0_45 = arith.constant 0 : index
      %74 = vector.load %arg6[%c0_43, %c0_44, %c0_45] : memref<1x1x128xbf16, #tpu.memory_space<vmem>>, vector<1x1x128xbf16>
      tpu.vector_store %arg6[%c0_43, %c0_44, %c0_45], %73 {strides = array<i32>} : memref<1x1x128xbf16, #tpu.memory_space<vmem>>, vector<1x1x128xbf16>,
    } else {
    }
    return
  }
  func.func @transform_0(%arg0: i32, %arg1: i32, %arg2: memref<2x4xi32, #tpu.memory_space<smem>>) -> (i32, i32, i32) {
    %c0_i32 = arith.constant 0 : i32
    %c0_i32_0 = arith.constant 0 : i32
    return %arg0, %arg1, %c0_i32 : i32, i32, i32
  }
  func.func @transform_1(%arg0: i32, %arg1: i32, %arg2: memref<2x4xi32, #tpu.memory_space<smem>>) -> (i32, i32) {
    %c0_i32 = arith.constant 0 : i32
    %c0_i32_0 = arith.constant 0 : i32
    %c0_i32_1 = arith.constant 0 : i32
    return %c0_i32, %c0_i32_0 : i32, i32
  }
  func.func @transform_2(%arg0: i32, %arg1: i32, %arg2: memref<2x4xi32, #tpu.memory_space<smem>>) -> (i32, i32) {
    %c0_i32 = arith.constant 0 : i32
    %c0_i32_0 = arith.constant 0 : i32
    %c0_i32_1 = arith.constant 0 : i32
    return %c0_i32, %c0_i32_0 : i32, i32
  }
  func.func @transform_3(%arg0: i32, %arg1: i32, %arg2: memref<2x4xi32, #tpu.memory_space<smem>>) -> (i32, i32, i32) {
    %c0_i32 = arith.constant 0 : i32
    %c0_i32_0 = arith.constant 0 : i32
    %c0_i32_1 = arith.constant 0 : i32
    return %arg0, %c0_i32, %c0_i32_0 : i32, i32, i32
  }
  func.func @transform_4(%arg0: i32, %arg1: i32, %arg2: memref<2x4xi32, #tpu.memory_space<smem>>) -> (i32, i32, i32) {
    %c0_i32 = arith.constant 0 : i32
    %c0_i32_0 = arith.constant 0 : i32
    %c0_i32_1 = arith.constant 0 : i32
    return %arg0, %c0_i32, %c0_i32_0 : i32, i32, i32
  }
}

module attributes {stable_mosaic.version = 11 : i64} {
  func.func @_text_proj_scorer_kernel(%arg0: i32, %arg1: memref<2x128xbf16, #tpu.memory_space<vmem>>, %arg2: memref<128x256xbf16, #tpu.memory_space<vmem>>, %arg3: memref<1x256xf32, #tpu.memory_space<vmem>>, %arg4: memref<256x128xbf16, #tpu.memory_space<vmem>>, %arg5: memref<1x128xf32, #tpu.memory_space<vmem>>, %arg6: memref<2x128x128xbf16, #tpu.memory_space<vmem>>, %arg7: memref<2x128xf32, #tpu.memory_space<vmem>>, %arg8: memref<1x1xf32, #tpu.memory_space<smem>>, %arg9: memref<2x128xf32, #tpu.memory_space<vmem>>, %arg10: memref<2x128xf32, #tpu.memory_space<vmem>>) attributes {dimension_semantics = [#tpu.dimension_semantics<parallel>], iteration_bounds = array<i64: 1>, scalar_prefetch = 0 : i64, scratch_operands = 0 : i64, tpu.core_type = #tpu.core_type<tc>, window_params = [{transform_indices = @transform_0, window_bounds = array<i64: 2, 128>}, {pipeline_mode = #tpu.pipeline_mode<synchronous>, transform_indices = @transform_1, window_bounds = array<i64: 128, 256>}, {pipeline_mode = #tpu.pipeline_mode<synchronous>, transform_indices = @transform_2, window_bounds = array<i64: 1, 256>}, {pipeline_mode = #tpu.pipeline_mode<synchronous>, transform_indices = @transform_3, window_bounds = array<i64: 256, 128>}, {pipeline_mode = #tpu.pipeline_mode<synchronous>, transform_indices = @transform_4, window_bounds = array<i64: 1, 128>}, {transform_indices = @transform_5, window_bounds = array<i64: 2, 128, 128>}, {transform_indices = @transform_6, window_bounds = array<i64: 2, 128>}, {transform_indices = @transform_7, window_bounds = array<i64: 1, 1>}, {transform_indices = @transform_8, window_bounds = array<i64: 2, 128>}, {transform_indices = @transform_9, window_bounds = array<i64: 2, 128>}]} {
    %c0 = arith.constant 0 : index
    %c0_0 = arith.constant 0 : index
    %0 = vector.load %arg1[%c0, %c0_0] : memref<2x128xbf16, #tpu.memory_space<vmem>>, vector<2x128xbf16>
    %c0_1 = arith.constant 0 : index
    %c0_2 = arith.constant 0 : index
    %1 = vector.load %arg2[%c0_1, %c0_2] : memref<128x256xbf16, #tpu.memory_space<vmem>>, vector<128x256xbf16>
    %cst = arith.constant dense<0.000000e+00> : vector<2x256xf32>
    %2 = tpu.matmul %0, %1, %cst {dimension_numbers = #tpu.dot_dimension_numbers<[1], [0], [0], [1], [0, 0, 1, 1], [], []>} : vector<2x128xbf16>, vector<128x256xbf16>, vector<2x256xf32> -> vector<2x256xf32>
    %c0_3 = arith.constant 0 : index
    %c0_4 = arith.constant 0 : index
    %3 = vector.load %arg3[%c0_3, %c0_4] : memref<1x256xf32, #tpu.memory_space<vmem>>, vector<1x256xf32>
    %4 = vector.broadcast %3 : vector<1x256xf32> to vector<2x256xf32>
    %5 = arith.addf %2, %4 : vector<2x256xf32>
    %cst_5 = arith.constant 0.000000e+00 : f32
    %6 = vector.broadcast %cst_5 : f32 to vector<2x256xf32>
    %7 = arith.maximumf %5, %6 : vector<2x256xf32>
    %8 = arith.truncf %7 : vector<2x256xf32> to vector<2x256xbf16>
    %c0_6 = arith.constant 0 : index
    %c0_7 = arith.constant 0 : index
    %9 = vector.load %arg4[%c0_6, %c0_7] : memref<256x128xbf16, #tpu.memory_space<vmem>>, vector<256x128xbf16>
    %cst_8 = arith.constant dense<0.000000e+00> : vector<2x128xf32>
    %10 = tpu.matmul %8, %9, %cst_8 {dimension_numbers = #tpu.dot_dimension_numbers<[1], [0], [0], [1], [0, 0, 1, 1], [], []>} : vector<2x256xbf16>, vector<256x128xbf16>, vector<2x128xf32> -> vector<2x128xf32>
    %c0_9 = arith.constant 0 : index
    %c0_10 = arith.constant 0 : index
    %11 = vector.load %arg5[%c0_9, %c0_10] : memref<1x128xf32, #tpu.memory_space<vmem>>, vector<1x128xf32>
    %12 = vector.broadcast %11 : vector<1x128xf32> to vector<2x128xf32>
    %13 = arith.addf %10, %12 : vector<2x128xf32>
    %14 = arith.mulf %13, %13 : vector<2x128xf32>
    %cst_11 = arith.constant dense<0.000000e+00> : vector<2xf32>
    %15 = vector.multi_reduction <add>, %14, %cst_11 [1] : vector<2x128xf32> to vector<2xf32>
    %16 = vector.shape_cast %15 : vector<2xf32> to vector<2x1xf32>
    %cst_12 = arith.constant 1.000000e-16 : f32
    %17 = vector.broadcast %cst_12 : f32 to vector<2x1xf32>
    %18 = arith.maximumf %16, %17 : vector<2x1xf32>
    %19 = math.rsqrt %18 : vector<2x1xf32>
    %20 = vector.broadcast %19 : vector<2x1xf32> to vector<2x128xf32>
    %21 = arith.mulf %13, %20 : vector<2x128xf32>
    %c0_13 = arith.constant 0 : index
    %c0_14 = arith.constant 0 : index
    %22 = vector.load %arg9[%c0_13, %c0_14] : memref<2x128xf32, #tpu.memory_space<vmem>>, vector<2x128xf32>
    tpu.vector_store %arg9[%c0_13, %c0_14], %21 {strides = array<i32>} : memref<2x128xf32, #tpu.memory_space<vmem>>, vector<2x128xf32>,
    %c0_15 = arith.constant 0 : index
    %c0_16 = arith.constant 0 : index
    %c0_17 = arith.constant 0 : index
    %23 = vector.load %arg6[%c0_15, %c0_16, %c0_17] : memref<2x128x128xbf16, #tpu.memory_space<vmem>>, vector<2x128x128xbf16>
    %24 = arith.extf %23 : vector<2x128x128xbf16> to vector<2x128x128xf32>
    %25 = vector.shape_cast %21 : vector<2x128xf32> to vector<2x1x128xf32>
    %26 = vector.broadcast %25 : vector<2x1x128xf32> to vector<2x128x128xf32>
    %27 = arith.mulf %24, %26 : vector<2x128x128xf32>
    %cst_18 = arith.constant dense<0.000000e+00> : vector<2x128xf32>
    %28 = vector.multi_reduction <add>, %27, %cst_18 [2] : vector<2x128x128xf32> to vector<2x128xf32>
    %c0_19 = arith.constant 0 : index
    %c0_20 = arith.constant 0 : index
    %29 = memref.load %arg8[%c0_19, %c0_20] : memref<1x1xf32, #tpu.memory_space<smem>>
    %30 = vector.broadcast %29 : f32 to vector<2x128xf32>
    %31 = arith.mulf %28, %30 : vector<2x128xf32>
    %c0_21 = arith.constant 0 : index
    %c0_22 = arith.constant 0 : index
    %32 = vector.load %arg7[%c0_21, %c0_22] : memref<2x128xf32, #tpu.memory_space<vmem>>, vector<2x128xf32>
    %cst_23 = arith.constant 0.000000e+00 : f32
    %33 = vector.broadcast %cst_23 : f32 to vector<2x128xf32>
    %34 = arith.cmpf oeq, %32, %33 : vector<2x128xf32>
    %cst_24 = arith.constant -1.000000e+03 : f32
    %35 = vector.broadcast %cst_24 : f32 to vector<2x128xf32>
    %36 = arith.select %34, %35, %31 : vector<2x128xi1>, vector<2x128xf32>
    %c0_25 = arith.constant 0 : index
    %c0_26 = arith.constant 0 : index
    %37 = vector.load %arg10[%c0_25, %c0_26] : memref<2x128xf32, #tpu.memory_space<vmem>>, vector<2x128xf32>
    tpu.vector_store %arg10[%c0_25, %c0_26], %36 {strides = array<i32>} : memref<2x128xf32, #tpu.memory_space<vmem>>, vector<2x128xf32>,
    return
  }
  func.func @transform_0(%arg0: i32) -> (i32, i32) {
    %c0_i32 = arith.constant 0 : i32
    %c0_i32_0 = arith.constant 0 : i32
    return %arg0, %c0_i32 : i32, i32
  }
  func.func @transform_1(%arg0: i32) -> (i32, i32) {
    %c0_i32 = arith.constant 0 : i32
    %c0_i32_0 = arith.constant 0 : i32
    %c0_i32_1 = arith.constant 0 : i32
    return %c0_i32, %c0_i32_0 : i32, i32
  }
  func.func @transform_2(%arg0: i32) -> (i32, i32) {
    %c0_i32 = arith.constant 0 : i32
    %c0_i32_0 = arith.constant 0 : i32
    %c0_i32_1 = arith.constant 0 : i32
    return %c0_i32, %c0_i32_0 : i32, i32
  }
  func.func @transform_3(%arg0: i32) -> (i32, i32) {
    %c0_i32 = arith.constant 0 : i32
    %c0_i32_0 = arith.constant 0 : i32
    %c0_i32_1 = arith.constant 0 : i32
    return %c0_i32, %c0_i32_0 : i32, i32
  }
  func.func @transform_4(%arg0: i32) -> (i32, i32) {
    %c0_i32 = arith.constant 0 : i32
    %c0_i32_0 = arith.constant 0 : i32
    %c0_i32_1 = arith.constant 0 : i32
    return %c0_i32, %c0_i32_0 : i32, i32
  }
  func.func @transform_5(%arg0: i32) -> (i32, i32, i32) {
    %c0_i32 = arith.constant 0 : i32
    %c0_i32_0 = arith.constant 0 : i32
    %c0_i32_1 = arith.constant 0 : i32
    return %arg0, %c0_i32, %c0_i32_0 : i32, i32, i32
  }
  func.func @transform_6(%arg0: i32) -> (i32, i32) {
    %c0_i32 = arith.constant 0 : i32
    %c0_i32_0 = arith.constant 0 : i32
    return %arg0, %c0_i32 : i32, i32
  }
  func.func @transform_7(%arg0: i32) -> (i32, i32) {
    %c0_i32 = arith.constant 0 : i32
    %c0_i32_0 = arith.constant 0 : i32
    %c0_i32_1 = arith.constant 0 : i32
    return %c0_i32, %c0_i32_0 : i32, i32
  }
  func.func @transform_8(%arg0: i32) -> (i32, i32) {
    %c0_i32 = arith.constant 0 : i32
    %c0_i32_0 = arith.constant 0 : i32
    return %arg0, %c0_i32 : i32, i32
  }
  func.func @transform_9(%arg0: i32) -> (i32, i32) {
    %c0_i32 = arith.constant 0 : i32
    %c0_i32_0 = arith.constant 0 : i32
    return %arg0, %c0_i32 : i32, i32
  }
}

</mosaic_0001>

<llo_original>
// kernel: gliclass_biencoder_fused_forward.5
$region0: #{gliclass_biencoder_fused_forward.5}
  #allocation0 [shape = 'u32[]', space=smem, size = 0x4, offset = 0x4, fixed_abs, tag = 'smem constant byte address 0x4 - core index']
  #allocation1 [shape = 'u32[144,128]{1,0:T(1,128)}', space=vmem, size = 0x12000, scoped, tag = 'internal scratch']
  %s0 = inlined_call_operand.hbm [shape: bf16[8,128], index: 0, kind: input, shape index: {}]
  %s1 = inlined_call_operand.hbm [shape: bf16[128,256], index: 1, kind: input, shape index: {}]
  %s2 = inlined_call_operand.hbm [shape: f32[1,256], index: 2, kind: input, shape index: {}]
  %s3 = inlined_call_operand.hbm [shape: bf16[256,128], index: 3, kind: input, shape index: {}]
  %s4 = inlined_call_operand.hbm [shape: f32[1,128], index: 4, kind: input, shape index: {}]
  %s5 = inlined_call_operand.hbm [shape: f32[8,128], index: 5, kind: output, shape index: {}]
  %s6 = sld [smem:[#allocation0]]
  $region50: #{gliclass_biencoder_fused_forward.5} parent=0
    _
  %s8 = ssub.s32 1, %s6
  %s9 = scalar_select 0, %s8, %s6
  $region1: #{gliclass_biencoder_fused_forward.5} parent=0
    #allocation2 [shape = 'u8[2048]{0}', space=vmem, size = 0x800, scoped, tag = 'input window, operand 0, single buffered']
    #allocation3 [shape = 's32[1]{0}', space=sflag, size = 0x4, scoped, tag = 'scoped memory for gliclass_biencoder_fused_forward.5']
    #allocation4 [shape = 's32[1]{0}', space=sflag, size = 0x4, scoped, tag = 'scoped memory for gliclass_biencoder_fused_forward.5']
    #allocation5 [shape = 'u8[65536]{0}', space=vmem, size = 0x10000, scoped, tag = 'input window, operand 1, single buffered']
    #allocation6 [shape = 's32[1]{0}', space=sflag, size = 0x4, scoped, tag = 'scoped memory for gliclass_biencoder_fused_forward.5']
    #allocation7 [shape = 'u8[1024]{0}', space=vmem, size = 0x400, scoped, tag = 'input window, operand 2, single buffered']
    #allocation8 [shape = 'u8[65536]{0}', space=vmem, size = 0x10000, scoped, tag = 'input window, operand 3, single buffered']
    #allocation9 [shape = 's32[1]{0}', space=sflag, size = 0x4, scoped, tag = 'scoped memory for gliclass_biencoder_fused_forward.5']
    #allocation10 [shape = 'u8[512]{0}', space=vmem, size = 0x400, scoped, tag = 'input window, operand 4, single buffered']
    #allocation11 [shape = 'u8[4096]{0}', space=vmem, size = 0x1000, scoped, tag = 'output window, operand 0, single buffered']
    %10 = vsyncpa [#allocation3], 0
    %11 = vsyncpa [#allocation6], 0
    %12 = vsyncpa [#allocation9], 0
    %13 = vsyncpa [#allocation4], 0
    // Predicated region
    $region2: #{gliclass_biencoder_fused_forward.5} parent=1 // pred_check
      _
    $region3: #{gliclass_biencoder_fused_forward.5} parent=1 // pred_check_branch
      %15 = sbr.rel (0) target = $region5
    $region4: #{gliclass_biencoder_fused_forward.5} parent=1 // pred_region
      %s17 = ssub.s32 64, 64
      %18 = vsyncadd [#allocation3], %s17
      %s20 = sshll.u32 [#allocation2], 4
      %s21 = int_to_ptr.vmem [resolvable:$true] %s20
      %23 = dma.hbm_to_vmem [thread:$0]  %s0, 64, %s21, [#allocation3]
    $region5: #{gliclass_biencoder_fused_forward.5} parent=1 // pred_fallthru
      _
    // Predicated region
    $region6: #{gliclass_biencoder_fused_forward.5} parent=1 // pred_check
      _
    $region7: #{gliclass_biencoder_fused_forward.5} parent=1 // pred_check_branch
      %25 = sbr.rel (0) target = $region9
    $region8: #{gliclass_biencoder_fused_forward.5} parent=1 // pred_region
      %s27 = ssub.s32 2048, 2048
      %28 = vsyncadd [#allocation6], %s27
      %s29 = sshll.u32 [#allocation5], 4
      %s30 = int_to_ptr.vmem [resolvable:$true] %s29
      %35 = dma.hbm_to_vmem [thread:$0]  %s1, 2048, %s30, [#allocation6], 128, 128, 8
    $region9: #{gliclass_biencoder_fused_forward.5} parent=1 // pred_fallthru
      _
    // Predicated region
    $region10: #{gliclass_biencoder_fused_forward.5} parent=1 // pred_check
      _
    $region11: #{gliclass_biencoder_fused_forward.5} parent=1 // pred_check_branch
      %37 = sbr.rel (0) target = $region13
    $region12: #{gliclass_biencoder_fused_forward.5} parent=1 // pred_region
      %s39 = ssub.s32 32, 32
      %40 = vsyncadd [#allocation6], %s39
      %s42 = sshll.u32 [#allocation7], 4
      %s43 = int_to_ptr.vmem [resolvable:$true] %s42
      %45 = dma.hbm_to_vmem [thread:$0]  %s2, 32, %s43, [#allocation6]
    $region13: #{gliclass_biencoder_fused_forward.5} parent=1 // pred_fallthru
      _
    // Predicated region
    $region14: #{gliclass_biencoder_fused_forward.5} parent=1 // pred_check
      _
    $region15: #{gliclass_biencoder_fused_forward.5} parent=1 // pred_check_branch
      %47 = sbr.rel (0) target = $region17
    $region16: #{gliclass_biencoder_fused_forward.5} parent=1 // pred_region
      %s49 = ssub.s32 2048, 2048
      %50 = vsyncadd [#allocation9], %s49
      %s51 = sshll.u32 [#allocation8], 4
      %s52 = int_to_ptr.vmem [resolvable:$true] %s51
      %57 = dma.hbm_to_vmem [thread:$0]  %s3, 2048, %s52, [#allocation9], 64, 64, 4
    $region17: #{gliclass_biencoder_fused_forward.5} parent=1 // pred_fallthru
      _
    // Predicated region
    $region18: #{gliclass_biencoder_fused_forward.5} parent=1 // pred_check
      _
    $region19: #{gliclass_biencoder_fused_forward.5} parent=1 // pred_check_branch
      %59 = sbr.rel (0) target = $region21
    $region20: #{gliclass_biencoder_fused_forward.5} parent=1 // pred_region
      %s61 = ssub.s32 16, 16
      %62 = vsyncadd [#allocation9], %s61
      %s64 = sshll.u32 [#allocation10], 4
      %s65 = int_to_ptr.vmem [resolvable:$true] %s64
      %67 = dma.hbm_to_vmem [thread:$0]  %s4, 16, %s65, [#allocation9]
    $region21: #{gliclass_biencoder_fused_forward.5} parent=1 // pred_fallthru
      _
    // Predicated region
    $region22: #{gliclass_biencoder_fused_forward.5} parent=1 // pred_check
      _
    $region23: #{gliclass_biencoder_fused_forward.5} parent=1 // pred_check_branch
      %69 = sbr.rel (0) target = $region25
    $region24: #{gliclass_biencoder_fused_forward.5} parent=1 // pred_region
      %70 = dma.done [#allocation3], 64
    $region25: #{gliclass_biencoder_fused_forward.5} parent=1 // pred_fallthru
      _
    // Predicated region
    $region26: #{gliclass_biencoder_fused_forward.5} parent=1 // pred_check
      _
    $region27: #{gliclass_biencoder_fused_forward.5} parent=1 // pred_check_branch
      %72 = sbr.rel (0) target = $region29
    $region28: #{gliclass_biencoder_fused_forward.5} parent=1 // pred_region
      %73 = dma.done [#allocation6], 2048
    $region29: #{gliclass_biencoder_fused_forward.5} parent=1 // pred_fallthru
      _
    // Predicated region
    $region30: #{gliclass_biencoder_fused_forward.5} parent=1 // pred_check
      _
    $region31: #{gliclass_biencoder_fused_forward.5} parent=1 // pred_check_branch
      %75 = sbr.rel (0) target = $region33
    $region32: #{gliclass_biencoder_fused_forward.5} parent=1 // pred_region
      %76 = dma.done [#allocation6], 32
    $region33: #{gliclass_biencoder_fused_forward.5} parent=1 // pred_fallthru
      _
    // Predicated region
    $region34: #{gliclass_biencoder_fused_forward.5} parent=1 // pred_check
      _
    $region35: #{gliclass_biencoder_fused_forward.5} parent=1 // pred_check_branch
      %78 = sbr.rel (0) target = $region37
    $region36: #{gliclass_biencoder_fused_forward.5} parent=1 // pred_region
      %79 = dma.done [#allocation9], 2048
    $region37: #{gliclass_biencoder_fused_forward.5} parent=1 // pred_fallthru
      _
    // Predicated region
    $region38: #{gliclass_biencoder_fused_forward.5} parent=1 // pred_check
      _
    $region39: #{gliclass_biencoder_fused_forward.5} parent=1 // pred_check_branch
      %81 = sbr.rel (0) target = $region41
    $region40: #{gliclass_biencoder_fused_forward.5} parent=1 // pred_region
      %82 = dma.done [#allocation9], 16
    $region41: #{gliclass_biencoder_fused_forward.5} parent=1 // pred_fallthru
      _
    %v84 = vld [vmem:[#allocation2] sm:$0xf]
    %v85 = vld [vmem:[#allocation5] sm:$0xff]
    %v86 = vld [vmem:[#allocation5 + $0x8] sm:$0xff]
    %v87 = vld [vmem:[#allocation5 + $0x10] sm:$0xff]
    %v88 = vld [vmem:[#allocation5 + $0x18] sm:$0xff]
    %v89 = vld [vmem:[#allocation5 + $0x20] sm:$0xff]
    %v90 = vld [vmem:[#allocation5 + $0x28] sm:$0xff]
    %v91 = vld [vmem:[#allocation5 + $0x30] sm:$0xff]
    %v92 = vld [vmem:[#allocation5 + $0x38] sm:$0xff]
    %v93 = vld [vmem:[#allocation5 + $0x40] sm:$0xff]
    %v94 = vld [vmem:[#allocation5 + $0x48] sm:$0xff]
    %v95 = vld [vmem:[#allocation5 + $0x50] sm:$0xff]
    %v96 = vld [vmem:[#allocation5 + $0x58] sm:$0xff]
    %v97 = vld [vmem:[#allocation5 + $0x60] sm:$0xff]
    %v98 = vld [vmem:[#allocation5 + $0x68] sm:$0xff]
    %v99 = vld [vmem:[#allocation5 + $0x70] sm:$0xff]
    %v100 = vld [vmem:[#allocation5 + $0x78] sm:$0xff]
    %v101 = vld [vmem:[#allocation7] sm:$0x3]
    %v103 = vlaneseq
    %v104 = vshrl.u32 %v103, 7
    %v105 = vsub.s32 0, %v104
    %v106 = vrot.slane %v101, %v105
    %v107 = vlaneseq
    %v108 = vshrl.u32 %v107, 7
    %v109 = vsub.s32 1, %v108
    %v110 = vrot.slane %v101, %v109
    %v129 = vunpack.c.l.b16 %v85
    %v130 = vunpack.c.h.b16 %v85
    %v131 = vunpack.c.l.b16 %v86
    %v132 = vunpack.c.h.b16 %v86
    %v133 = vunpack.c.l.b16 %v87
    %v134 = vunpack.c.h.b16 %v87
    %v135 = vunpack.c.l.b16 %v88
    %v136 = vunpack.c.h.b16 %v88
    %v137 = vunpack.c.l.b16 %v89
    %v138 = vunpack.c.h.b16 %v89
    %v139 = vunpack.c.l.b16 %v90
    %v140 = vunpack.c.h.b16 %v90
    %v141 = vunpack.c.l.b16 %v91
    %v142 = vunpack.c.h.b16 %v91
    %v143 = vunpack.c.l.b16 %v92
    %v144 = vunpack.c.h.b16 %v92
    %v145 = vunpack.c.l.b16 %v93
    %v146 = vunpack.c.h.b16 %v93
    %v147 = vunpack.c.l.b16 %v94
    %v148 = vunpack.c.h.b16 %v94
    %v149 = vunpack.c.l.b16 %v95
    %v150 = vunpack.c.h.b16 %v95
    %v151 = vunpack.c.l.b16 %v96
    %v152 = vunpack.c.h.b16 %v96
    %v153 = vunpack.c.l.b16 %v97
    %v154 = vunpack.c.h.b16 %v97
    %v155 = vunpack.c.l.b16 %v98
    %v156 = vunpack.c.h.b16 %v98
    %v157 = vunpack.c.l.b16 %v99
    %v158 = vunpack.c.h.b16 %v99
    %v159 = vunpack.c.l.b16 %v100
    %v160 = vunpack.c.h.b16 %v100
    %v161 = vpack.c.b16 %v131, %v129
    %v162 = vpack.c.b16 %v132, %v130
    %v163 = vpack.c.b16 %v135, %v133
    %v164 = vpack.c.b16 %v136, %v134
    %v165 = vpack.c.b16 %v139, %v137
    %v166 = vpack.c.b16 %v140, %v138
    %v167 = vpack.c.b16 %v143, %v141
    %v168 = vpack.c.b16 %v144, %v142
    %v169 = vpack.c.b16 %v147, %v145
    %v170 = vpack.c.b16 %v148, %v146
    %v171 = vpack.c.b16 %v151, %v149
    %v172 = vpack.c.b16 %v152, %v150
    %v173 = vpack.c.b16 %v155, %v153
    %v174 = vpack.c.b16 %v156, %v154
    %v175 = vpack.c.b16 %v159, %v157
    %v176 = vpack.c.b16 %v160, %v158
    %193 = vmatprep.subr.bf16.mxu0 %v162
    %194 = vmatpush1.bf16.msra.mxu0 %v161
    %195 = vmatprep.subr.bf16.mxu0 %v164
    %196 = vmatpush1.bf16.msra.mxu0 %v163
    %197 = vmatprep.subr.bf16.mxu0 %v166
    %198 = vmatpush1.bf16.msra.mxu0 %v165
    %199 = vmatprep.subr.bf16.mxu0 %v168
    %200 = vmatpush1.bf16.msra.mxu0 %v167
    %201 = vmatprep.subr.bf16.mxu0 %v170
    %202 = vmatpush1.bf16.msra.mxu0 %v169
    %203 = vmatprep.subr.bf16.mxu0 %v172
    %204 = vmatpush1.bf16.msra.mxu0 %v171
    %205 = vmatprep.subr.bf16.mxu0 %v174
    %206 = vmatpush1.bf16.msra.mxu0 %v173
    %207 = vmatprep.subr.bf16.mxu0 %v176
    %208 = vmatpush1.bf16.msra.mxu0 %v175
    %209 = vmatprep.subr.bf16.mxu0 0
    %210 = vmatpush1.bf16.msra.mxu0 0
    %211 = vmatprep.subr.bf16.mxu0 0
    %212 = vmatpush1.bf16.msra.mxu0 0
    %213 = vmatprep.subr.bf16.mxu0 0
    %214 = vmatpush1.bf16.msra.mxu0 0
    %215 = vmatprep.subr.bf16.mxu0 0
    %216 = vmatpush1.bf16.msra.mxu0 0
    %217 = vmatprep.subr.bf16.mxu0 0
    %218 = vmatpush1.bf16.msra.mxu0 0
    %219 = vmatprep.subr.bf16.mxu0 0
    %220 = vmatpush1.bf16.msra.mxu0 0
    %221 = vmatprep.subr.bf16.mxu0 0
    %222 = vmatpush1.bf16.msra.mxu0 0
    %223 = vmatprep.subr.bf16.mxu0 0
    %224 = vmatpush1.bf16.msra.mxu0 0
    %225 = vmatprep.mubr.bf16.mxu0 0
    %226 = vmatmul.mubr.bf16.gmra.mrb[0].mxu0 %v84
    %v227 = vpop.f32.mrb[0].mxu0
    %v228 = vadd.f32 %v106, %v227
    %v229 = vpop.f32.mrb[0].mxu0
    %v230 = vadd.f32 %v110, %v229
    %v231 = vpop.f32.mrb[0].mxu0
    %v232 = vpop.f32.mrb[0].mxu0
    %233 = vdwg.mxu0
    %v234 = vmax.f32 %v228, 0.0
    %v235 = vmax.f32 %v230, 0.0
    %v236 = vpack.c.bf16 %v234, %v234
    %v237 = vpack.c.bf16 %v235, %v235
    %v238 = vld [vmem:[#allocation8] sm:$0xf]
    %v239 = vld [vmem:[#allocation8 + $0x4] sm:$0xf]
    %v240 = vld [vmem:[#allocation8 + $0x8] sm:$0xf]
    %v241 = vld [vmem:[#allocation8 + $0xc] sm:$0xf]
    %v242 = vld [vmem:[#allocation8 + $0x10] sm:$0xf]
    %v243 = vld [vmem:[#allocation8 + $0x14] sm:$0xf]
    %v244 = vld [vmem:[#allocation8 + $0x18] sm:$0xf]
    %v245 = vld [vmem:[#allocation8 + $0x1c] sm:$0xf]
    %v246 = vld [vmem:[#allocation8 + $0x20] sm:$0xf]
    %v247 = vld [vmem:[#allocation8 + $0x24] sm:$0xf]
    %v248 = vld [vmem:[#allocation8 + $0x28] sm:$0xf]
    %v249 = vld [vmem:[#allocation8 + $0x2c] sm:$0xf]
    %v250 = vld [vmem:[#allocation8 + $0x30] sm:$0xf]
    %v251 = vld [vmem:[#allocation8 + $0x34] sm:$0xf]
    %v252 = vld [vmem:[#allocation8 + $0x38] sm:$0xf]
    %v253 = vld [vmem:[#allocation8 + $0x3c] sm:$0xf]
    %v254 = vld [vmem:[#allocation8 + $0x40] sm:$0xf]
    %v255 = vld [vmem:[#allocation8 + $0x44] sm:$0xf]
    %v256 = vld [vmem:[#allocation8 + $0x48] sm:$0xf]
    %v257 = vld [vmem:[#allocation8 + $0x4c] sm:$0xf]
    %v258 = vld [vmem:[#allocation8 + $0x50] sm:$0xf]
    %v259 = vld [vmem:[#allocation8 + $0x54] sm:$0xf]
    %v260 = vld [vmem:[#allocation8 + $0x58] sm:$0xf]
    %v261 = vld [vmem:[#allocation8 + $0x5c] sm:$0xf]
    %v262 = vld [vmem:[#allocation8 + $0x60] sm:$0xf]
    %v263 = vld [vmem:[#allocation8 + $0x64] sm:$0xf]
    %v264 = vld [vmem:[#allocation8 + $0x68] sm:$0xf]
    %v265 = vld [vmem:[#allocation8 + $0x6c] sm:$0xf]
    %v266 = vld [vmem:[#allocation8 + $0x70] sm:$0xf]
    %v267 = vld [vmem:[#allocation8 + $0x74] sm:$0xf]
    %v268 = vld [vmem:[#allocation8 + $0x78] sm:$0xf]
    %v269 = vld [vmem:[#allocation8 + $0x7c] sm:$0xf]
    %v270 = vld [vmem:[#allocation10] sm:$0x1]
    %v272 = vlaneseq
    %v273 = vshrl.u32 %v272, 7
    %v274 = vsub.s32 0, %v273
    %v275 = vrot.slane %v270, %v274
    %v309 = vunpack.c.l.b16 %v238
    %v310 = vunpack.c.l.b16 %v239
    %v311 = vunpack.c.l.b16 %v240
    %v312 = vunpack.c.l.b16 %v241
    %v313 = vunpack.c.l.b16 %v242
    %v314 = vunpack.c.l.b16 %v243
    %v315 = vunpack.c.l.b16 %v244
    %v316 = vunpack.c.l.b16 %v245
    %v317 = vunpack.c.l.b16 %v246
    %v318 = vunpack.c.l.b16 %v247
    %v319 = vunpack.c.l.b16 %v248
    %v320 = vunpack.c.l.b16 %v249
    %v321 = vunpack.c.l.b16 %v250
    %v322 = vunpack.c.l.b16 %v251
    %v323 = vunpack.c.l.b16 %v252
    %v324 = vunpack.c.l.b16 %v253
    %v325 = vunpack.c.l.b16 %v254
    %v326 = vunpack.c.l.b16 %v255
    %v327 = vunpack.c.l.b16 %v256
    %v328 = vunpack.c.l.b16 %v257
    %v329 = vunpack.c.l.b16 %v258
    %v330 = vunpack.c.l.b16 %v259
    %v331 = vunpack.c.l.b16 %v260
    %v332 = vunpack.c.l.b16 %v261
    %v333 = vunpack.c.l.b16 %v262
    %v334 = vunpack.c.l.b16 %v263
    %v335 = vunpack.c.l.b16 %v264
    %v336 = vunpack.c.l.b16 %v265
    %v337 = vunpack.c.l.b16 %v266
    %v338 = vunpack.c.l.b16 %v267
    %v339 = vunpack.c.l.b16 %v268
    %v340 = vunpack.c.l.b16 %v269
    %v341 = vpack.c.b16 %v310, %v309
    %v342 = vpack.c.b16 %v312, %v311
    %v343 = vpack.c.b16 %v314, %v313
    %v344 = vpack.c.b16 %v316, %v315
    %v345 = vpack.c.b16 %v318, %v317
    %v346 = vpack.c.b16 %v320, %v319
    %v347 = vpack.c.b16 %v322, %v321
    %v348 = vpack.c.b16 %v324, %v323
    %v349 = vpack.c.b16 %v326, %v325
    %v350 = vpack.c.b16 %v328, %v327
    %v351 = vpack.c.b16 %v330, %v329
    %v352 = vpack.c.b16 %v332, %v331
    %v353 = vpack.c.b16 %v334, %v333
    %v354 = vpack.c.b16 %v336, %v335
    %v355 = vpack.c.b16 %v338, %v337
    %v356 = vpack.c.b16 %v340, %v339
    %373 = vmatprep.subr.bf16.mxu0 0
    %374 = vmatpush1.bf16.msra.mxu0 %v341
    %375 = vmatprep.subr.bf16.mxu0 0
    %376 = vmatpush1.bf16.msra.mxu0 %v342
    %377 = vmatprep.subr.bf16.mxu0 0
    %378 = vmatpush1.bf16.msra.mxu0 %v343
    %379 = vmatprep.subr.bf16.mxu0 0
    %380 = vmatpush1.bf16.msra.mxu0 %v344
    %381 = vmatprep.subr.bf16.mxu0 0
    %382 = vmatpush1.bf16.msra.mxu0 %v345
    %383 = vmatprep.subr.bf16.mxu0 0
    %384 = vmatpush1.bf16.msra.mxu0 %v346
    %385 = vmatprep.subr.bf16.mxu0 0
    %386 = vmatpush1.bf16.msra.mxu0 %v347
    %387 = vmatprep.subr.bf16.mxu0 0
    %388 = vmatpush1.bf16.msra.mxu0 %v348
    %389 = vmatprep.subr.bf16.mxu0 0
    %390 = vmatpush1.bf16.msra.mxu0 %v349
    %391 = vmatprep.subr.bf16.mxu0 0
    %392 = vmatpush1.bf16.msra.mxu0 %v350
    %393 = vmatprep.subr.bf16.mxu0 0
    %394 = vmatpush1.bf16.msra.mxu0 %v351
    %395 = vmatprep.subr.bf16.mxu0 0
    %396 = vmatpush1.bf16.msra.mxu0 %v352
    %397 = vmatprep.subr.bf16.mxu0 0
    %398 = vmatpush1.bf16.msra.mxu0 %v353
    %399 = vmatprep.subr.bf16.mxu0 0
    %400 = vmatpush1.bf16.msra.mxu0 %v354
    %401 = vmatprep.subr.bf16.mxu0 0
    %402 = vmatpush1.bf16.msra.mxu0 %v355
    %403 = vmatprep.subr.bf16.mxu0 0
    %404 = vmatpush1.bf16.msra.mxu0 %v356
    %405 = vmatprep.mubr.bf16.mxu0 %v237
    %406 = vmatmul.mubr.bf16.gmra.mrb[0].mxu0 %v236
    %v407 = vpop.f32.mrb[0].mxu0
    %v408 = vadd.f32 %v275, %v407
    %v409 = vpop.f32.mrb[0].mxu0
    %v410 = vpop.f32.mrb[0].mxu0
    %v411 = vpop.f32.mrb[0].mxu0
    %412 = vdwg.mxu0
    %v413 = vmul.f32 %v408, %v408
    %414 = vadd.xlane.f32.xlu0 %v413
    %v415 = vpop.xlane.xlu0 %414
    %v416 = vmax.f32 %v415, 1e-16
    %v417 = vrsqrt.pop %v416
    %v418 = vmul.f32 %v408, %v417
    %419 = vst [vmem:[#allocation11] sm:$0xff] %v418
    // Predicated region
    $region42: #{gliclass_biencoder_fused_forward.5} parent=1 // pred_check
      _
    $region43: #{gliclass_biencoder_fused_forward.5} parent=1 // pred_check_branch
      %421 = sbr.rel (0) target = $region45
    $region44: #{gliclass_biencoder_fused_forward.5} parent=1 // pred_region
      %s423 = ssub.s32 128, 128
      %424 = vsyncadd [#allocation4], %s423
      %s426 = sshll.u32 [#allocation11], 4
      %s427 = int_to_ptr.vmem [resolvable:$true] %s426
      %429 = dma.vmem_to_hbm [thread:$0]  %s427, 128, %s5, [#allocation4]
    $region45: #{gliclass_biencoder_fused_forward.5} parent=1 // pred_fallthru
      _
    // Predicated region
    $region46: #{gliclass_biencoder_fused_forward.5} parent=1 // pred_check
      _
    $region47: #{gliclass_biencoder_fused_forward.5} parent=1 // pred_check_branch
      %431 = sbr.rel (0) target = $region49
    $region48: #{gliclass_biencoder_fused_forward.5} parent=1 // pred_region
      %432 = dma.done [#allocation4], 128
    $region49: #{gliclass_biencoder_fused_forward.5} parent=1 // pred_fallthru
      _
    %433 = vsyncpa [#allocation3], 1
    %434 = vsyncpa [#allocation6], 1
    %435 = vsyncpa [#allocation9], 1
    %436 = vsyncpa [#allocation4], 1

// kernel: gliclass_biencoder_fused_forward.4
$region0: #{gliclass_biencoder_fused_forward.4}
  #allocation0 [shape = 'u32[]', space=smem, size = 0x4, offset = 0x4, fixed_abs, tag = 'smem constant byte address 0x4 - core index']
  #allocation1 [shape = 'u32[144,128]{1,0:T(1,128)}', space=vmem, size = 0x12000, scoped, tag = 'internal scratch']
  %s0 = inlined_call_operand.hbm [shape: bf16[8,8,128], index: 0, kind: input, shape index: {}]
  %s1 = inlined_call_operand.hbm [shape: bf16[128,128], index: 1, kind: input, shape index: {}]
  %s2 = inlined_call_operand.hbm [shape: f32[1,128], index: 2, kind: input, shape index: {}]
  %s3 = inlined_call_operand.hbm [shape: f32[8,1], index: 3, kind: input, shape index: {}]
  %s4 = inlined_call_operand.hbm [shape: bf16[8,128], index: 4, kind: output, shape index: {}]
  %s5 = sld [smem:[#allocation0]]
  $region42: #{gliclass_biencoder_fused_forward.4} parent=0
    _
  %s7 = ssub.s32 1, %s5
  %s8 = scalar_select 0, %s7, %s5
  $region1: #{gliclass_biencoder_fused_forward.4} parent=0
    #allocation2 [shape = 'u8[16384]{0}', space=vmem, size = 0x4000, scoped, tag = 'input window, operand 0, single buffered']
    #allocation3 [shape = 's32[1]{0}', space=sflag, size = 0x4, scoped, tag = 'scoped memory for gliclass_biencoder_fused_forward.4']
    #allocation4 [shape = 's32[1]{0}', space=sflag, size = 0x4, scoped, tag = 'scoped memory for gliclass_biencoder_fused_forward.4']
    #allocation5 [shape = 'u8[32768]{0}', space=vmem, size = 0x8000, scoped, tag = 'input window, operand 1, single buffered']
    #allocation6 [shape = 's32[1]{0}', space=sflag, size = 0x4, scoped, tag = 'scoped memory for gliclass_biencoder_fused_forward.4']
    #allocation7 [shape = 'u8[512]{0}', space=vmem, size = 0x400, scoped, tag = 'input window, operand 2, single buffered']
    #allocation8 [shape = 'u8[4096]{0}', space=vmem, size = 0x1000, scoped, tag = 'input window, operand 3, single buffered']
    #allocation9 [shape = 's32[1]{0}', space=sflag, size = 0x4, scoped, tag = 'scoped memory for gliclass_biencoder_fused_forward.4']
    #allocation10 [shape = 'u8[2048]{0}', space=vmem, size = 0x800, scoped, tag = 'output window, operand 0, single buffered']
    %9 = vsyncpa [#allocation3], 0
    %10 = vsyncpa [#allocation6], 0
    %11 = vsyncpa [#allocation9], 0
    %12 = vsyncpa [#allocation4], 0
    // Predicated region
    $region2: #{gliclass_biencoder_fused_forward.4} parent=1 // pred_check
      _
    $region3: #{gliclass_biencoder_fused_forward.4} parent=1 // pred_check_branch
      %14 = sbr.rel (0) target = $region5
    $region4: #{gliclass_biencoder_fused_forward.4} parent=1 // pred_region
      %s16 = ssub.s32 512, 512
      %17 = vsyncadd [#allocation3], %s16
      %s18 = sshll.u32 [#allocation2], 4
      %s19 = int_to_ptr.vmem [resolvable:$true] %s18
      %24 = dma.hbm_to_vmem [thread:$0]  %s0, 512, %s19, [#allocation3], 64, 64, 4
    $region5: #{gliclass_biencoder_fused_forward.4} parent=1 // pred_fallthru
      _
    // Predicated region
    $region6: #{gliclass_biencoder_fused_forward.4} parent=1 // pred_check
      _
    $region7: #{gliclass_biencoder_fused_forward.4} parent=1 // pred_check_branch
      %26 = sbr.rel (0) target = $region9
    $region8: #{gliclass_biencoder_fused_forward.4} parent=1 // pred_region
      %s28 = ssub.s32 1024, 1024
      %29 = vsyncadd [#allocation6], %s28
      %s30 = sshll.u32 [#allocation5], 4
      %s31 = int_to_ptr.vmem [resolvable:$true] %s30
      %36 = dma.hbm_to_vmem [thread:$0]  %s1, 1024, %s31, [#allocation6], 64, 64, 4
    $region9: #{gliclass_biencoder_fused_forward.4} parent=1 // pred_fallthru
      _
    // Predicated region
    $region10: #{gliclass_biencoder_fused_forward.4} parent=1 // pred_check
      _
    $region11: #{gliclass_biencoder_fused_forward.4} parent=1 // pred_check_branch
      %38 = sbr.rel (0) target = $region13
    $region12: #{gliclass_biencoder_fused_forward.4} parent=1 // pred_region
      %s40 = ssub.s32 16, 16
      %41 = vsyncadd [#allocation6], %s40
      %s43 = sshll.u32 [#allocation7], 4
      %s44 = int_to_ptr.vmem [resolvable:$true] %s43
      %46 = dma.hbm_to_vmem [thread:$0]  %s2, 16, %s44, [#allocation6]
    $region13: #{gliclass_biencoder_fused_forward.4} parent=1 // pred_fallthru
      _
    // Predicated region
    $region14: #{gliclass_biencoder_fused_forward.4} parent=1 // pred_check
      _
    $region15: #{gliclass_biencoder_fused_forward.4} parent=1 // pred_check_branch
      %48 = sbr.rel (0) target = $region17
    $region16: #{gliclass_biencoder_fused_forward.4} parent=1 // pred_region
      %s50 = ssub.s32 128, 128
      %51 = vsyncadd [#allocation9], %s50
      %s53 = sshll.u32 [#allocation8], 4
      %s54 = int_to_ptr.vmem [resolvable:$true] %s53
      %56 = dma.hbm_to_vmem [thread:$0]  %s3, 128, %s54, [#allocation9]
    $region17: #{gliclass_biencoder_fused_forward.4} parent=1 // pred_fallthru
      _
    // Predicated region
    $region18: #{gliclass_biencoder_fused_forward.4} parent=1 // pred_check
      _
    $region19: #{gliclass_biencoder_fused_forward.4} parent=1 // pred_check_branch
      %58 = sbr.rel (0) target = $region21
    $region20: #{gliclass_biencoder_fused_forward.4} parent=1 // pred_region
      %59 = dma.done [#allocation3], 512
    $region21: #{gliclass_biencoder_fused_forward.4} parent=1 // pred_fallthru
      _
    // Predicated region
    $region22: #{gliclass_biencoder_fused_forward.4} parent=1 // pred_check
      _
    $region23: #{gliclass_biencoder_fused_forward.4} parent=1 // pred_check_branch
      %61 = sbr.rel (0) target = $region25
    $region24: #{gliclass_biencoder_fused_forward.4} parent=1 // pred_region
      %62 = dma.done [#allocation6], 1024
    $region25: #{gliclass_biencoder_fused_forward.4} parent=1 // pred_fallthru
      _
    // Predicated region
    $region26: #{gliclass_biencoder_fused_forward.4} parent=1 // pred_check
      _
    $region27: #{gliclass_biencoder_fused_forward.4} parent=1 // pred_check_branch
      %64 = sbr.rel (0) target = $region29
    $region28: #{gliclass_biencoder_fused_forward.4} parent=1 // pred_region
      %65 = dma.done [#allocation6], 16
    $region29: #{gliclass_biencoder_fused_forward.4} parent=1 // pred_fallthru
      _
    // Predicated region
    $region30: #{gliclass_biencoder_fused_forward.4} parent=1 // pred_check
      _
    $region31: #{gliclass_biencoder_fused_forward.4} parent=1 // pred_check_branch
      %67 = sbr.rel (0) target = $region33
    $region32: #{gliclass_biencoder_fused_forward.4} parent=1 // pred_region
      %68 = dma.done [#allocation9], 128
    $region33: #{gliclass_biencoder_fused_forward.4} parent=1 // pred_fallthru
      _
    %v70 = vld [vmem:[#allocation2] sm:$0xf]
    %v71 = vld [vmem:[#allocation2 + $0x4] sm:$0xf]
    %v72 = vld [vmem:[#allocation2 + $0x8] sm:$0xf]
    %v73 = vld [vmem:[#allocation2 + $0xc] sm:$0xf]
    %v74 = vld [vmem:[#allocation2 + $0x10] sm:$0xf]
    %v75 = vld [vmem:[#allocation2 + $0x14] sm:$0xf]
    %v76 = vld [vmem:[#allocation2 + $0x18] sm:$0xf]
    %v77 = vld [vmem:[#allocation2 + $0x1c] sm:$0xf]
    %v78 = vld [vmem:[#allocation5] sm:$0xf]
    %v79 = vld [vmem:[#allocation5 + $0x4] sm:$0xf]
    %v80 = vld [vmem:[#allocation5 + $0x8] sm:$0xf]
    %v81 = vld [vmem:[#allocation5 + $0xc] sm:$0xf]
    %v82 = vld [vmem:[#allocation5 + $0x10] sm:$0xf]
    %v83 = vld [vmem:[#allocation5 + $0x14] sm:$0xf]
    %v84 = vld [vmem:[#allocation5 + $0x18] sm:$0xf]
    %v85 = vld [vmem:[#allocation5 + $0x1c] sm:$0xf]
    %v86 = vld [vmem:[#allocation5 + $0x20] sm:$0xf]
    %v87 = vld [vmem:[#allocation5 + $0x24] sm:$0xf]
    %v88 = vld [vmem:[#allocation5 + $0x28] sm:$0xf]
    %v89 = vld [vmem:[#allocation5 + $0x2c] sm:$0xf]
    %v90 = vld [vmem:[#allocation5 + $0x30] sm:$0xf]
    %v91 = vld [vmem:[#allocation5 + $0x34] sm:$0xf]
    %v92 = vld [vmem:[#allocation5 + $0x38] sm:$0xf]
    %v93 = vld [vmem:[#allocation5 + $0x3c] sm:$0xf]
    %v94 = vld [vmem:[#allocation7] sm:$0x1]
    %v96 = vlaneseq
    %v97 = vshrl.u32 %v96, 7
    %v98 = vsub.s32 0, %v97
    %v99 = vrot.slane %v94, %v98
    %v109 = vunpack.c.l.b16 %v70
    %v110 = vunpack.c.l.b16 %v71
    %v111 = vunpack.c.l.b16 %v72
    %v112 = vunpack.c.l.b16 %v73
    %v113 = vunpack.c.l.b16 %v74
    %v114 = vunpack.c.l.b16 %v75
    %v115 = vunpack.c.l.b16 %v76
    %v116 = vunpack.c.l.b16 %v77
    %v117 = vpack.c.b16 %v110, %v109
    %v118 = vpack.c.b16 %v112, %v111
    %v119 = vpack.c.b16 %v114, %v113
    %v120 = vpack.c.b16 %v116, %v115
    %v141 = vunpack.c.l.b16 %v78
    %v142 = vunpack.c.l.b16 %v79
    %v143 = vunpack.c.l.b16 %v80
    %v144 = vunpack.c.l.b16 %v81
    %v145 = vunpack.c.l.b16 %v82
    %v146 = vunpack.c.l.b16 %v83
    %v147 = vunpack.c.l.b16 %v84
    %v148 = vunpack.c.l.b16 %v85
    %v149 = vunpack.c.l.b16 %v86
    %v150 = vunpack.c.l.b16 %v87
    %v151 = vunpack.c.l.b16 %v88
    %v152 = vunpack.c.l.b16 %v89
    %v153 = vunpack.c.l.b16 %v90
    %v154 = vunpack.c.l.b16 %v91
    %v155 = vunpack.c.l.b16 %v92
    %v156 = vunpack.c.l.b16 %v93
    %v157 = vpack.c.b16 %v142, %v141
    %v158 = vpack.c.b16 %v144, %v143
    %v159 = vpack.c.b16 %v146, %v145
    %v160 = vpack.c.b16 %v148, %v147
    %v161 = vpack.c.b16 %v150, %v149
    %v162 = vpack.c.b16 %v152, %v151
    %v163 = vpack.c.b16 %v154, %v153
    %v164 = vpack.c.b16 %v156, %v155
    %173 = vmatprep.subr.bf16.mxu0 0
    %174 = vmatpush1.bf16.msra.mxu0 %v157
    %175 = vmatprep.subr.bf16.mxu0 0
    %176 = vmatpush1.bf16.msra.mxu0 %v158
    %177 = vmatprep.subr.bf16.mxu0 0
    %178 = vmatpush1.bf16.msra.mxu0 %v159
    %179 = vmatprep.subr.bf16.mxu0 0
    %180 = vmatpush1.bf16.msra.mxu0 %v160
    %181 = vmatprep.subr.bf16.mxu0 0
    %182 = vmatpush1.bf16.msra.mxu0 %v161
    %183 = vmatprep.subr.bf16.mxu0 0
    %184 = vmatpush1.bf16.msra.mxu0 %v162
    %185 = vmatprep.subr.bf16.mxu0 0
    %186 = vmatpush1.bf16.msra.mxu0 %v163
    %187 = vmatprep.subr.bf16.mxu0 0
    %188 = vmatpush1.bf16.msra.mxu0 %v164
    %189 = vmatprep.subr.bf16.mxu0 0
    %190 = vmatpush1.bf16.msra.mxu0 0
    %191 = vmatprep.subr.bf16.mxu0 0
    %192 = vmatpush1.bf16.msra.mxu0 0
    %193 = vmatprep.subr.bf16.mxu0 0
    %194 = vmatpush1.bf16.msra.mxu0 0
    %195 = vmatprep.subr.bf16.mxu0 0
    %196 = vmatpush1.bf16.msra.mxu0 0
    %197 = vmatprep.subr.bf16.mxu0 0
    %198 = vmatpush1.bf16.msra.mxu0 0
    %199 = vmatprep.subr.bf16.mxu0 0
    %200 = vmatpush1.bf16.msra.mxu0 0
    %201 = vmatprep.subr.bf16.mxu0 0
    %202 = vmatpush1.bf16.msra.mxu0 0
    %203 = vmatprep.subr.bf16.mxu0 0
    %204 = vmatpush1.bf16.msra.mxu0 0
    %205 = vmatprep.mubr.bf16.mxu0 0
    %206 = vmatmul.mubr.bf16.gmra.mrb[0].mxu0 %v117
    %v207 = vpop.f32.mrb[0].mxu0
    %v208 = vadd.f32 %v99, %v207
    %v209 = vpop.f32.mrb[0].mxu0
    %v210 = vpop.f32.mrb[0].mxu0
    %v211 = vadd.f32 %v99, %v210
    %v212 = vpop.f32.mrb[0].mxu0
    %213 = vmatprep.mubr.bf16.mxu0 0
    %214 = vmatmul.mubr.bf16.gmra.mrb[0].mxu0 %v118
    %v215 = vpop.f32.mrb[0].mxu0
    %v216 = vadd.f32 %v99, %v215
    %v217 = vpop.f32.mrb[0].mxu0
    %v218 = vpop.f32.mrb[0].mxu0
    %v219 = vadd.f32 %v99, %v218
    %v220 = vpop.f32.mrb[0].mxu0
    %221 = vmatprep.mubr.bf16.mxu0 0
    %222 = vmatmul.mubr.bf16.gmra.mrb[0].mxu0 %v119
    %v223 = vpop.f32.mrb[0].mxu0
    %v224 = vadd.f32 %v99, %v223
    %v225 = vpop.f32.mrb[0].mxu0
    %v226 = vpop.f32.mrb[0].mxu0
    %v227 = vadd.f32 %v99, %v226
    %v228 = vpop.f32.mrb[0].mxu0
    %229 = vmatprep.mubr.bf16.mxu0 0
    %230 = vmatmul.mubr.bf16.gmra.mrb[0].mxu0 %v120
    %v231 = vpop.f32.mrb[0].mxu0
    %v232 = vadd.f32 %v99, %v231
    %v233 = vpop.f32.mrb[0].mxu0
    %v234 = vpop.f32.mrb[0].mxu0
    %v235 = vadd.f32 %v99, %v234
    %v236 = vpop.f32.mrb[0].mxu0
    %237 = vdwg.mxu0
    %v238 = vtanh.pop %v208
    %v239 = vtanh.pop %v211
    %v240 = vtanh.pop %v216
    %v241 = vtanh.pop %v219
    %v242 = vtanh.pop %v224
    %v243 = vtanh.pop %v227
    %v244 = vtanh.pop %v232
    %v245 = vtanh.pop %v235
    %v246 = vrot.slane %v238, 4
    %v247 = vadd.f32 %v238, %v246
    %v248 = vrot.slane %v247, 2
    %v249 = vadd.f32 %v247, %v248
    %v250 = vrot.slane %v249, 1
    %v251 = vadd.f32 %v249, %v250
    %v252 = vrot.slane %v239, 4
    %v253 = vadd.f32 %v239, %v252
    %v254 = vrot.slane %v253, 2
    %v255 = vadd.f32 %v253, %v254
    %v256 = vrot.slane %v255, 1
    %v257 = vadd.f32 %v255, %v256
    %v258 = vrot.slane %v240, 4
    %v259 = vadd.f32 %v240, %v258
    %v260 = vrot.slane %v259, 2
    %v261 = vadd.f32 %v259, %v260
    %v262 = vrot.slane %v261, 1
    %v263 = vadd.f32 %v261, %v262
    %v264 = vrot.slane %v241, 4
    %v265 = vadd.f32 %v241, %v264
    %v266 = vrot.slane %v265, 2
    %v267 = vadd.f32 %v265, %v266
    %v268 = vrot.slane %v267, 1
    %v269 = vadd.f32 %v267, %v268
    %v270 = vrot.slane %v242, 4
    %v271 = vadd.f32 %v242, %v270
    %v272 = vrot.slane %v271, 2
    %v273 = vadd.f32 %v271, %v272
    %v274 = vrot.slane %v273, 1
    %v275 = vadd.f32 %v273, %v274
    %v276 = vrot.slane %v243, 4
    %v277 = vadd.f32 %v243, %v276
    %v278 = vrot.slane %v277, 2
    %v279 = vadd.f32 %v277, %v278
    %v280 = vrot.slane %v279, 1
    %v281 = vadd.f32 %v279, %v280
    %v282 = vrot.slane %v244, 4
    %v283 = vadd.f32 %v244, %v282
    %v284 = vrot.slane %v283, 2
    %v285 = vadd.f32 %v283, %v284
    %v286 = vrot.slane %v285, 1
    %v287 = vadd.f32 %v285, %v286
    %v288 = vrot.slane %v245, 4
    %v289 = vadd.f32 %v245, %v288
    %v290 = vrot.slane %v289, 2
    %v291 = vadd.f32 %v289, %v290
    %v292 = vrot.slane %v291, 1
    %v293 = vadd.f32 %v291, %v292
    %v294 = vmul.f32 %v251, 0.125
    %v295 = vmul.f32 %v257, 0.125
    %v296 = vmul.f32 %v263, 0.125
    %v297 = vmul.f32 %v269, 0.125
    %v298 = vmul.f32 %v275, 0.125
    %v299 = vmul.f32 %v281, 0.125
    %v300 = vmul.f32 %v287, 0.125
    %v301 = vmul.f32 %v293, 0.125
    %v302 = vld [vmem:[#allocation8] sm:$0xff]
    %304 = vset.pattern.permute.xlu0 0
    %305 = vperm.xlu0 %304, %v302
    %v306 = vpop.permute.xlu0 %305
    %v307 = vrot.slane %v306, 1
    %v308 = vrot.slane %v306, 2
    %v309 = vrot.slane %v306, 3
    %v310 = vrot.slane %v306, 4
    %v311 = vrot.slane %v306, 5
    %v312 = vrot.slane %v306, 6
    %v313 = vrot.slane %v306, 7
    %v322 = vmul.f32 %v294, %v306
    %v323 = vmul.f32 %v295, %v307
    %v324 = vmul.f32 %v296, %v308
    %v325 = vmul.f32 %v297, %v309
    %v326 = vmul.f32 %v298, %v310
    %v327 = vmul.f32 %v299, %v311
    %v328 = vmul.f32 %v300, %v312
    %v329 = vmul.f32 %v301, %v313
    %v330 = vpack.c.bf16 %v322, %v322
    %v331 = vpack.c.bf16 %v323, %v323
    %v332 = vpack.c.bf16 %v324, %v324
    %v333 = vpack.c.bf16 %v325, %v325
    %v334 = vpack.c.bf16 %v326, %v326
    %v335 = vpack.c.bf16 %v327, %v327
    %v336 = vpack.c.bf16 %v328, %v328
    %v337 = vpack.c.bf16 %v329, %v329
    %v346 = vunpack.c.l.b16 %v330
    %v347 = vunpack.c.l.b16 %v331
    %v348 = vunpack.c.l.b16 %v332
    %v349 = vunpack.c.l.b16 %v333
    %v350 = vunpack.c.l.b16 %v334
    %v351 = vunpack.c.l.b16 %v335
    %v352 = vunpack.c.l.b16 %v336
    %v353 = vunpack.c.l.b16 %v337
    %v354 = vpack.c.b16 %v346, %v346
    %v355 = vpack.c.b16 %v347, %v347
    %v356 = vpack.c.b16 %v348, %v348
    %v357 = vpack.c.b16 %v349, %v349
    %v358 = vpack.c.b16 %v350, %v350
    %v359 = vpack.c.b16 %v351, %v351
    %v360 = vpack.c.b16 %v352, %v352
    %v361 = vpack.c.b16 %v353, %v353
    %v362 = vunpack.c.l.b16 %v354
    %v363 = vunpack.c.l.b16 %v355
    %v364 = vunpack.c.l.b16 %v356
    %v365 = vunpack.c.l.b16 %v357
    %v366 = vunpack.c.l.b16 %v358
    %v367 = vunpack.c.l.b16 %v359
    %v368 = vunpack.c.l.b16 %v360
    %v369 = vunpack.c.l.b16 %v361
    %v370 = vrot.slane %v363, 7
    %vm371 = vcmask 1041409
    %v372 = vsel %vm371, %v370, %v362
    %v373 = vrot.slane %v364, 6
    %vm374 = vcmask 1042434
    %v375 = vsel %vm374, %v373, %v372
    %v376 = vrot.slane %v365, 5
    %vm377 = vcmask 1043459
    %v378 = vsel %vm377, %v376, %v375
    %v379 = vrot.slane %v366, 4
    %vm380 = vcmask 1044484
    %v381 = vsel %vm380, %v379, %v378
    %v382 = vrot.slane %v367, 3
    %vm383 = vcmask 1045509
    %v384 = vsel %vm383, %v382, %v381
    %v385 = vrot.slane %v368, 2
    %vm386 = vcmask 1046534
    %v387 = vsel %vm386, %v385, %v384
    %v388 = vrot.slane %v369, 1
    %vm389 = vcmask 1047559
    %v390 = vsel %vm389, %v388, %v387
    %v391 = vpack.c.b16 %v390, %v390
    %393 = vst [vmem:[#allocation10] sm:$0xf] %v391
    // Predicated region
    $region34: #{gliclass_biencoder_fused_forward.4} parent=1 // pred_check
      _
    $region35: #{gliclass_biencoder_fused_forward.4} parent=1 // pred_check_branch
      %395 = sbr.rel (0) target = $region37
    $region36: #{gliclass_biencoder_fused_forward.4} parent=1 // pred_region
      %s397 = ssub.s32 64, 64
      %398 = vsyncadd [#allocation4], %s397
      %s400 = sshll.u32 [#allocation10], 4
      %s401 = int_to_ptr.vmem [resolvable:$true] %s400
      %403 = dma.vmem_to_hbm [thread:$0]  %s401, 64, %s4, [#allocation4]
    $region37: #{gliclass_biencoder_fused_forward.4} parent=1 // pred_fallthru
      _
    // Predicated region
    $region38: #{gliclass_biencoder_fused_forward.4} parent=1 // pred_check
      _
    $region39: #{gliclass_biencoder_fused_forward.4} parent=1 // pred_check_branch
      %405 = sbr.rel (0) target = $region41
    $region40: #{gliclass_biencoder_fused_forward.4} parent=1 // pred_region
      %406 = dma.done [#allocation4], 64
    $region41: #{gliclass_biencoder_fused_forward.4} parent=1 // pred_fallthru
      _
    %407 = vsyncpa [#allocation3], 1
    %408 = vsyncpa [#allocation6], 1
    %409 = vsyncpa [#allocation9], 1
    %410 = vsyncpa [#allocation4], 1

// kernel: gliclass_biencoder_fused_forward.6
$region0: #{gliclass_biencoder_fused_forward.6}
  #allocation0 [shape = 'u32[]', space=smem, size = 0x4, offset = 0x4, fixed_abs, tag = 'smem constant byte address 0x4 - core index']
  #allocation1 [shape = 'u32[144,128]{1,0:T(1,128)}', space=vmem, size = 0x12000, scoped, tag = 'internal scratch']
  #allocation2 [shape = 'f32[1,128]{1,0:T(1,128)}', space=vmem, size = 0x200, scoped, tag = 'scratch operand']
  #allocation3 [shape = 'f32[16,128]{1,0:T(8,128)}', space=vmem, size = 0x2000, scoped, tag = 'scratch operand']
  #allocation4 [shape = 's32[1]{0}', space=sflag, size = 0x4, scoped, tag = 'scoped memory for gliclass_biencoder_fused_forward.6']
  #allocation5 [shape = 'u8[1024]{0}', space=smem, size = 0x400, scoped, tag = 'prefetched SMEM operand 0']
  %s0 = inlined_call_operand.hbm [shape: s32[2,4], index: 0, kind: input, shape index: {}]
  %s1 = inlined_call_operand.hbm [shape: bf16[2,16,128], index: 1, kind: input, shape index: {}]
  %s2 = inlined_call_operand.hbm [shape: bf16[128,128], index: 2, kind: input, shape index: {}]
  %s3 = inlined_call_operand.hbm [shape: f32[1,128], index: 3, kind: input, shape index: {}]
  %s4 = inlined_call_operand.hbm [shape: bf16[2,1,128], index: 4, kind: output, shape index: {0}]
  %s5 = inlined_call_operand.hbm [shape: f32[2,4,128], index: 5, kind: output, shape index: {1}]
  %6 = xla_tuple %s4, %s5
  %s7 = sld [smem:[#allocation0]]
  $region89: #{gliclass_biencoder_fused_forward.6} parent=0
    _
  %s9 = ssub.s32 1, %s7
  %s10 = scalar_select 0, %s9, %s7
  %12 = dma.hbm_to_smem %s0, 32, [#allocation5], [#allocation4]
  %13 = dma.done [#allocation4], 32
  %14 = sfence
  $region1: #{gliclass_biencoder_fused_forward.6} parent=0
    #allocation6 [shape = 'u8[8192]{0}', space=vmem, size = 0x2000, scoped, tag = 'input window, operand 1']
    #allocation7 [shape = 's32[2]{0}', space=sflag, size = 0x8, scoped, tag = 'scoped memory for gliclass_biencoder_fused_forward.6']
    #allocation8 [shape = 's32[2]{0}', space=sflag, size = 0x8, scoped, tag = 'scoped memory for gliclass_biencoder_fused_forward.6']
    #allocation9 [shape = 'u8[32768]{0}', space=vmem, size = 0x8000, scoped, tag = 'input window, operand 2, single buffered']
    #allocation10 [shape = 's32[1]{0}', space=sflag, size = 0x4, scoped, tag = 'scoped memory for gliclass_biencoder_fused_forward.6']
    #allocation11 [shape = 'u8[512]{0}', space=vmem, size = 0x400, scoped, tag = 'input window, operand 3, single buffered']
    #allocation12 [shape = 'u8[1024]{0}', space=vmem, size = 0x400, scoped, tag = 'output window, operand 0']
    #allocation13 [shape = 'u8[4096]{0}', space=vmem, size = 0x1000, scoped, tag = 'output window, operand 1']
    #allocation14 [shape = 's32[2]{0}', space=sflag, size = 0x8, scoped, tag = 'scoped memory for gliclass_biencoder_fused_forward.6']
    %15 = vsyncpa [#allocation7], 0
    %s16 = scalar_lea.sflag [#allocation7], 1
    %17 = vsyncpa %s16, 0
    %18 = vsyncpa [#allocation10], 0
    %19 = vsyncpa [#allocation8], 0
    %s20 = scalar_lea.sflag [#allocation8], 1
    %21 = vsyncpa %s20, 0
    %22 = vsyncpa [#allocation14], 0
    %s23 = scalar_lea.sflag [#allocation14], 1
    %24 = vsyncpa %s23, 0
    loop: start=0, step=1, limit=4
    $region2: #{gliclass_biencoder_fused_forward.6} parent=1 // loop_pre_header
      _
    $region3: #{gliclass_biencoder_fused_forward.6} parent=1 // loop_header
      %s26 = sphi 0, %s30
      %p27 = scmp.ge.s32.totalorder %s26, 4
      %s33 = sphi 0, %s45
      %s34 = sphi 0, %s41
      %s35 = sphi 0, %s33
      %s36 = sphi 0, %s34
      %s37 = sphi 0, %s35
      %s38 = sphi 0, %s36
      %s50 = sphi 0, %s52
      %s53 = sphi 0, %s50
      %s54 = sphi 0, %s53
      %s70 = sphi 0, %s54
      %s74 = sphi 0, %s74
      %s76 = sphi 0, %s74
      %s77 = sphi 0, %s76
      %s91 = sphi 0, %s77
      %s95 = sphi 0, %s95
      %s97 = sphi 0, %s95
      %s98 = sphi 0, %s97
      %s112 = sphi 0, %s98
      %s118 = sphi 0, %s120
      %s121 = sphi 0, %s118
      %s122 = sphi 0, %s121
      %s138 = sphi 0, %s122
      %s144 = sphi 0, %s146
      %s147 = sphi 0, %s144
      %s148 = sphi 0, %s147
      %s164 = sphi 0, %s148
    $region4: #{gliclass_biencoder_fused_forward.6} parent=1 // loop_header_branch
      %29 = sbr.rel (%p27) target = $region8
    $region5: #{gliclass_biencoder_fused_forward.6} parent=1 // loop_body
      %s31 = ssub.s32 %s26, 1
      %s32 = ssub.s32 %s26, 2
      %s39 = sadd.s32 1, %s34
      %p40 = scmp.ge.s32.totalorder %s39, 1
      %s41 = scalar_select %p40, 0, %s39
      %s42 = sadd.s32 1, %s33
      %s43 = scalar_select %p40, %s42, %s33
      %p44 = scmp.ge.s32.totalorder %s43, 2
      %s45 = scalar_select %p44, 0, %s43
      %s46 = ssub.s32 %s33, %s45
      %s47 = ssub.s32 %s34, %s41
      %s48 = sor.u32 %s46, %s47
      %p49 = scmp.eq.s32.totalorder %s48, 0
      %s51 = sadd.s32 %s50, 1
      %s52 = scalar_select %p49, %s50, %s51
      %p55 = pneg %p49
      %p56 = scmp.eq.s32.totalorder %s26, 1
      %p57 = por %p55, %p56
      %p58 = scmp.ne.s32.totalorder %s50, %s53
      %p59 = scmp.eq.s32.totalorder %s26, 0
      %p60 = por %p58, %p59
      %p61 = scmp.ne.s32.totalorder %s50, %s53
      %p62 = scmp.eq.s32.totalorder %s31, 1
      %p63 = por %p61, %p62
      %p64 = scmp.ne.s32.totalorder %s53, %s54
      %p65 = scmp.eq.s32.totalorder %s31, 0
      %p66 = por %p64, %p65
      %p67 = scmp.ne.s32.totalorder %s53, %s54
      %p68 = scmp.eq.s32.totalorder %s32, 1
      %p69 = por %p67, %p68
      %p71 = scmp.ne.s32.totalorder %s54, %s70
      %p72 = scmp.eq.s32.totalorder %s32, 0
      %p73 = por %p71, %p72
      %s75 = sadd.s32 %s74, 1
      %p78 = scmp.eq.s32.totalorder %s26, 1
      %p79 = scmp.ne.s32.totalorder %s74, %s76
      %p80 = scmp.eq.s32.totalorder %s26, 0
      %p81 = por %p79, %p80
      %p82 = scmp.ne.s32.totalorder %s74, %s76
      %p83 = scmp.eq.s32.totalorder %s31, 1
      %p84 = por %p82, %p83
      %p85 = scmp.ne.s32.totalorder %s76, %s77
      %p86 = scmp.eq.s32.totalorder %s31, 0
      %p87 = por %p85, %p86
      %p88 = scmp.ne.s32.totalorder %s76, %s77
      %p89 = scmp.eq.s32.totalorder %s32, 1
      %p90 = por %p88, %p89
      %p92 = scmp.ne.s32.totalorder %s77, %s91
      %p93 = scmp.eq.s32.totalorder %s32, 0
      %p94 = por %p92, %p93
      %s96 = sadd.s32 %s95, 1
      %p99 = scmp.eq.s32.totalorder %s26, 1
      %p100 = scmp.ne.s32.totalorder %s95, %s97
      %p101 = scmp.eq.s32.totalorder %s26, 0
      %p102 = por %p100, %p101
      %p103 = scmp.ne.s32.totalorder %s95, %s97
      %p104 = scmp.eq.s32.totalorder %s31, 1
      %p105 = por %p103, %p104
      %p106 = scmp.ne.s32.totalorder %s97, %s98
      %p107 = scmp.eq.s32.totalorder %s31, 0
      %p108 = por %p106, %p107
      %p109 = scmp.ne.s32.totalorder %s97, %s98
      %p110 = scmp.eq.s32.totalorder %s32, 1
      %p111 = por %p109, %p110
      %p113 = scmp.ne.s32.totalorder %s98, %s112
      %p114 = scmp.eq.s32.totalorder %s32, 0
      %p115 = por %p113, %p114
      %s116 = ssub.s32 %s33, %s45
      %p117 = scmp.eq.s32.totalorder %s116, 0
      %s119 = sadd.s32 %s118, 1
      %s120 = scalar_select %p117, %s118, %s119
      %p123 = pneg %p117
      %p124 = scmp.eq.s32.totalorder %s26, 1
      %p125 = por %p123, %p124
      %p126 = scmp.ne.s32.totalorder %s118, %s121
      %p127 = scmp.eq.s32.totalorder %s26, 0
      %p128 = por %p126, %p127
      %p129 = scmp.ne.s32.totalorder %s118, %s121
      %p130 = scmp.eq.s32.totalorder %s31, 1
      %p131 = por %p129, %p130
      %p132 = scmp.ne.s32.totalorder %s121, %s122
      %p133 = scmp.eq.s32.totalorder %s31, 0
      %p134 = por %p132, %p133
      %p135 = scmp.ne.s32.totalorder %s121, %s122
      %p136 = scmp.eq.s32.totalorder %s32, 1
      %p137 = por %p135, %p136
      %p139 = scmp.ne.s32.totalorder %s122, %s138
      %p140 = scmp.eq.s32.totalorder %s32, 0
      %p141 = por %p139, %p140
      %s142 = ssub.s32 %s33, %s45
      %p143 = scmp.eq.s32.totalorder %s142, 0
      %s145 = sadd.s32 %s144, 1
      %s146 = scalar_select %p143, %s144, %s145
      %p149 = pneg %p143
      %p150 = scmp.eq.s32.totalorder %s26, 1
      %p151 = por %p149, %p150
      %p152 = scmp.ne.s32.totalorder %s144, %s147
      %p153 = scmp.eq.s32.totalorder %s26, 0
      %p154 = por %p152, %p153
      %p155 = scmp.ne.s32.totalorder %s144, %s147
      %p156 = scmp.eq.s32.totalorder %s31, 1
      %p157 = por %p155, %p156
      %p158 = scmp.ne.s32.totalorder %s147, %s148
      %p159 = scmp.eq.s32.totalorder %s31, 0
      %p160 = por %p158, %p159
      %p161 = scmp.ne.s32.totalorder %s147, %s148
      %p162 = scmp.eq.s32.totalorder %s32, 1
      %p163 = por %p161, %p162
      %p165 = scmp.ne.s32.totalorder %s148, %s164
      %p166 = scmp.eq.s32.totalorder %s32, 0
      %p167 = por %p165, %p166
      %p168 = scmp.le.s32.totalorder 1, %s26
      %p169 = scmp.lt.s32.totalorder %s26, 3
      %p170 = pnand %p168, %p169
      %p171 = pneg %p170
      // Predicated region
      $region9: #{gliclass_biencoder_fused_forward.6} parent=5 // pred_check
        _
      $region10: #{gliclass_biencoder_fused_forward.6} parent=5 // pred_check_branch
        %173 = sbr.rel (%p170) target = $region12
      $region11: #{gliclass_biencoder_fused_forward.6} parent=5 // pred_region
        %s174 = ssub.s32 %s26, 1
        // Predicated region
        $region13: #{gliclass_biencoder_fused_forward.6} parent=11 // pred_check
          %p175 = pneg %p87
        $region14: #{gliclass_biencoder_fused_forward.6} parent=11 // pred_check_branch
          %177 = sbr.rel (%p175) target = $region16
        $region15: #{gliclass_biencoder_fused_forward.6} parent=11 // pred_region
          %s179 = ssub.s32 1024, 1024
          %180 = vsyncadd [#allocation10], %s179
          %s181 = sshll.u32 [#allocation9], 4
          %s182 = int_to_ptr.vmem [resolvable:$true] %s181
          %187 = dma.hbm_to_vmem [thread:$0]  %s2, 1024, %s182, [#allocation10], 64, 64, 4
        $region16: #{gliclass_biencoder_fused_forward.6} parent=11 // pred_fallthru
          _
        // Predicated region
        $region17: #{gliclass_biencoder_fused_forward.6} parent=11 // pred_check
          %p188 = pneg %p108
        $region18: #{gliclass_biencoder_fused_forward.6} parent=11 // pred_check_branch
          %190 = sbr.rel (%p188) target = $region20
        $region19: #{gliclass_biencoder_fused_forward.6} parent=11 // pred_region
          %s192 = ssub.s32 16, 16
          %193 = vsyncadd [#allocation10], %s192
          %s195 = sshll.u32 [#allocation11], 4
          %s196 = int_to_ptr.vmem [resolvable:$true] %s195
          %198 = dma.hbm_to_vmem [thread:$0]  %s3, 16, %s196, [#allocation10]
        $region20: #{gliclass_biencoder_fused_forward.6} parent=11 // pred_fallthru
          _
      $region12: #{gliclass_biencoder_fused_forward.6} parent=5 // pred_fallthru
        _
      %p199 = scmp.lt.s32.totalorder %s26, 2
      // Predicated region
      $region21: #{gliclass_biencoder_fused_forward.6} parent=5 // pred_check
        %p200 = pneg %p199
      $region22: #{gliclass_biencoder_fused_forward.6} parent=5 // pred_check_branch
        %202 = sbr.rel (%p200) target = $region24
      $region23: #{gliclass_biencoder_fused_forward.6} parent=5 // pred_region
        // Predicated region
        $region25: #{gliclass_biencoder_fused_forward.6} parent=23 // pred_check
          %p203 = pneg %p60
        $region26: #{gliclass_biencoder_fused_forward.6} parent=23 // pred_check_branch
          %205 = sbr.rel (%p203) target = $region28
        $region27: #{gliclass_biencoder_fused_forward.6} parent=23 // pred_region
          %s206 = sand.u32 %s50, 1
          %s207 = scalar_lea.sflag [#allocation7], %s206
          %s208 = sand.u32 %s50, 1
          %s209 = smul.addr %s208, 8
          %s210 = scalar_lea.vmem [#allocation6], %s209
          %s211 = smul.u32 2, %s34
          %s213 = ssub.s32 128, 128
          %214 = vsyncadd %s207, %s213
          %s215 = smul.addr %s33, 2
          %s216 = sadd.s32 %s211, %s215
          %s217 = smul.addr %s216, 64
          %s218 = scalar_lea.hbm %s1, %s217
          %s219 = sshll.u32 %s210, 4
          %s220 = int_to_ptr.vmem [resolvable:$true] %s219
          %225 = dma.hbm_to_vmem [thread:$0]  %s218, 128, %s220, %s207, 64, 64, 4
        $region28: #{gliclass_biencoder_fused_forward.6} parent=23 // pred_fallthru
          _
      $region24: #{gliclass_biencoder_fused_forward.6} parent=5 // pred_fallthru
        _
      %p226 = scmp.le.s32.totalorder 1, %s26
      %p227 = scmp.lt.s32.totalorder %s26, 3
      %p228 = pnand %p226, %p227
      %p229 = pneg %p228
      // Predicated region
      $region29: #{gliclass_biencoder_fused_forward.6} parent=5 // pred_check
        _
      $region30: #{gliclass_biencoder_fused_forward.6} parent=5 // pred_check_branch
        %231 = sbr.rel (%p228) target = $region32
      $region31: #{gliclass_biencoder_fused_forward.6} parent=5 // pred_region
        %s232 = ssub.s32 %s26, 1
        %s233 = sand.u32 %s53, 1
        %s234 = scalar_lea.sflag [#allocation7], %s233
        %s235 = sand.u32 %s53, 1
        %s236 = smul.addr %s235, 8
        %s237 = scalar_lea.vmem [#allocation6], %s236
        // Predicated region
        $region33: #{gliclass_biencoder_fused_forward.6} parent=31 // pred_check
          %p238 = pneg %p66
        $region34: #{gliclass_biencoder_fused_forward.6} parent=31 // pred_check_branch
          %240 = sbr.rel (%p238) target = $region36
        $region35: #{gliclass_biencoder_fused_forward.6} parent=31 // pred_region
          %241 = dma.done %s234, 128
        $region36: #{gliclass_biencoder_fused_forward.6} parent=31 // pred_fallthru
          _
        // Predicated region
        $region37: #{gliclass_biencoder_fused_forward.6} parent=31 // pred_check
          %p242 = pneg %p87
        $region38: #{gliclass_biencoder_fused_forward.6} parent=31 // pred_check_branch
          %244 = sbr.rel (%p242) target = $region40
        $region39: #{gliclass_biencoder_fused_forward.6} parent=31 // pred_region
          %245 = dma.done [#allocation10], 1024
        $region40: #{gliclass_biencoder_fused_forward.6} parent=31 // pred_fallthru
          _
        // Predicated region
        $region41: #{gliclass_biencoder_fused_forward.6} parent=31 // pred_check
          %p246 = pneg %p108
        $region42: #{gliclass_biencoder_fused_forward.6} parent=31 // pred_check_branch
          %248 = sbr.rel (%p246) target = $region44
        $region43: #{gliclass_biencoder_fused_forward.6} parent=31 // pred_region
          %249 = dma.done [#allocation10], 16
        $region44: #{gliclass_biencoder_fused_forward.6} parent=31 // pred_fallthru
          _
        %s250 = sand.u32 %s53, 1
        %s251 = scalar_lea.sflag [#allocation7], %s250
        %s252 = sand.u32 %s53, 1
        %s253 = smul.addr %s252, 8
        %s254 = scalar_lea.vmem [#allocation6], %s253
        %p255 = pneg %p66
        %p256 = pneg %p63
        %p257 = pneg %p87
        %p258 = pneg %p84
        %p259 = pneg %p108
        %p260 = pneg %p105
        %p261 = pneg %p134
        %p262 = pneg %p131
        %s263 = sand.u32 %s121, 1
        %s264 = scalar_lea.sflag [#allocation8], %s263
        %s265 = sand.u32 %s121, 1
        %s266 = scalar_lea.vmem [#allocation12], %s265
        %p267 = pneg %p160
        %p268 = pneg %p157
        %s269 = sand.u32 %s147, 1
        %s270 = scalar_lea.sflag [#allocation14], %s269
        %s271 = sand.u32 %s147, 1
        %s272 = smul.addr %s271, 4
        %s273 = scalar_lea.vmem [#allocation13], %s272
        %s274 = smul.u32 2, %s36
        %v276 = vld [vmem:[%s237] sm:$0xf]
        %v277 = vld [vmem:[%s237 + $0x4] sm:$0xf]
        %v278 = vld [vmem:[#allocation9] sm:$0xf]
        %v279 = vld [vmem:[#allocation9 + $0x4] sm:$0xf]
        %v280 = vld [vmem:[#allocation9 + $0x8] sm:$0xf]
        %v281 = vld [vmem:[#allocation9 + $0xc] sm:$0xf]
        %v282 = vld [vmem:[#allocation9 + $0x10] sm:$0xf]
        %v283 = vld [vmem:[#allocation9 + $0x14] sm:$0xf]
        %v284 = vld [vmem:[#allocation9 + $0x18] sm:$0xf]
        %v285 = vld [vmem:[#allocation9 + $0x1c] sm:$0xf]
        %v286 = vld [vmem:[#allocation9 + $0x20] sm:$0xf]
        %v287 = vld [vmem:[#allocation9 + $0x24] sm:$0xf]
        %v288 = vld [vmem:[#allocation9 + $0x28] sm:$0xf]
        %v289 = vld [vmem:[#allocation9 + $0x2c] sm:$0xf]
        %v290 = vld [vmem:[#allocation9 + $0x30] sm:$0xf]
        %v291 = vld [vmem:[#allocation9 + $0x34] sm:$0xf]
        %v292 = vld [vmem:[#allocation9 + $0x38] sm:$0xf]
        %v293 = vld [vmem:[#allocation9 + $0x3c] sm:$0xf]
        %v294 = vld [vmem:[#allocation11] sm:$0x1]
        %v296 = vlaneseq
        %v297 = vshrl.u32 %v296, 7
        %v298 = vsub.s32 0, %v297
        %v299 = vrot.slane %v294, %v298
        %v303 = vunpack.c.l.b16 %v276
        %v304 = vunpack.c.l.b16 %v277
        %v305 = vpack.c.b16 %v304, %v303
        %v323 = vunpack.c.l.b16 %v278
        %v324 = vunpack.c.l.b16 %v279
        %v325 = vunpack.c.l.b16 %v280
        %v326 = vunpack.c.l.b16 %v281
        %v327 = vunpack.c.l.b16 %v282
        %v328 = vunpack.c.l.b16 %v283
        %v329 = vunpack.c.l.b16 %v284
        %v330 = vunpack.c.l.b16 %v285
        %v331 = vunpack.c.l.b16 %v286
        %v332 = vunpack.c.l.b16 %v287
        %v333 = vunpack.c.l.b16 %v288
        %v334 = vunpack.c.l.b16 %v289
        %v335 = vunpack.c.l.b16 %v290
        %v336 = vunpack.c.l.b16 %v291
        %v337 = vunpack.c.l.b16 %v292
        %v338 = vunpack.c.l.b16 %v293
        %v339 = vpack.c.b16 %v324, %v323
        %v340 = vpack.c.b16 %v326, %v325
        %v341 = vpack.c.b16 %v328, %v327
        %v342 = vpack.c.b16 %v330, %v329
        %v343 = vpack.c.b16 %v332, %v331
        %v344 = vpack.c.b16 %v334, %v333
        %v345 = vpack.c.b16 %v336, %v335
        %v346 = vpack.c.b16 %v338, %v337
        %355 = vmatprep.subr.bf16.mxu0 0
        %356 = vmatpush1.bf16.msra.mxu0 %v339
        %357 = vmatprep.subr.bf16.mxu0 0
        %358 = vmatpush1.bf16.msra.mxu0 %v340
        %359 = vmatprep.subr.bf16.mxu0 0
        %360 = vmatpush1.bf16.msra.mxu0 %v341
        %361 = vmatprep.subr.bf16.mxu0 0
        %362 = vmatpush1.bf16.msra.mxu0 %v342
        %363 = vmatprep.subr.bf16.mxu0 0
        %364 = vmatpush1.bf16.msra.mxu0 %v343
        %365 = vmatprep.subr.bf16.mxu0 0
        %366 = vmatpush1.bf16.msra.mxu0 %v344
        %367 = vmatprep.subr.bf16.mxu0 0
        %368 = vmatpush1.bf16.msra.mxu0 %v345
        %369 = vmatprep.subr.bf16.mxu0 0
        %370 = vmatpush1.bf16.msra.mxu0 %v346
        %371 = vmatprep.subr.bf16.mxu0 0
        %372 = vmatpush1.bf16.msra.mxu0 0
        %373 = vmatprep.subr.bf16.mxu0 0
        %374 = vmatpush1.bf16.msra.mxu0 0
        %375 = vmatprep.subr.bf16.mxu0 0
        %376 = vmatpush1.bf16.msra.mxu0 0
        %377 = vmatprep.subr.bf16.mxu0 0
        %378 = vmatpush1.bf16.msra.mxu0 0
        %379 = vmatprep.subr.bf16.mxu0 0
        %380 = vmatpush1.bf16.msra.mxu0 0
        %381 = vmatprep.subr.bf16.mxu0 0
        %382 = vmatpush1.bf16.msra.mxu0 0
        %383 = vmatprep.subr.bf16.mxu0 0
        %384 = vmatpush1.bf16.msra.mxu0 0
        %385 = vmatprep.subr.bf16.mxu0 0
        %386 = vmatpush1.bf16.msra.mxu0 0
        %387 = vmatprep.mubr.bf16.mxu0 0
        %388 = vmatmul.mubr.bf16.gmra.mrb[0].mxu0 %v305
        %v389 = vpop.f32.mrb[0].mxu0
        %v390 = vadd.f32 %v299, %v389
        %v391 = vpop.f32.mrb[0].mxu0
        %v392 = vpop.f32.mrb[0].mxu0
        %v393 = vadd.f32 %v299, %v392
        %v394 = vpop.f32.mrb[0].mxu0
        %395 = vdwg.mxu0
        %v396 = vtanh.pop %v390
        %v397 = vtanh.pop %v393
        %398 = vst [vmem:[#allocation3] sm:$0xff] %v396
        %399 = vst [vmem:[#allocation3 + $0x8] sm:$0xff] %v397
        %p400 = scmp.eq.s32.totalorder %s36, 0
        // Predicated region
        $region45: #{gliclass_biencoder_fused_forward.6} parent=31 // pred_check
          %p401 = pneg %p400
        $region46: #{gliclass_biencoder_fused_forward.6} parent=31 // pred_check_branch
          %403 = sbr.rel (%p401) target = $region48
        $region47: #{gliclass_biencoder_fused_forward.6} parent=31 // pred_region
          %404 = vst [vmem:[#allocation2] sm:$0x1] 0.0
          %405 = vst [vmem:[%s273] sm:$0xf] 0.0
        $region48: #{gliclass_biencoder_fused_forward.6} parent=31 // pred_fallthru
          _
        %v406 = vld [vmem:[#allocation2] sm:$0x1]
        %v407 = vadd.f32 %v396, %v397
        %v408 = vrot.slane %v407, 4
        %v409 = vadd.f32 %v407, %v408
        %v410 = vrot.slane %v409, 2
        %v411 = vadd.f32 %v409, %v410
        %v412 = vrot.slane %v411, 1
        %v413 = vadd.f32 %v411, %v412
        %v414 = vadd.f32 %v406, %v413
        %415 = vst [vmem:[#allocation2] sm:$0x1] %v414
        %s416 = smul.u32 %s36, 16
        %s417 = smul.u32 %s35, 128
        %s418 = sld [smem:[#allocation5 + %s417]]
        %s419 = ssub.s32 %s418, %s416
        %p420 = scmp.ge.s32.totalorder %s419, 0
        %p421 = scmp.lt.s32.totalorder %s419, 16
        %p422 = pnand %p420, %p421
        %p423 = pneg %p422
        %p424 = scmp.gt.s32.totalorder %s419, 0
        %s425 = scalar_select %p424, %s419, 0
        %p426 = scmp.lt.s32.totalorder %s425, 15
        %s427 = scalar_select %p426, %s425, 15
        %s428 = scalar_lea.vmem [#allocation3], %s427
        %v429 = vld [vmem:[%s428] sm:$0x1]
        // Predicated region
        $region49: #{gliclass_biencoder_fused_forward.6} parent=31 // pred_check
          _
        $region50: #{gliclass_biencoder_fused_forward.6} parent=31 // pred_check_branch
          %431 = sbr.rel (%p422) target = $region52
        $region51: #{gliclass_biencoder_fused_forward.6} parent=31 // pred_region
          %432 = vst [vmem:[%s273] sm:$0x1] %v429
        $region52: #{gliclass_biencoder_fused_forward.6} parent=31 // pred_fallthru
          _
        %s433 = sadd.s32 %s417, 1
        %s434 = sld [smem:[#allocation5 + %s433]]
        %s435 = ssub.s32 %s434, %s416
        %p436 = scmp.ge.s32.totalorder %s435, 0
        %p437 = scmp.lt.s32.totalorder %s435, 16
        %p438 = pnand %p436, %p437
        %p439 = pneg %p438
        %p440 = scmp.gt.s32.totalorder %s435, 0
        %s441 = scalar_select %p440, %s435, 0
        %p442 = scmp.lt.s32.totalorder %s441, 15
        %s443 = scalar_select %p442, %s441, 15
        %s444 = scalar_lea.vmem [#allocation3], %s443
        %v445 = vld [vmem:[%s444] sm:$0x1]
        // Predicated region
        $region53: #{gliclass_biencoder_fused_forward.6} parent=31 // pred_check
          _
        $region54: #{gliclass_biencoder_fused_forward.6} parent=31 // pred_check_branch
          %447 = sbr.rel (%p438) target = $region56
        $region55: #{gliclass_biencoder_fused_forward.6} parent=31 // pred_region
          %448 = vst [vmem:[%s273 + $0x1] sm:$0x1] %v445
        $region56: #{gliclass_biencoder_fused_forward.6} parent=31 // pred_fallthru
          _
        %s449 = sadd.s32 %s417, 2
        %s450 = sld [smem:[#allocation5 + %s449]]
        %s451 = ssub.s32 %s450, %s416
        %p452 = scmp.ge.s32.totalorder %s451, 0
        %p453 = scmp.lt.s32.totalorder %s451, 16
        %p454 = pnand %p452, %p453
        %p455 = pneg %p454
        %p456 = scmp.gt.s32.totalorder %s451, 0
        %s457 = scalar_select %p456, %s451, 0
        %p458 = scmp.lt.s32.totalorder %s457, 15
        %s459 = scalar_select %p458, %s457, 15
        %s460 = scalar_lea.vmem [#allocation3], %s459
        %v461 = vld [vmem:[%s460] sm:$0x1]
        // Predicated region
        $region57: #{gliclass_biencoder_fused_forward.6} parent=31 // pred_check
          _
        $region58: #{gliclass_biencoder_fused_forward.6} parent=31 // pred_check_branch
          %463 = sbr.rel (%p454) target = $region60
        $region59: #{gliclass_biencoder_fused_forward.6} parent=31 // pred_region
          %464 = vst [vmem:[%s273 + $0x2] sm:$0x1] %v461
        $region60: #{gliclass_biencoder_fused_forward.6} parent=31 // pred_fallthru
          _
        %s465 = sadd.s32 %s417, 3
        %s466 = sld [smem:[#allocation5 + %s465]]
        %s467 = ssub.s32 %s466, %s416
        %p468 = scmp.ge.s32.totalorder %s467, 0
        %p469 = scmp.lt.s32.totalorder %s467, 16
        %p470 = pnand %p468, %p469
        %p471 = pneg %p470
        %p472 = scmp.gt.s32.totalorder %s467, 0
        %s473 = scalar_select %p472, %s467, 0
        %p474 = scmp.lt.s32.totalorder %s473, 15
        %s475 = scalar_select %p474, %s473, 15
        %s476 = scalar_lea.vmem [#allocation3], %s475
        %v477 = vld [vmem:[%s476] sm:$0x1]
        // Predicated region
        $region61: #{gliclass_biencoder_fused_forward.6} parent=31 // pred_check
          _
        $region62: #{gliclass_biencoder_fused_forward.6} parent=31 // pred_check_branch
          %479 = sbr.rel (%p470) target = $region64
        $region63: #{gliclass_biencoder_fused_forward.6} parent=31 // pred_region
          %480 = vst [vmem:[%s273 + $0x3] sm:$0x1] %v477
        $region64: #{gliclass_biencoder_fused_forward.6} parent=31 // pred_fallthru
          _
        // Predicated region
        $region65: #{gliclass_biencoder_fused_forward.6} parent=31 // pred_check
          %p481 = pneg %p400
        $region66: #{gliclass_biencoder_fused_forward.6} parent=31 // pred_check_branch
          %483 = sbr.rel (%p481) target = $region68
        $region67: #{gliclass_biencoder_fused_forward.6} parent=31 // pred_region
          %v484 = vld [vmem:[#allocation2] sm:$0x1]
          %v485 = vmul.f32 %v484, 0.0625
          %v486 = vpack.c.bf16 %v485, %v485
          %vm487 = vcmask 1040384
          %vm488 = vsmask.f32 256
          %vm489 = vmand %vm487, %vm488
          %v490 = vld [vmem:[%s266] sm:$0x1]
          %v491 = vsel %vm489, %v486, %v490
          %492 = vst [vmem:[%s266] sm:$0x1] %v491
        $region68: #{gliclass_biencoder_fused_forward.6} parent=31 // pred_fallthru
          _
        %s493 = sand.u32 %s121, 1
        %s494 = scalar_lea.sflag [#allocation8], %s493
        %s495 = sand.u32 %s121, 1
        %s496 = scalar_lea.vmem [#allocation12], %s495
        %s497 = sand.u32 %s147, 1
        %s498 = scalar_lea.sflag [#allocation14], %s497
        %s499 = sand.u32 %s147, 1
        %s500 = smul.addr %s499, 4
        %s501 = scalar_lea.vmem [#allocation13], %s500
        // Predicated region
        $region69: #{gliclass_biencoder_fused_forward.6} parent=31 // pred_check
          %p502 = pneg %p131
        $region70: #{gliclass_biencoder_fused_forward.6} parent=31 // pred_check_branch
          %504 = sbr.rel (%p502) target = $region72
        $region71: #{gliclass_biencoder_fused_forward.6} parent=31 // pred_region
          %s506 = ssub.s32 16, 16
          %507 = vsyncadd %s494, %s506
          %s508 = smul.addr %s35, 16
          %s509 = scalar_lea.hbm %s4, %s508
          %s511 = sshll.u32 %s496, 4
          %s512 = int_to_ptr.vmem [resolvable:$true] %s511
          %514 = dma.vmem_to_hbm [thread:$0]  %s512, 16, %s509, %s494
        $region72: #{gliclass_biencoder_fused_forward.6} parent=31 // pred_fallthru
          _
        // Predicated region
        $region73: #{gliclass_biencoder_fused_forward.6} parent=31 // pred_check
          %p515 = pneg %p157
        $region74: #{gliclass_biencoder_fused_forward.6} parent=31 // pred_check_branch
          %517 = sbr.rel (%p515) target = $region76
        $region75: #{gliclass_biencoder_fused_forward.6} parent=31 // pred_region
          %s519 = ssub.s32 64, 64
          %520 = vsyncadd %s498, %s519
          %s521 = smul.addr %s35, 64
          %s522 = scalar_lea.hbm %s5, %s521
          %s524 = sshll.u32 %s501, 4
          %s525 = int_to_ptr.vmem [resolvable:$true] %s524
          %527 = dma.vmem_to_hbm [thread:$0]  %s525, 64, %s522, %s498
        $region76: #{gliclass_biencoder_fused_forward.6} parent=31 // pred_fallthru
          _
      $region32: #{gliclass_biencoder_fused_forward.6} parent=5 // pred_fallthru
        _
      %p528 = scmp.le.s32.totalorder 2, %s26
      // Predicated region
      $region77: #{gliclass_biencoder_fused_forward.6} parent=5 // pred_check
        %p529 = pneg %p528
      $region78: #{gliclass_biencoder_fused_forward.6} parent=5 // pred_check_branch
        %531 = sbr.rel (%p529) target = $region80
      $region79: #{gliclass_biencoder_fused_forward.6} parent=5 // pred_region
        %s532 = ssub.s32 %s26, 2
        // Predicated region
        $region81: #{gliclass_biencoder_fused_forward.6} parent=79 // pred_check
          %p533 = pneg %p137
        $region82: #{gliclass_biencoder_fused_forward.6} parent=79 // pred_check_branch
          %535 = sbr.rel (%p533) target = $region84
        $region83: #{gliclass_biencoder_fused_forward.6} parent=79 // pred_region
          %s536 = sand.u32 %s122, 1
          %s537 = scalar_lea.sflag [#allocation8], %s536
          %s538 = sand.u32 %s122, 1
          %s539 = scalar_lea.vmem [#allocation12], %s538
          %540 = dma.done %s537, 16
        $region84: #{gliclass_biencoder_fused_forward.6} parent=79 // pred_fallthru
          _
        // Predicated region
        $region85: #{gliclass_biencoder_fused_forward.6} parent=79 // pred_check
          %p541 = pneg %p163
        $region86: #{gliclass_biencoder_fused_forward.6} parent=79 // pred_check_branch
          %543 = sbr.rel (%p541) target = $region88
        $region87: #{gliclass_biencoder_fused_forward.6} parent=79 // pred_region
          %s544 = sand.u32 %s148, 1
          %s545 = scalar_lea.sflag [#allocation14], %s544
          %s546 = sand.u32 %s148, 1
          %s547 = smul.addr %s546, 4
          %s548 = scalar_lea.vmem [#allocation13], %s547
          %549 = dma.done %s545, 64
        $region88: #{gliclass_biencoder_fused_forward.6} parent=79 // pred_fallthru
          _
      $region80: #{gliclass_biencoder_fused_forward.6} parent=5 // pred_fallthru
        _
    $region6: #{gliclass_biencoder_fused_forward.6} parent=1 // loop_footer
      %s30 = sadd.s32 1, %s26
    $region7: #{gliclass_biencoder_fused_forward.6} parent=1 // loop_footer_branch
      %25 = sbr.rel target = $region3
    $region8: #{gliclass_biencoder_fused_forward.6} parent=1 // loop_exit
      _
    %550 = vsyncpa [#allocation7], 1
    %s551 = scalar_lea.sflag [#allocation7], 1
    %552 = vsyncpa %s551, 1
    %553 = vsyncpa [#allocation10], 1
    %554 = vsyncpa [#allocation8], 1
    %s555 = scalar_lea.sflag [#allocation8], 1
    %556 = vsyncpa %s555, 1
    %557 = vsyncpa [#allocation14], 1
    %s558 = scalar_lea.sflag [#allocation14], 1
    %559 = vsyncpa %s558, 1

// kernel: gliclass_biencoder_fused_forward.7
$region0: #{gliclass_biencoder_fused_forward.7}
  #allocation0 [shape = 'u32[]', space=smem, size = 0x4, offset = 0x4, fixed_abs, tag = 'smem constant byte address 0x4 - core index']
  #allocation1 [shape = 'u32[144,128]{1,0:T(1,128)}', space=vmem, size = 0x12000, scoped, tag = 'internal scratch']
  #allocation2 [shape = 'f32[1,1]{1,0:T(1,128)S(6)}', space=smem, size = 0x200, scoped, tag = 'scoped memory for gliclass_biencoder_fused_forward.7']
  %s0 = inlined_call_operand.hbm [shape: bf16[2,128], index: 0, kind: input, shape index: {}]
  %s1 = inlined_call_operand.hbm [shape: bf16[128,256], index: 1, kind: input, shape index: {}]
  %s2 = inlined_call_operand.hbm [shape: f32[1,256], index: 2, kind: input, shape index: {}]
  %s3 = inlined_call_operand.hbm [shape: bf16[256,128], index: 3, kind: input, shape index: {}]
  %s4 = inlined_call_operand.hbm [shape: f32[1,128], index: 4, kind: input, shape index: {}]
  %s5 = inlined_call_operand.hbm [shape: bf16[2,128,128], index: 5, kind: input, shape index: {}]
  %s6 = inlined_call_operand.hbm [shape: f32[2,128], index: 6, kind: input, shape index: {}]
  %s7 = inlined_call_operand.<no memory space> [shape: f32[1,1], index: 7, kind: input, shape index: {}]
  %s8 = inlined_call_operand.hbm [shape: f32[2,128], index: 8, kind: output, shape index: {0}]
  %s9 = inlined_call_operand.hbm [shape: f32[2,128], index: 9, kind: output, shape index: {1}]
  %10 = xla_tuple %s8, %s9
  %s11 = sld [smem:[#allocation0]]
  $region78: #{gliclass_biencoder_fused_forward.7} parent=0
    _
  %s13 = ssub.s32 1, %s11
  %s14 = scalar_select 0, %s13, %s11
  %15 = sst [smem:[#allocation2]] %s7
  $region1: #{gliclass_biencoder_fused_forward.7} parent=0
    #allocation3 [shape = 'u8[512]{0}', space=vmem, size = 0x400, scoped, tag = 'input window, operand 0, single buffered']
    #allocation4 [shape = 's32[1]{0}', space=sflag, size = 0x4, scoped, tag = 'scoped memory for gliclass_biencoder_fused_forward.7']
    #allocation5 [shape = 's32[1]{0}', space=sflag, size = 0x4, scoped, tag = 'scoped memory for gliclass_biencoder_fused_forward.7']
    #allocation6 [shape = 'u8[65536]{0}', space=vmem, size = 0x10000, scoped, tag = 'input window, operand 1, single buffered']
    #allocation7 [shape = 's32[1]{0}', space=sflag, size = 0x4, scoped, tag = 'scoped memory for gliclass_biencoder_fused_forward.7']
    #allocation8 [shape = 'u8[1024]{0}', space=vmem, size = 0x400, scoped, tag = 'input window, operand 2, single buffered']
    #allocation9 [shape = 'u8[65536]{0}', space=vmem, size = 0x10000, scoped, tag = 'input window, operand 3, single buffered']
    #allocation10 [shape = 's32[1]{0}', space=sflag, size = 0x4, scoped, tag = 'scoped memory for gliclass_biencoder_fused_forward.7']
    #allocation11 [shape = 'u8[512]{0}', space=vmem, size = 0x400, scoped, tag = 'input window, operand 4, single buffered']
    #allocation12 [shape = 'u8[65536]{0}', space=vmem, size = 0x10000, scoped, tag = 'input window, operand 5, single buffered']
    #allocation13 [shape = 's32[1]{0}', space=sflag, size = 0x4, scoped, tag = 'scoped memory for gliclass_biencoder_fused_forward.7']
    #allocation14 [shape = 'u8[1024]{0}', space=vmem, size = 0x400, scoped, tag = 'input window, operand 6, single buffered']
    #allocation15 [shape = 'u8[1024]{0}', space=vmem, size = 0x400, scoped, tag = 'output window, operand 0, single buffered']
    #allocation16 [shape = 'u8[1024]{0}', space=vmem, size = 0x400, scoped, tag = 'output window, operand 1, single buffered']
    #allocation17 [shape = 's32[1]{0}', space=sflag, size = 0x4, scoped, tag = 'scoped memory for gliclass_biencoder_fused_forward.7']
    %16 = vsyncpa [#allocation4], 0
    %17 = vsyncpa [#allocation7], 0
    %18 = vsyncpa [#allocation10], 0
    %19 = vsyncpa [#allocation13], 0
    %20 = vsyncpa [#allocation5], 0
    %21 = vsyncpa [#allocation17], 0
    // Predicated region
    $region2: #{gliclass_biencoder_fused_forward.7} parent=1 // pred_check
      _
    $region3: #{gliclass_biencoder_fused_forward.7} parent=1 // pred_check_branch
      %23 = sbr.rel (0) target = $region5
    $region4: #{gliclass_biencoder_fused_forward.7} parent=1 // pred_region
      %s25 = ssub.s32 16, 16
      %26 = vsyncadd [#allocation4], %s25
      %s28 = sshll.u32 [#allocation3], 4
      %s29 = int_to_ptr.vmem [resolvable:$true] %s28
      %31 = dma.hbm_to_vmem [thread:$0]  %s0, 16, %s29, [#allocation4]
    $region5: #{gliclass_biencoder_fused_forward.7} parent=1 // pred_fallthru
      _
    // Predicated region
    $region6: #{gliclass_biencoder_fused_forward.7} parent=1 // pred_check
      _
    $region7: #{gliclass_biencoder_fused_forward.7} parent=1 // pred_check_branch
      %33 = sbr.rel (0) target = $region9
    $region8: #{gliclass_biencoder_fused_forward.7} parent=1 // pred_region
      %s35 = ssub.s32 2048, 2048
      %36 = vsyncadd [#allocation7], %s35
      %s37 = sshll.u32 [#allocation6], 4
      %s38 = int_to_ptr.vmem [resolvable:$true] %s37
      %43 = dma.hbm_to_vmem [thread:$0]  %s1, 2048, %s38, [#allocation7], 128, 128, 8
    $region9: #{gliclass_biencoder_fused_forward.7} parent=1 // pred_fallthru
      _
    // Predicated region
    $region10: #{gliclass_biencoder_fused_forward.7} parent=1 // pred_check
      _
    $region11: #{gliclass_biencoder_fused_forward.7} parent=1 // pred_check_branch
      %45 = sbr.rel (0) target = $region13
    $region12: #{gliclass_biencoder_fused_forward.7} parent=1 // pred_region
      %s47 = ssub.s32 32, 32
      %48 = vsyncadd [#allocation7], %s47
      %s50 = sshll.u32 [#allocation8], 4
      %s51 = int_to_ptr.vmem [resolvable:$true] %s50
      %53 = dma.hbm_to_vmem [thread:$0]  %s2, 32, %s51, [#allocation7]
    $region13: #{gliclass_biencoder_fused_forward.7} parent=1 // pred_fallthru
      _
    // Predicated region
    $region14: #{gliclass_biencoder_fused_forward.7} parent=1 // pred_check
      _
    $region15: #{gliclass_biencoder_fused_forward.7} parent=1 // pred_check_branch
      %55 = sbr.rel (0) target = $region17
    $region16: #{gliclass_biencoder_fused_forward.7} parent=1 // pred_region
      %s57 = ssub.s32 2048, 2048
      %58 = vsyncadd [#allocation10], %s57
      %s59 = sshll.u32 [#allocation9], 4
      %s60 = int_to_ptr.vmem [resolvable:$true] %s59
      %65 = dma.hbm_to_vmem [thread:$0]  %s3, 2048, %s60, [#allocation10], 64, 64, 4
    $region17: #{gliclass_biencoder_fused_forward.7} parent=1 // pred_fallthru
      _
    // Predicated region
    $region18: #{gliclass_biencoder_fused_forward.7} parent=1 // pred_check
      _
    $region19: #{gliclass_biencoder_fused_forward.7} parent=1 // pred_check_branch
      %67 = sbr.rel (0) target = $region21
    $region20: #{gliclass_biencoder_fused_forward.7} parent=1 // pred_region
      %s69 = ssub.s32 16, 16
      %70 = vsyncadd [#allocation10], %s69
      %s72 = sshll.u32 [#allocation11], 4
      %s73 = int_to_ptr.vmem [resolvable:$true] %s72
      %75 = dma.hbm_to_vmem [thread:$0]  %s4, 16, %s73, [#allocation10]
    $region21: #{gliclass_biencoder_fused_forward.7} parent=1 // pred_fallthru
      _
    // Predicated region
    $region22: #{gliclass_biencoder_fused_forward.7} parent=1 // pred_check
      _
    $region23: #{gliclass_biencoder_fused_forward.7} parent=1 // pred_check_branch
      %77 = sbr.rel (0) target = $region25
    $region24: #{gliclass_biencoder_fused_forward.7} parent=1 // pred_region
      %s79 = ssub.s32 2048, 2048
      %80 = vsyncadd [#allocation13], %s79
      %s81 = sshll.u32 [#allocation12], 4
      %s82 = int_to_ptr.vmem [resolvable:$true] %s81
      %87 = dma.hbm_to_vmem [thread:$0]  %s5, 2048, %s82, [#allocation13], 64, 64, 4
    $region25: #{gliclass_biencoder_fused_forward.7} parent=1 // pred_fallthru
      _
    // Predicated region
    $region26: #{gliclass_biencoder_fused_forward.7} parent=1 // pred_check
      _
    $region27: #{gliclass_biencoder_fused_forward.7} parent=1 // pred_check_branch
      %89 = sbr.rel (0) target = $region29
    $region28: #{gliclass_biencoder_fused_forward.7} parent=1 // pred_region
      %s91 = ssub.s32 32, 32
      %92 = vsyncadd [#allocation13], %s91
      %s94 = sshll.u32 [#allocation14], 4
      %s95 = int_to_ptr.vmem [resolvable:$true] %s94
      %97 = dma.hbm_to_vmem [thread:$0]  %s6, 32, %s95, [#allocation13]
    $region29: #{gliclass_biencoder_fused_forward.7} parent=1 // pred_fallthru
      _
    // Predicated region
    $region30: #{gliclass_biencoder_fused_forward.7} parent=1 // pred_check
      _
    $region31: #{gliclass_biencoder_fused_forward.7} parent=1 // pred_check_branch
      %99 = sbr.rel (0) target = $region33
    $region32: #{gliclass_biencoder_fused_forward.7} parent=1 // pred_region
      _
    $region33: #{gliclass_biencoder_fused_forward.7} parent=1 // pred_fallthru
      _
    // Predicated region
    $region34: #{gliclass_biencoder_fused_forward.7} parent=1 // pred_check
      _
    $region35: #{gliclass_biencoder_fused_forward.7} parent=1 // pred_check_branch
      %101 = sbr.rel (0) target = $region37
    $region36: #{gliclass_biencoder_fused_forward.7} parent=1 // pred_region
      %102 = dma.done [#allocation4], 16
    $region37: #{gliclass_biencoder_fused_forward.7} parent=1 // pred_fallthru
      _
    // Predicated region
    $region38: #{gliclass_biencoder_fused_forward.7} parent=1 // pred_check
      _
    $region39: #{gliclass_biencoder_fused_forward.7} parent=1 // pred_check_branch
      %104 = sbr.rel (0) target = $region41
    $region40: #{gliclass_biencoder_fused_forward.7} parent=1 // pred_region
      %105 = dma.done [#allocation7], 2048
    $region41: #{gliclass_biencoder_fused_forward.7} parent=1 // pred_fallthru
      _
    // Predicated region
    $region42: #{gliclass_biencoder_fused_forward.7} parent=1 // pred_check
      _
    $region43: #{gliclass_biencoder_fused_forward.7} parent=1 // pred_check_branch
      %107 = sbr.rel (0) target = $region45
    $region44: #{gliclass_biencoder_fused_forward.7} parent=1 // pred_region
      %108 = dma.done [#allocation7], 32
    $region45: #{gliclass_biencoder_fused_forward.7} parent=1 // pred_fallthru
      _
    // Predicated region
    $region46: #{gliclass_biencoder_fused_forward.7} parent=1 // pred_check
      _
    $region47: #{gliclass_biencoder_fused_forward.7} parent=1 // pred_check_branch
      %110 = sbr.rel (0) target = $region49
    $region48: #{gliclass_biencoder_fused_forward.7} parent=1 // pred_region
      %111 = dma.done [#allocation10], 2048
    $region49: #{gliclass_biencoder_fused_forward.7} parent=1 // pred_fallthru
      _
    // Predicated region
    $region50: #{gliclass_biencoder_fused_forward.7} parent=1 // pred_check
      _
    $region51: #{gliclass_biencoder_fused_forward.7} parent=1 // pred_check_branch
      %113 = sbr.rel (0) target = $region53
    $region52: #{gliclass_biencoder_fused_forward.7} parent=1 // pred_region
      %114 = dma.done [#allocation10], 16
    $region53: #{gliclass_biencoder_fused_forward.7} parent=1 // pred_fallthru
      _
    // Predicated region
    $region54: #{gliclass_biencoder_fused_forward.7} parent=1 // pred_check
      _
    $region55: #{gliclass_biencoder_fused_forward.7} parent=1 // pred_check_branch
      %116 = sbr.rel (0) target = $region57
    $region56: #{gliclass_biencoder_fused_forward.7} parent=1 // pred_region
      %117 = dma.done [#allocation13], 2048
    $region57: #{gliclass_biencoder_fused_forward.7} parent=1 // pred_fallthru
      _
    // Predicated region
    $region58: #{gliclass_biencoder_fused_forward.7} parent=1 // pred_check
      _
    $region59: #{gliclass_biencoder_fused_forward.7} parent=1 // pred_check_branch
      %119 = sbr.rel (0) target = $region61
    $region60: #{gliclass_biencoder_fused_forward.7} parent=1 // pred_region
      %120 = dma.done [#allocation13], 32
    $region61: #{gliclass_biencoder_fused_forward.7} parent=1 // pred_fallthru
      _
    %v122 = vld [vmem:[#allocation3] sm:$0x1]
    %v123 = vld [vmem:[#allocation6] sm:$0xff]
    %v124 = vld [vmem:[#allocation6 + $0x8] sm:$0xff]
    %v125 = vld [vmem:[#allocation6 + $0x10] sm:$0xff]
    %v126 = vld [vmem:[#allocation6 + $0x18] sm:$0xff]
    %v127 = vld [vmem:[#allocation6 + $0x20] sm:$0xff]
    %v128 = vld [vmem:[#allocation6 + $0x28] sm:$0xff]
    %v129 = vld [vmem:[#allocation6 + $0x30] sm:$0xff]
    %v130 = vld [vmem:[#allocation6 + $0x38] sm:$0xff]
    %v131 = vld [vmem:[#allocation6 + $0x40] sm:$0xff]
    %v132 = vld [vmem:[#allocation6 + $0x48] sm:$0xff]
    %v133 = vld [vmem:[#allocation6 + $0x50] sm:$0xff]
    %v134 = vld [vmem:[#allocation6 + $0x58] sm:$0xff]
    %v135 = vld [vmem:[#allocation6 + $0x60] sm:$0xff]
    %v136 = vld [vmem:[#allocation6 + $0x68] sm:$0xff]
    %v137 = vld [vmem:[#allocation6 + $0x70] sm:$0xff]
    %v138 = vld [vmem:[#allocation6 + $0x78] sm:$0xff]
    %v139 = vld [vmem:[#allocation8] sm:$0x3]
    %v141 = vlaneseq
    %v142 = vshrl.u32 %v141, 7
    %v143 = vsub.s32 0, %v142
    %v144 = vrot.slane %v139, %v143
    %v145 = vlaneseq
    %v146 = vshrl.u32 %v145, 7
    %v147 = vsub.s32 1, %v146
    %v148 = vrot.slane %v139, %v147
    %v167 = vunpack.c.l.b16 %v123
    %v168 = vunpack.c.h.b16 %v123
    %v169 = vunpack.c.l.b16 %v124
    %v170 = vunpack.c.h.b16 %v124
    %v171 = vunpack.c.l.b16 %v125
    %v172 = vunpack.c.h.b16 %v125
    %v173 = vunpack.c.l.b16 %v126
    %v174 = vunpack.c.h.b16 %v126
    %v175 = vunpack.c.l.b16 %v127
    %v176 = vunpack.c.h.b16 %v127
    %v177 = vunpack.c.l.b16 %v128
    %v178 = vunpack.c.h.b16 %v128
    %v179 = vunpack.c.l.b16 %v129
    %v180 = vunpack.c.h.b16 %v129
    %v181 = vunpack.c.l.b16 %v130
    %v182 = vunpack.c.h.b16 %v130
    %v183 = vunpack.c.l.b16 %v131
    %v184 = vunpack.c.h.b16 %v131
    %v185 = vunpack.c.l.b16 %v132
    %v186 = vunpack.c.h.b16 %v132
    %v187 = vunpack.c.l.b16 %v133
    %v188 = vunpack.c.h.b16 %v133
    %v189 = vunpack.c.l.b16 %v134
    %v190 = vunpack.c.h.b16 %v134
    %v191 = vunpack.c.l.b16 %v135
    %v192 = vunpack.c.h.b16 %v135
    %v193 = vunpack.c.l.b16 %v136
    %v194 = vunpack.c.h.b16 %v136
    %v195 = vunpack.c.l.b16 %v137
    %v196 = vunpack.c.h.b16 %v137
    %v197 = vunpack.c.l.b16 %v138
    %v198 = vunpack.c.h.b16 %v138
    %v199 = vpack.c.b16 %v169, %v167
    %v200 = vpack.c.b16 %v170, %v168
    %v201 = vpack.c.b16 %v173, %v171
    %v202 = vpack.c.b16 %v174, %v172
    %v203 = vpack.c.b16 %v177, %v175
    %v204 = vpack.c.b16 %v178, %v176
    %v205 = vpack.c.b16 %v181, %v179
    %v206 = vpack.c.b16 %v182, %v180
    %v207 = vpack.c.b16 %v185, %v183
    %v208 = vpack.c.b16 %v186, %v184
    %v209 = vpack.c.b16 %v189, %v187
    %v210 = vpack.c.b16 %v190, %v188
    %v211 = vpack.c.b16 %v193, %v191
    %v212 = vpack.c.b16 %v194, %v192
    %v213 = vpack.c.b16 %v197, %v195
    %v214 = vpack.c.b16 %v198, %v196
    %231 = vmatprep.subr.bf16.mxu0 %v200
    %232 = vmatpush1.bf16.msra.mxu0 %v199
    %233 = vmatprep.subr.bf16.mxu0 %v202
    %234 = vmatpush1.bf16.msra.mxu0 %v201
    %235 = vmatprep.subr.bf16.mxu0 %v204
    %236 = vmatpush1.bf16.msra.mxu0 %v203
    %237 = vmatprep.subr.bf16.mxu0 %v206
    %238 = vmatpush1.bf16.msra.mxu0 %v205
    %239 = vmatprep.subr.bf16.mxu0 %v208
    %240 = vmatpush1.bf16.msra.mxu0 %v207
    %241 = vmatprep.subr.bf16.mxu0 %v210
    %242 = vmatpush1.bf16.msra.mxu0 %v209
    %243 = vmatprep.subr.bf16.mxu0 %v212
    %244 = vmatpush1.bf16.msra.mxu0 %v211
    %245 = vmatprep.subr.bf16.mxu0 %v214
    %246 = vmatpush1.bf16.msra.mxu0 %v213
    %247 = vmatprep.subr.bf16.mxu0 0
    %248 = vmatpush1.bf16.msra.mxu0 0
    %249 = vmatprep.subr.bf16.mxu0 0
    %250 = vmatpush1.bf16.msra.mxu0 0
    %251 = vmatprep.subr.bf16.mxu0 0
    %252 = vmatpush1.bf16.msra.mxu0 0
    %253 = vmatprep.subr.bf16.mxu0 0
    %254 = vmatpush1.bf16.msra.mxu0 0
    %255 = vmatprep.subr.bf16.mxu0 0
    %256 = vmatpush1.bf16.msra.mxu0 0
    %257 = vmatprep.subr.bf16.mxu0 0
    %258 = vmatpush1.bf16.msra.mxu0 0
    %259 = vmatprep.subr.bf16.mxu0 0
    %260 = vmatpush1.bf16.msra.mxu0 0
    %261 = vmatprep.subr.bf16.mxu0 0
    %262 = vmatpush1.bf16.msra.mxu0 0
    %263 = vmatprep.mubr.bf16.mxu0 0
    %264 = vmatmul.mubr.bf16.gmra.mrb[0].mxu0 %v122
    %v265 = vpop.f32.mrb[0].mxu0
    %v266 = vadd.f32 %v144, %v265
    %v267 = vpop.f32.mrb[0].mxu0
    %v268 = vadd.f32 %v148, %v267
    %v269 = vpop.f32.mrb[0].mxu0
    %v270 = vpop.f32.mrb[0].mxu0
    %271 = vdwg.mxu0
    %v272 = vmax.f32 %v266, 0.0
    %v273 = vmax.f32 %v268, 0.0
    %v274 = vpack.c.bf16 %v272, %v272
    %v275 = vpack.c.bf16 %v273, %v273
    %v276 = vld [vmem:[#allocation9] sm:$0xf]
    %v277 = vld [vmem:[#allocation9 + $0x4] sm:$0xf]
    %v278 = vld [vmem:[#allocation9 + $0x8] sm:$0xf]
    %v279 = vld [vmem:[#allocation9 + $0xc] sm:$0xf]
    %v280 = vld [vmem:[#allocation9 + $0x10] sm:$0xf]
    %v281 = vld [vmem:[#allocation9 + $0x14] sm:$0xf]
    %v282 = vld [vmem:[#allocation9 + $0x18] sm:$0xf]
    %v283 = vld [vmem:[#allocation9 + $0x1c] sm:$0xf]
    %v284 = vld [vmem:[#allocation9 + $0x20] sm:$0xf]
    %v285 = vld [vmem:[#allocation9 + $0x24] sm:$0xf]
    %v286 = vld [vmem:[#allocation9 + $0x28] sm:$0xf]
    %v287 = vld [vmem:[#allocation9 + $0x2c] sm:$0xf]
    %v288 = vld [vmem:[#allocation9 + $0x30] sm:$0xf]
    %v289 = vld [vmem:[#allocation9 + $0x34] sm:$0xf]
    %v290 = vld [vmem:[#allocation9 + $0x38] sm:$0xf]
    %v291 = vld [vmem:[#allocation9 + $0x3c] sm:$0xf]
    %v292 = vld [vmem:[#allocation9 + $0x40] sm:$0xf]
    %v293 = vld [vmem:[#allocation9 + $0x44] sm:$0xf]
    %v294 = vld [vmem:[#allocation9 + $0x48] sm:$0xf]
    %v295 = vld [vmem:[#allocation9 + $0x4c] sm:$0xf]
    %v296 = vld [vmem:[#allocation9 + $0x50] sm:$0xf]
    %v297 = vld [vmem:[#allocation9 + $0x54] sm:$0xf]
    %v298 = vld [vmem:[#allocation9 + $0x58] sm:$0xf]
    %v299 = vld [vmem:[#allocation9 + $0x5c] sm:$0xf]
    %v300 = vld [vmem:[#allocation9 + $0x60] sm:$0xf]
    %v301 = vld [vmem:[#allocation9 + $0x64] sm:$0xf]
    %v302 = vld [vmem:[#allocation9 + $0x68] sm:$0xf]
    %v303 = vld [vmem:[#allocation9 + $0x6c] sm:$0xf]
    %v304 = vld [vmem:[#allocation9 + $0x70] sm:$0xf]
    %v305 = vld [vmem:[#allocation9 + $0x74] sm:$0xf]
    %v306 = vld [vmem:[#allocation9 + $0x78] sm:$0xf]
    %v307 = vld [vmem:[#allocation9 + $0x7c] sm:$0xf]
    %v308 = vld [vmem:[#allocation11] sm:$0x1]
    %v310 = vlaneseq
    %v311 = vshrl.u32 %v310, 7
    %v312 = vsub.s32 0, %v311
    %v313 = vrot.slane %v308, %v312
    %v347 = vunpack.c.l.b16 %v276
    %v348 = vunpack.c.l.b16 %v277
    %v349 = vunpack.c.l.b16 %v278
    %v350 = vunpack.c.l.b16 %v279
    %v351 = vunpack.c.l.b16 %v280
    %v352 = vunpack.c.l.b16 %v281
    %v353 = vunpack.c.l.b16 %v282
    %v354 = vunpack.c.l.b16 %v283
    %v355 = vunpack.c.l.b16 %v284
    %v356 = vunpack.c.l.b16 %v285
    %v357 = vunpack.c.l.b16 %v286
    %v358 = vunpack.c.l.b16 %v287
    %v359 = vunpack.c.l.b16 %v288
    %v360 = vunpack.c.l.b16 %v289
    %v361 = vunpack.c.l.b16 %v290
    %v362 = vunpack.c.l.b16 %v291
    %v363 = vunpack.c.l.b16 %v292
    %v364 = vunpack.c.l.b16 %v293
    %v365 = vunpack.c.l.b16 %v294
    %v366 = vunpack.c.l.b16 %v295
    %v367 = vunpack.c.l.b16 %v296
    %v368 = vunpack.c.l.b16 %v297
    %v369 = vunpack.c.l.b16 %v298
    %v370 = vunpack.c.l.b16 %v299
    %v371 = vunpack.c.l.b16 %v300
    %v372 = vunpack.c.l.b16 %v301
    %v373 = vunpack.c.l.b16 %v302
    %v374 = vunpack.c.l.b16 %v303
    %v375 = vunpack.c.l.b16 %v304
    %v376 = vunpack.c.l.b16 %v305
    %v377 = vunpack.c.l.b16 %v306
    %v378 = vunpack.c.l.b16 %v307
    %v379 = vpack.c.b16 %v348, %v347
    %v380 = vpack.c.b16 %v350, %v349
    %v381 = vpack.c.b16 %v352, %v351
    %v382 = vpack.c.b16 %v354, %v353
    %v383 = vpack.c.b16 %v356, %v355
    %v384 = vpack.c.b16 %v358, %v357
    %v385 = vpack.c.b16 %v360, %v359
    %v386 = vpack.c.b16 %v362, %v361
    %v387 = vpack.c.b16 %v364, %v363
    %v388 = vpack.c.b16 %v366, %v365
    %v389 = vpack.c.b16 %v368, %v367
    %v390 = vpack.c.b16 %v370, %v369
    %v391 = vpack.c.b16 %v372, %v371
    %v392 = vpack.c.b16 %v374, %v373
    %v393 = vpack.c.b16 %v376, %v375
    %v394 = vpack.c.b16 %v378, %v377
    %411 = vmatprep.subr.bf16.mxu0 0
    %412 = vmatpush1.bf16.msra.mxu0 %v379
    %413 = vmatprep.subr.bf16.mxu0 0
    %414 = vmatpush1.bf16.msra.mxu0 %v380
    %415 = vmatprep.subr.bf16.mxu0 0
    %416 = vmatpush1.bf16.msra.mxu0 %v381
    %417 = vmatprep.subr.bf16.mxu0 0
    %418 = vmatpush1.bf16.msra.mxu0 %v382
    %419 = vmatprep.subr.bf16.mxu0 0
    %420 = vmatpush1.bf16.msra.mxu0 %v383
    %421 = vmatprep.subr.bf16.mxu0 0
    %422 = vmatpush1.bf16.msra.mxu0 %v384
    %423 = vmatprep.subr.bf16.mxu0 0
    %424 = vmatpush1.bf16.msra.mxu0 %v385
    %425 = vmatprep.subr.bf16.mxu0 0
    %426 = vmatpush1.bf16.msra.mxu0 %v386
    %427 = vmatprep.subr.bf16.mxu0 0
    %428 = vmatpush1.bf16.msra.mxu0 %v387
    %429 = vmatprep.subr.bf16.mxu0 0
    %430 = vmatpush1.bf16.msra.mxu0 %v388
    %431 = vmatprep.subr.bf16.mxu0 0
    %432 = vmatpush1.bf16.msra.mxu0 %v389
    %433 = vmatprep.subr.bf16.mxu0 0
    %434 = vmatpush1.bf16.msra.mxu0 %v390
    %435 = vmatprep.subr.bf16.mxu0 0
    %436 = vmatpush1.bf16.msra.mxu0 %v391
    %437 = vmatprep.subr.bf16.mxu0 0
    %438 = vmatpush1.bf16.msra.mxu0 %v392
    %439 = vmatprep.subr.bf16.mxu0 0
    %440 = vmatpush1.bf16.msra.mxu0 %v393
    %441 = vmatprep.subr.bf16.mxu0 0
    %442 = vmatpush1.bf16.msra.mxu0 %v394
    %443 = vmatprep.mubr.bf16.mxu0 %v275
    %444 = vmatmul.mubr.bf16.gmra.mrb[0].mxu0 %v274
    %v445 = vpop.f32.mrb[0].mxu0
    %v446 = vadd.f32 %v313, %v445
    %v447 = vpop.f32.mrb[0].mxu0
    %v448 = vpop.f32.mrb[0].mxu0
    %v449 = vpop.f32.mrb[0].mxu0
    %450 = vdwg.mxu0
    %v451 = vmul.f32 %v446, %v446
    %vm452 = vcmask 1041408
    %v453 = vsel %vm452, %v451, 0.0
    %454 = vadd.xlane.f32.xlu0 %v453
    %v455 = vpop.xlane.xlu0 %454
    %v456 = vmax.f32 %v455, 1e-16
    %v457 = vrsqrt.pop %v456
    %v458 = vmul.f32 %v446, %v457
    %459 = vst [vmem:[#allocation15] sm:$0x3] %v458
    %v460 = vld [vmem:[#allocation12] sm:$0xf]
    %v461 = vld [vmem:[#allocation12 + $0x4] sm:$0xf]
    %v462 = vld [vmem:[#allocation12 + $0x8] sm:$0xf]
    %v463 = vld [vmem:[#allocation12 + $0xc] sm:$0xf]
    %v464 = vld [vmem:[#allocation12 + $0x10] sm:$0xf]
    %v465 = vld [vmem:[#allocation12 + $0x14] sm:$0xf]
    %v466 = vld [vmem:[#allocation12 + $0x18] sm:$0xf]
    %v467 = vld [vmem:[#allocation12 + $0x1c] sm:$0xf]
    %v468 = vld [vmem:[#allocation12 + $0x20] sm:$0xf]
    %v469 = vld [vmem:[#allocation12 + $0x24] sm:$0xf]
    %v470 = vld [vmem:[#allocation12 + $0x28] sm:$0xf]
    %v471 = vld [vmem:[#allocation12 + $0x2c] sm:$0xf]
    %v472 = vld [vmem:[#allocation12 + $0x30] sm:$0xf]
    %v473 = vld [vmem:[#allocation12 + $0x34] sm:$0xf]
    %v474 = vld [vmem:[#allocation12 + $0x38] sm:$0xf]
    %v475 = vld [vmem:[#allocation12 + $0x3c] sm:$0xf]
    %v476 = vld [vmem:[#allocation12 + $0x40] sm:$0xf]
    %v477 = vld [vmem:[#allocation12 + $0x44] sm:$0xf]
    %v478 = vld [vmem:[#allocation12 + $0x48] sm:$0xf]
    %v479 = vld [vmem:[#allocation12 + $0x4c] sm:$0xf]
    %v480 = vld [vmem:[#allocation12 + $0x50] sm:$0xf]
    %v481 = vld [vmem:[#allocation12 + $0x54] sm:$0xf]
    %v482 = vld [vmem:[#allocation12 + $0x58] sm:$0xf]
    %v483 = vld [vmem:[#allocation12 + $0x5c] sm:$0xf]
    %v484 = vld [vmem:[#allocation12 + $0x60] sm:$0xf]
    %v485 = vld [vmem:[#allocation12 + $0x64] sm:$0xf]
    %v486 = vld [vmem:[#allocation12 + $0x68] sm:$0xf]
    %v487 = vld [vmem:[#allocation12 + $0x6c] sm:$0xf]
    %v488 = vld [vmem:[#allocation12 + $0x70] sm:$0xf]
    %v489 = vld [vmem:[#allocation12 + $0x74] sm:$0xf]
    %v490 = vld [vmem:[#allocation12 + $0x78] sm:$0xf]
    %v491 = vld [vmem:[#allocation12 + $0x7c] sm:$0xf]
    %v492 = vunpack.c.l.bf16 %v460
    %v493 = vunpack.c.l.bf16 %v461
    %v494 = vunpack.c.l.bf16 %v462
    %v495 = vunpack.c.l.bf16 %v463
    %v496 = vunpack.c.l.bf16 %v464
    %v497 = vunpack.c.l.bf16 %v465
    %v498 = vunpack.c.l.bf16 %v466
    %v499 = vunpack.c.l.bf16 %v467
    %v500 = vunpack.c.l.bf16 %v468
    %v501 = vunpack.c.l.bf16 %v469
    %v502 = vunpack.c.l.bf16 %v470
    %v503 = vunpack.c.l.bf16 %v471
    %v504 = vunpack.c.l.bf16 %v472
    %v505 = vunpack.c.l.bf16 %v473
    %v506 = vunpack.c.l.bf16 %v474
    %v507 = vunpack.c.l.bf16 %v475
    %v508 = vunpack.c.l.bf16 %v476
    %v509 = vunpack.c.l.bf16 %v477
    %v510 = vunpack.c.l.bf16 %v478
    %v511 = vunpack.c.l.bf16 %v479
    %v512 = vunpack.c.l.bf16 %v480
    %v513 = vunpack.c.l.bf16 %v481
    %v514 = vunpack.c.l.bf16 %v482
    %v515 = vunpack.c.l.bf16 %v483
    %v516 = vunpack.c.l.bf16 %v484
    %v517 = vunpack.c.l.bf16 %v485
    %v518 = vunpack.c.l.bf16 %v486
    %v519 = vunpack.c.l.bf16 %v487
    %v520 = vunpack.c.l.bf16 %v488
    %v521 = vunpack.c.l.bf16 %v489
    %v522 = vunpack.c.l.bf16 %v490
    %v523 = vunpack.c.l.bf16 %v491
    %v526 = vunpack.c.l.s4 1966171168
    %v527 = vunpack.c.0.s8 %v526
    %v528 = vlaneseq
    %v529 = vshrl.u32 %v528, 7
    %v530 = vsub.s32 %v527, %v529
    %v531 = vrot.slane %v458, %v530
    %v532 = vcombine.high %v531, %v531
    %v534 = vunpack.c.l.s4 1966171168
    %v535 = vunpack.c.0.s8 %v534
    %v536 = vlaneseq
    %v537 = vshrl.u32 %v536, 7
    %v538 = vsub.s32 %v535, %v537
    %v539 = vrot.slane %v531, %v538
    %v541 = vunpack.c.l.s4 1966171168
    %v542 = vunpack.c.0.s8 %v541
    %v543 = vlaneseq
    %v544 = vshrl.u32 %v543, 7
    %v545 = vsub.s32 %v542, %v544
    %v546 = vrot.slane %v532, %v545
    %v547 = vlaneseq
    %v548 = vshrl.u32 %v547, 7
    %v549 = vsub.s32 0, %v548
    %v550 = vrot.slane %v539, %v549
    %v551 = vlaneseq
    %v552 = vshrl.u32 %v551, 7
    %v553 = vsub.s32 0, %v552
    %v554 = vrot.slane %v546, %v553
    %v557 = vmul.f32 %v492, %v550
    %v558 = vmul.f32 %v493, %v550
    %v559 = vmul.f32 %v494, %v550
    %v560 = vmul.f32 %v495, %v550
    %v561 = vmul.f32 %v496, %v550
    %v562 = vmul.f32 %v497, %v550
    %v563 = vmul.f32 %v498, %v550
    %v564 = vmul.f32 %v499, %v550
    %v565 = vmul.f32 %v500, %v550
    %v566 = vmul.f32 %v501, %v550
    %v567 = vmul.f32 %v502, %v550
    %v568 = vmul.f32 %v503, %v550
    %v569 = vmul.f32 %v504, %v550
    %v570 = vmul.f32 %v505, %v550
    %v571 = vmul.f32 %v506, %v550
    %v572 = vmul.f32 %v507, %v550
    %v573 = vmul.f32 %v508, %v554
    %v574 = vmul.f32 %v509, %v554
    %v575 = vmul.f32 %v510, %v554
    %v576 = vmul.f32 %v511, %v554
    %v577 = vmul.f32 %v512, %v554
    %v578 = vmul.f32 %v513, %v554
    %v579 = vmul.f32 %v514, %v554
    %v580 = vmul.f32 %v515, %v554
    %v581 = vmul.f32 %v516, %v554
    %v582 = vmul.f32 %v517, %v554
    %v583 = vmul.f32 %v518, %v554
    %v584 = vmul.f32 %v519, %v554
    %v585 = vmul.f32 %v520, %v554
    %v586 = vmul.f32 %v521, %v554
    %v587 = vmul.f32 %v522, %v554
    %v588 = vmul.f32 %v523, %v554
    %589 = vadd.xlane.f32.xlu0 %v557
    %v590 = vpop.xlane.xlu0 %589
    %591 = vadd.xlane.f32.xlu0 %v558
    %v592 = vpop.xlane.xlu0 %591
    %593 = vadd.xlane.f32.xlu0 %v559
    %v594 = vpop.xlane.xlu0 %593
    %595 = vadd.xlane.f32.xlu0 %v560
    %v596 = vpop.xlane.xlu0 %595
    %597 = vadd.xlane.f32.xlu0 %v561
    %v598 = vpop.xlane.xlu0 %597
    %599 = vadd.xlane.f32.xlu0 %v562
    %v600 = vpop.xlane.xlu0 %599
    %601 = vadd.xlane.f32.xlu0 %v563
    %v602 = vpop.xlane.xlu0 %601
    %603 = vadd.xlane.f32.xlu0 %v564
    %v604 = vpop.xlane.xlu0 %603
    %605 = vadd.xlane.f32.xlu0 %v565
    %v606 = vpop.xlane.xlu0 %605
    %607 = vadd.xlane.f32.xlu0 %v566
    %v608 = vpop.xlane.xlu0 %607
    %609 = vadd.xlane.f32.xlu0 %v567
    %v610 = vpop.xlane.xlu0 %609
    %611 = vadd.xlane.f32.xlu0 %v568
    %v612 = vpop.xlane.xlu0 %611
    %613 = vadd.xlane.f32.xlu0 %v569
    %v614 = vpop.xlane.xlu0 %613
    %615 = vadd.xlane.f32.xlu0 %v570
    %v616 = vpop.xlane.xlu0 %615
    %617 = vadd.xlane.f32.xlu0 %v571
    %v618 = vpop.xlane.xlu0 %617
    %619 = vadd.xlane.f32.xlu0 %v572
    %v620 = vpop.xlane.xlu0 %619
    %621 = vadd.xlane.f32.xlu0 %v573
    %v622 = vpop.xlane.xlu0 %621
    %623 = vadd.xlane.f32.xlu0 %v574
    %v624 = vpop.xlane.xlu0 %623
    %625 = vadd.xlane.f32.xlu0 %v575
    %v626 = vpop.xlane.xlu0 %625
    %627 = vadd.xlane.f32.xlu0 %v576
    %v628 = vpop.xlane.xlu0 %627
    %629 = vadd.xlane.f32.xlu0 %v577
    %v630 = vpop.xlane.xlu0 %629
    %631 = vadd.xlane.f32.xlu0 %v578
    %v632 = vpop.xlane.xlu0 %631
    %633 = vadd.xlane.f32.xlu0 %v579
    %v634 = vpop.xlane.xlu0 %633
    %635 = vadd.xlane.f32.xlu0 %v580
    %v636 = vpop.xlane.xlu0 %635
    %637 = vadd.xlane.f32.xlu0 %v581
    %v638 = vpop.xlane.xlu0 %637
    %639 = vadd.xlane.f32.xlu0 %v582
    %v640 = vpop.xlane.xlu0 %639
    %641 = vadd.xlane.f32.xlu0 %v583
    %v642 = vpop.xlane.xlu0 %641
    %643 = vadd.xlane.f32.xlu0 %v584
    %v644 = vpop.xlane.xlu0 %643
    %645 = vadd.xlane.f32.xlu0 %v585
    %v646 = vpop.xlane.xlu0 %645
    %647 = vadd.xlane.f32.xlu0 %v586
    %v648 = vpop.xlane.xlu0 %647
    %649 = vadd.xlane.f32.xlu0 %v587
    %v650 = vpop.xlane.xlu0 %649
    %651 = vadd.xlane.f32.xlu0 %v588
    %v652 = vpop.xlane.xlu0 %651
    %s653 = sld [smem:[#allocation2]]
    %v654 = vstv %s653
    %v655 = vmul.f32 %v590, %v654
    %v656 = vmul.f32 %v592, %v654
    %v657 = vmul.f32 %v594, %v654
    %v658 = vmul.f32 %v596, %v654
    %v659 = vmul.f32 %v598, %v654
    %v660 = vmul.f32 %v600, %v654
    %v661 = vmul.f32 %v602, %v654
    %v662 = vmul.f32 %v604, %v654
    %v663 = vmul.f32 %v606, %v654
    %v664 = vmul.f32 %v608, %v654
    %v665 = vmul.f32 %v610, %v654
    %v666 = vmul.f32 %v612, %v654
    %v667 = vmul.f32 %v614, %v654
    %v668 = vmul.f32 %v616, %v654
    %v669 = vmul.f32 %v618, %v654
    %v670 = vmul.f32 %v620, %v654
    %v671 = vmul.f32 %v622, %v654
    %v672 = vmul.f32 %v624, %v654
    %v673 = vmul.f32 %v626, %v654
    %v674 = vmul.f32 %v628, %v654
    %v675 = vmul.f32 %v630, %v654
    %v676 = vmul.f32 %v632, %v654
    %v677 = vmul.f32 %v634, %v654
    %v678 = vmul.f32 %v636, %v654
    %v679 = vmul.f32 %v638, %v654
    %v680 = vmul.f32 %v640, %v654
    %v681 = vmul.f32 %v642, %v654
    %v682 = vmul.f32 %v644, %v654
    %v683 = vmul.f32 %v646, %v654
    %v684 = vmul.f32 %v648, %v654
    %v685 = vmul.f32 %v650, %v654
    %v686 = vmul.f32 %v652, %v654
    %v687 = vld [vmem:[#allocation14] sm:$0x3]
    %vm688 = vcmp.eq.f32.partialorder %v687, 0.0
    %v721 = vlaneseq
    %v722 = vand.u32 %v721, 127
    %v723 = vlaneseq
    %v724 = vshrl.u32 %v723, 7
    %v725 = vsub.s32 %v722, %v724
    %v726 = vrot.slane %v655, %v725
    %v727 = vadd.s32 %v722, 4294967288
    %v728 = vlaneseq
    %v729 = vshrl.u32 %v728, 7
    %v730 = vsub.s32 %v727, %v729
    %v731 = vrot.slane %v656, %v730
    %vm732 = vcmask 130112
    %v733 = vsel %vm732, %v731, %v726
    %v734 = vadd.s32 %v722, 4294967280
    %v735 = vlaneseq
    %v736 = vshrl.u32 %v735, 7
    %v737 = vsub.s32 %v734, %v736
    %v738 = vrot.slane %v657, %v737
    %vm739 = vcmask 195712
    %v740 = vsel %vm739, %v738, %v733
    %v741 = vadd.s32 %v722, 4294967272
    %v742 = vlaneseq
    %v743 = vshrl.u32 %v742, 7
    %v744 = vsub.s32 %v741, %v743
    %v745 = vrot.slane %v658, %v744
    %vm746 = vcmask 261312
    %v747 = vsel %vm746, %v745, %v740
    %v748 = vadd.s32 %v722, 4294967264
    %v749 = vlaneseq
    %v750 = vshrl.u32 %v749, 7
    %v751 = vsub.s32 %v748, %v750
    %v752 = vrot.slane %v659, %v751
    %vm753 = vcmask 326912
    %v754 = vsel %vm753, %v752, %v747
    %v755 = vadd.s32 %v722, 4294967256
    %v756 = vlaneseq
    %v757 = vshrl.u32 %v756, 7
    %v758 = vsub.s32 %v755, %v757
    %v759 = vrot.slane %v660, %v758
    %vm760 = vcmask 392512
    %v761 = vsel %vm760, %v759, %v754
    %v762 = vadd.s32 %v722, 4294967248
    %v763 = vlaneseq
    %v764 = vshrl.u32 %v763, 7
    %v765 = vsub.s32 %v762, %v764
    %v766 = vrot.slane %v661, %v765
    %vm767 = vcmask 458112
    %v768 = vsel %vm767, %v766, %v761
    %v769 = vadd.s32 %v722, 4294967240
    %v770 = vlaneseq
    %v771 = vshrl.u32 %v770, 7
    %v772 = vsub.s32 %v769, %v771
    %v773 = vrot.slane %v662, %v772
    %vm774 = vcmask 523712
    %v775 = vsel %vm774, %v773, %v768
    %v776 = vadd.s32 %v722, 4294967232
    %v777 = vlaneseq
    %v778 = vshrl.u32 %v777, 7
    %v779 = vsub.s32 %v776, %v778
    %v780 = vrot.slane %v663, %v779
    %vm781 = vcmask 589312
    %v782 = vsel %vm781, %v780, %v775
    %v783 = vadd.s32 %v722, 4294967224
    %v784 = vlaneseq
    %v785 = vshrl.u32 %v784, 7
    %v786 = vsub.s32 %v783, %v785
    %v787 = vrot.slane %v664, %v786
    %vm788 = vcmask 654912
    %v789 = vsel %vm788, %v787, %v782
    %v790 = vadd.s32 %v722, 4294967216
    %v791 = vlaneseq
    %v792 = vshrl.u32 %v791, 7
    %v793 = vsub.s32 %v790, %v792
    %v794 = vrot.slane %v665, %v793
    %vm795 = vcmask 720512
    %v796 = vsel %vm795, %v794, %v789
    %v797 = vadd.s32 %v722, 4294967208
    %v798 = vlaneseq
    %v799 = vshrl.u32 %v798, 7
    %v800 = vsub.s32 %v797, %v799
    %v801 = vrot.slane %v666, %v800
    %vm802 = vcmask 786112
    %v803 = vsel %vm802, %v801, %v796
    %v804 = vadd.s32 %v722, 4294967200
    %v805 = vlaneseq
    %v806 = vshrl.u32 %v805, 7
    %v807 = vsub.s32 %v804, %v806
    %v808 = vrot.slane %v667, %v807
    %vm809 = vcmask 851712
    %v810 = vsel %vm809, %v808, %v803
    %v811 = vadd.s32 %v722, 4294967192
    %v812 = vlaneseq
    %v813 = vshrl.u32 %v812, 7
    %v814 = vsub.s32 %v811, %v813
    %v815 = vrot.slane %v668, %v814
    %vm816 = vcmask 917312
    %v817 = vsel %vm816, %v815, %v810
    %v818 = vadd.s32 %v722, 4294967184
    %v819 = vlaneseq
    %v820 = vshrl.u32 %v819, 7
    %v821 = vsub.s32 %v818, %v820
    %v822 = vrot.slane %v669, %v821
    %vm823 = vcmask 982912
    %v824 = vsel %vm823, %v822, %v817
    %v825 = vadd.s32 %v722, 4294967176
    %v826 = vlaneseq
    %v827 = vshrl.u32 %v826, 7
    %v828 = vsub.s32 %v825, %v827
    %v829 = vrot.slane %v670, %v828
    %vm830 = vcmask 1048512
    %v831 = vsel %vm830, %v829, %v824
    %v832 = vlaneseq
    %v833 = vshrl.u32 %v832, 7
    %v834 = vsub.s32 %v722, %v833
    %v835 = vrot.slane %v671, %v834
    %v836 = vlaneseq
    %v837 = vshrl.u32 %v836, 7
    %v838 = vsub.s32 %v727, %v837
    %v839 = vrot.slane %v672, %v838
    %v840 = vsel %vm732, %v839, %v835
    %v841 = vlaneseq
    %v842 = vshrl.u32 %v841, 7
    %v843 = vsub.s32 %v734, %v842
    %v844 = vrot.slane %v673, %v843
    %v845 = vsel %vm739, %v844, %v840
    %v846 = vlaneseq
    %v847 = vshrl.u32 %v846, 7
    %v848 = vsub.s32 %v741, %v847
    %v849 = vrot.slane %v674, %v848
    %v850 = vsel %vm746, %v849, %v845
    %v851 = vlaneseq
    %v852 = vshrl.u32 %v851, 7
    %v853 = vsub.s32 %v748, %v852
    %v854 = vrot.slane %v675, %v853
    %v855 = vsel %vm753, %v854, %v850
    %v856 = vlaneseq
    %v857 = vshrl.u32 %v856, 7
    %v858 = vsub.s32 %v755, %v857
    %v859 = vrot.slane %v676, %v858
    %v860 = vsel %vm760, %v859, %v855
    %v861 = vlaneseq
    %v862 = vshrl.u32 %v861, 7
    %v863 = vsub.s32 %v762, %v862
    %v864 = vrot.slane %v677, %v863
    %v865 = vsel %vm767, %v864, %v860
    %v866 = vlaneseq
    %v867 = vshrl.u32 %v866, 7
    %v868 = vsub.s32 %v769, %v867
    %v869 = vrot.slane %v678, %v868
    %v870 = vsel %vm774, %v869, %v865
    %v871 = vlaneseq
    %v872 = vshrl.u32 %v871, 7
    %v873 = vsub.s32 %v776, %v872
    %v874 = vrot.slane %v679, %v873
    %v875 = vsel %vm781, %v874, %v870
    %v876 = vlaneseq
    %v877 = vshrl.u32 %v876, 7
    %v878 = vsub.s32 %v783, %v877
    %v879 = vrot.slane %v680, %v878
    %v880 = vsel %vm788, %v879, %v875
    %v881 = vlaneseq
    %v882 = vshrl.u32 %v881, 7
    %v883 = vsub.s32 %v790, %v882
    %v884 = vrot.slane %v681, %v883
    %v885 = vsel %vm795, %v884, %v880
    %v886 = vlaneseq
    %v887 = vshrl.u32 %v886, 7
    %v888 = vsub.s32 %v797, %v887
    %v889 = vrot.slane %v682, %v888
    %v890 = vsel %vm802, %v889, %v885
    %v891 = vlaneseq
    %v892 = vshrl.u32 %v891, 7
    %v893 = vsub.s32 %v804, %v892
    %v894 = vrot.slane %v683, %v893
    %v895 = vsel %vm809, %v894, %v890
    %v896 = vlaneseq
    %v897 = vshrl.u32 %v896, 7
    %v898 = vsub.s32 %v811, %v897
    %v899 = vrot.slane %v684, %v898
    %v900 = vsel %vm816, %v899, %v895
    %v901 = vlaneseq
    %v902 = vshrl.u32 %v901, 7
    %v903 = vsub.s32 %v818, %v902
    %v904 = vrot.slane %v685, %v903
    %v905 = vsel %vm823, %v904, %v900
    %v906 = vlaneseq
    %v907 = vshrl.u32 %v906, 7
    %v908 = vsub.s32 %v825, %v907
    %v909 = vrot.slane %v686, %v908
    %v910 = vsel %vm830, %v909, %v905
    %vm911 = vcmask 1041409
    %v912 = vsel %vm911, %v910, %v831
    %v914 = vsel %vm688, -1000.0, %v912
    %915 = vst [vmem:[#allocation16] sm:$0x3] %v914
    // Predicated region
    $region62: #{gliclass_biencoder_fused_forward.7} parent=1 // pred_check
      _
    $region63: #{gliclass_biencoder_fused_forward.7} parent=1 // pred_check_branch
      %917 = sbr.rel (0) target = $region65
    $region64: #{gliclass_biencoder_fused_forward.7} parent=1 // pred_region
      %s919 = ssub.s32 32, 32
      %920 = vsyncadd [#allocation5], %s919
      %s922 = sshll.u32 [#allocation15], 4
      %s923 = int_to_ptr.vmem [resolvable:$true] %s922
      %925 = dma.vmem_to_hbm [thread:$0]  %s923, 32, %s8, [#allocation5]
    $region65: #{gliclass_biencoder_fused_forward.7} parent=1 // pred_fallthru
      _
    // Predicated region
    $region66: #{gliclass_biencoder_fused_forward.7} parent=1 // pred_check
      _
    $region67: #{gliclass_biencoder_fused_forward.7} parent=1 // pred_check_branch
      %927 = sbr.rel (0) target = $region69
    $region68: #{gliclass_biencoder_fused_forward.7} parent=1 // pred_region
      %s929 = ssub.s32 32, 32
      %930 = vsyncadd [#allocation17], %s929
      %s932 = sshll.u32 [#allocation16], 4
      %s933 = int_to_ptr.vmem [resolvable:$true] %s932
      %935 = dma.vmem_to_hbm [thread:$0]  %s933, 32, %s9, [#allocation17]
    $region69: #{gliclass_biencoder_fused_forward.7} parent=1 // pred_fallthru
      _
    // Predicated region
    $region70: #{gliclass_biencoder_fused_forward.7} parent=1 // pred_check
      _
    $region71: #{gliclass_biencoder_fused_forward.7} parent=1 // pred_check_branch
      %937 = sbr.rel (0) target = $region73
    $region72: #{gliclass_biencoder_fused_forward.7} parent=1 // pred_region
      %938 = dma.done [#allocation5], 32
    $region73: #{gliclass_biencoder_fused_forward.7} parent=1 // pred_fallthru
      _
    // Predicated region
    $region74: #{gliclass_biencoder_fused_forward.7} parent=1 // pred_check
      _
    $region75: #{gliclass_biencoder_fused_forward.7} parent=1 // pred_check_branch
      %940 = sbr.rel (0) target = $region77
    $region76: #{gliclass_biencoder_fused_forward.7} parent=1 // pred_region
      %941 = dma.done [#allocation17], 32
    $region77: #{gliclass_biencoder_fused_forward.7} parent=1 // pred_fallthru
      _
    %942 = vsyncpa [#allocation4], 1
    %943 = vsyncpa [#allocation7], 1
    %944 = vsyncpa [#allocation10], 1
    %945 = vsyncpa [#allocation13], 1
    %946 = vsyncpa [#allocation5], 1
    %947 = vsyncpa [#allocation17], 1

</llo_original>
